<compile_context>
chip_gen: v7x
topology: tpu7x:2x2x1
jax: 0.10.0
libtpu: 0.0.40
codegen_flags: <defaults>
</compile_context>

<pallas_src>
import jax
import jax.numpy as jnp
from jax.experimental import pallas as pl
from jax.experimental.pallas import tpu as pltpu

D_IN = 12000
D_H1 = 1000
D_H2 = 100
D_H3 = 10
D_OUT = 10

K_PAD = 12288            # next multiple of 128 >= 12000 (needed: K is grid-tiled)
H1_PAD = 1024            # lane-dense h1 (8 * 128); W2 rows are zero-padded to match
N_K = 4                  # K steps: DMA of tile k+1 overlaps dequant+matmul of tile k
TK = K_PAD // N_K        # 3072 (%128 and %32 -> legal bf16 x and int8 W1 blocks)
TN_SPLIT = 512           # W1 column-half width on dual-TensorCore chips

_CFG_CACHE = None


def _tpu_config():
    """Lazily resolved per-generation kernel configuration (not at import time)."""
    global _CFG_CACHE
    if _CFG_CACHE is None:
        try:
            kind = jax.devices()[0].device_kind.lower()
        except Exception:
            kind = ""
        single_tc = ("lite" in kind) or ("v5e" in kind) or ("v6e" in kind)
        if single_tc:
            # v5e/v6e: one TensorCore, 128 MiB physical VMEM -> fused single
            # kernel (no column split), generous 64 MiB scoped-VMEM request.
            _CFG_CACHE = {"split": False, "vmem": 64 * 1024 * 1024}
        else:
            # v7x (2 TCs, 64 MiB VMEM) and unknown chips: 2-wide "parallel"
            # column split + separate tail kernel, right-sized 32 MiB budget.
            _CFG_CACHE = {"split": True, "vmem": 32 * 1024 * 1024}
    return _CFG_CACHE


def _fused_kernel(x_ref, w1_ref, s_ref, b1_ref, w2_ref, b2_ref,
                  w3_ref, b3_ref, w4_ref, b4_ref, o_ref, acc_ref):
    """Whole network in one kernel (single-TensorCore chips).

    Grid is (N_K,) over K tiles of the (K_PAD, H1_PAD) int8 W1.  Each step
    dequantizes the streamed int8 tile to bf16 and accumulates the matmul in
    an f32 VMEM scratch; the k==last epilogue applies the per-column scale,
    bias + ReLU, and runs the tiny tail (1024->100->ReLU->10->Sigmoid->10)
    entirely on VMEM-resident weights.
    """
    k = pl.program_id(0)

    @pl.when(k == 0)
    def _():
        acc_ref[...] = jnp.zeros_like(acc_ref)

    # int8 -> bf16 dequant (the per-column scale is applied to the f32
    # accumulator in the epilogue, not per weight element), bf16 MXU matmul.
    w_tile = w1_ref[...].astype(jnp.bfloat16)
    acc_ref[...] += jnp.dot(x_ref[...], w_tile,
                            preferred_element_type=jnp.float32)

    @pl.when(k == pl.num_programs(0) - 1)
    def _():
        h1 = jnp.maximum(acc_ref[...] * s_ref[...] + b1_ref[...], 0.0)
        h2 = jnp.dot(h1, w2_ref[...], preferred_element_type=jnp.float32)
        h2 = jnp.maximum(h2 + b2_ref[...], 0.0)
        h3 = jnp.dot(h2, w3_ref[...], preferred_element_type=jnp.float32)
        h3 = jax.nn.sigmoid(h3 + b3_ref[...])
        y = jnp.dot(h3, w4_ref[...], preferred_element_type=jnp.float32)
        o_ref[...] = (y + b4_ref[...]).astype(o_ref.dtype)


def _layer1_split_kernel(x_ref, w1_ref, s_ref, b1_ref, h1_ref, acc_ref):
    """h1[:, half j] = relu((x @ W1_int8[:, half j]) * scale + b1), K-tiled.

    Used on dual-TensorCore chips: the leading "parallel" grid axis gives
    each core one disjoint 512-wide half of W1 to stream/dequantize.
    """
    k = pl.program_id(1)

    @pl.when(k == 0)
    def _():
        acc_ref[...] = jnp.zeros_like(acc_ref)

    # NOTE: on v7x a native fp8 (e4m3) W1 path could skip the in-kernel
    # dequant entirely; int8->bf16 is kept for cross-generation robustness.
    acc_ref[...] += jnp.dot(x_ref[...], w1_ref[...].astype(jnp.bfloat16),
                            preferred_element_type=jnp.float32)

    @pl.when(k == pl.num_programs(1) - 1)
    def _():
        h1_ref[...] = jnp.maximum(acc_ref[...] * s_ref[...] + b1_ref[...], 0.0)


def _tail_kernel(h1_ref, w2_ref, b2_ref, w3_ref, b3_ref, w4_ref, b4_ref, o_ref):
    """Tiny fused tail: 1024 -> 100 -> ReLU -> 10 -> Sigmoid -> 10 (all VMEM)."""
    h2 = jnp.dot(h1_ref[...], w2_ref[...], preferred_element_type=jnp.float32)
    h2 = jnp.maximum(h2 + b2_ref[...], 0.0)
    h3 = jnp.dot(h2, w3_ref[...], preferred_element_type=jnp.float32)
    h3 = jax.nn.sigmoid(h3 + b3_ref[...])
    y = jnp.dot(h3, w4_ref[...], preferred_element_type=jnp.float32)
    o_ref[...] = (y + b4_ref[...]).astype(o_ref.dtype)


def prepare_params(w1, b1, w2, b2, w3, b3, w4, b4):
    """One-time parameter packing (call OUTSIDE the per-call forward).

    Weights are stored (in_features, out_features) so the kernels compute
    y = x @ W + b, matching PyTorch's x @ W.T + b with W of shape (out, in).

    W1 is symmetrically quantized to int8 with one f32 scale per output
    column, then zero-padded to (K_PAD, H1_PAD).  b1/scale are padded to
    H1_PAD and W2's rows are zero-padded so the (exactly zero) padded h1
    columns never contribute.
    """
    absmax = jnp.max(jnp.abs(w1), axis=0)                        # (D_H1,)
    scale = jnp.maximum(absmax, 1e-30) / 127.0
    w1_q = jnp.clip(jnp.round(w1 / scale), -127.0, 127.0).astype(jnp.int8)
    w1_q = jnp.pad(w1_q, ((0, K_PAD - D_IN), (0, H1_PAD - D_H1)))
    scale_p = jnp.pad(scale.astype(jnp.float32), (0, H1_PAD - D_H1),
                      constant_values=1.0).reshape(1, H1_PAD)
    b1p = jnp.pad(b1, (0, H1_PAD - D_H1)).reshape(1, H1_PAD).astype(jnp.float32)
    w2p = jnp.pad(w2, ((0, H1_PAD - D_H1), (0, 0))).astype(jnp.float32)
    return (w1_q, scale_p, b1p, w2p,
            b2.reshape(1, D_H2).astype(jnp.float32),
            w3.astype(jnp.float32),
            b3.reshape(1, D_H3).astype(jnp.float32),
            w4.astype(jnp.float32),
            b4.reshape(1, D_OUT).astype(jnp.float32))


@jax.jit
def linmod_forward(x, params):
    w1q, s1, b1p, w2p, b2r, w3, b3r, w4, b4r = params
    batch = x.shape[0]
    cfg = _tpu_config()

    # K is grid-tiled (to overlap the int8 W1 HBM stream with dequant+matmul),
    # so x's contraction dim must be padded to a %128 block size.  This
    # pad + bf16 cast is a single tiny fused op (~0.8 MB at batch 16) next to
    # the ~12 MB W1 stream; the zero pad columns hit zero-padded W1 rows.
    x_p = jnp.pad(x, ((0, 0), (0, K_PAD - D_IN))).astype(jnp.bfloat16)

    tail_flops = 2 * batch * (H1_PAD * D_H2 + D_H2 * D_H3 + D_H3 * D_OUT)
    small_bytes = (s1.size + b1p.size + w2p.size + b2r.size + w3.size
                   + b3r.size + w4.size + b4r.size) * 4

    if not cfg["split"]:
        # ---- single-TensorCore path: whole network in ONE kernel -----------
        ce = pl.CostEstimate(
            flops=2 * batch * K_PAD * H1_PAD + tail_flops,
            transcendentals=batch * D_H3,
            bytes_accessed=w1q.size + x_p.size * 2 + small_bytes
                           + batch * D_OUT * 4)
        return pl.pallas_call(
            _fused_kernel,
            out_shape=jax.ShapeDtypeStruct((batch, D_OUT), jnp.float32),
            grid_spec=pltpu.PrefetchScalarGridSpec(
                num_scalar_prefetch=0,
                grid=(N_K,),
                in_specs=[
                    pl.BlockSpec((batch, TK), lambda k: (0, k)),      # x tile
                    pl.BlockSpec((TK, H1_PAD), lambda k: (k, 0)),     # W1 int8
                    pl.BlockSpec((1, H1_PAD), lambda k: (0, 0)),      # scale
                    pl.BlockSpec((1, H1_PAD), lambda k: (0, 0)),      # b1
                    pl.BlockSpec((H1_PAD, D_H2), lambda k: (0, 0)),   # W2
                    pl.BlockSpec((1, D_H2), lambda k: (0, 0)),        # b2
                    pl.BlockSpec((D_H2, D_H3), lambda k: (0, 0)),     # W3
                    pl.BlockSpec((1, D_H3), lambda k: (0, 0)),        # b3
                    pl.BlockSpec((D_H3, D_OUT), lambda k: (0, 0)),    # W4
                    pl.BlockSpec((1, D_OUT), lambda k: (0, 0)),       # b4
                ],
                out_specs=pl.BlockSpec((batch, D_OUT), lambda k: (0, 0)),
                scratch_shapes=[pltpu.VMEM((batch, H1_PAD), jnp.float32)],
            ),
            compiler_params=pltpu.CompilerParams(
                dimension_semantics=("arbitrary",),
                vmem_limit_bytes=cfg["vmem"]),
            cost_estimate=ce,
        )(x_p, w1q, s1, b1p, w2p, b2r, w3, b3r, w4, b4r)

    # ---- dual-TensorCore path: 2-wide parallel column split + tiny tail ----
    n_split = H1_PAD // TN_SPLIT
    ce1 = pl.CostEstimate(
        flops=2 * batch * K_PAD * H1_PAD,
        transcendentals=0,
        bytes_accessed=w1q.size + x_p.size * 2 * n_split
                       + (s1.size + b1p.size) * 4 + batch * H1_PAD * 4)
    h1 = pl.pallas_call(
        _layer1_split_kernel,
        out_shape=jax.ShapeDtypeStruct((batch, H1_PAD), jnp.float32),
        grid_spec=pltpu.PrefetchScalarGridSpec(
            num_scalar_prefetch=0,
            grid=(n_split, N_K),                                  # (cols, K)
            in_specs=[
                pl.BlockSpec((batch, TK), lambda j, k: (0, k)),       # x tile
                pl.BlockSpec((TK, TN_SPLIT), lambda j, k: (k, j)),    # W1 int8
                pl.BlockSpec((1, TN_SPLIT), lambda j, k: (0, j)),     # scale
                pl.BlockSpec((1, TN_SPLIT), lambda j, k: (0, j)),     # b1
            ],
            out_specs=pl.BlockSpec((batch, TN_SPLIT), lambda j, k: (0, j)),
            scratch_shapes=[pltpu.VMEM((batch, TN_SPLIT), jnp.float32)],
        ),
        compiler_params=pltpu.CompilerParams(
            dimension_semantics=("parallel", "arbitrary"),
            vmem_limit_bytes=cfg["vmem"]),
        cost_estimate=ce1,
    )(x_p, w1q, s1, b1p)

    ce2 = pl.CostEstimate(
        flops=tail_flops,
        transcendentals=batch * D_H3,
        bytes_accessed=h1.size * 4 + small_bytes + batch * D_OUT * 4)
    return pl.pallas_call(
        _tail_kernel,
        out_shape=jax.ShapeDtypeStruct((batch, D_OUT), jnp.float32),
        cost_estimate=ce2,
    )(h1, w2p, b2r, w3, b3r, w4, b4r)


def _init_linear(key, fan_in, fan_out):
    # deterministic init mimicking PyTorch's U(-1/sqrt(fan_in), 1/sqrt(fan_in))
    kw, kb = jax.random.split(key)
    bound = 1.0 / jnp.sqrt(fan_in)
    w = jax.random.uniform(kw, (fan_in, fan_out), jnp.float32, -bound, bound)
    b = jax.random.uniform(kb, (fan_out,), jnp.float32, -bound, bound)
    return w, b


def _reference(x, w1, b1, w2, b2, w3, b3, w4, b4):
    h = jnp.maximum(x @ w1 + b1, 0.0)
    h = jnp.maximum(h @ w2 + b2, 0.0)
    h = jax.nn.sigmoid(h @ w3 + b3)
    return h @ w4 + b4


if __name__ == "__main__":
    key = jax.random.PRNGKey(0)
    kx, k1, k2, k3, k4 = jax.random.split(key, 5)

    # The W1 stream cost is ~constant up to batch ~256, so larger batches are
    # nearly free; 16 keeps the example small while filling bf16 sublane
    # packing (16 rows per vreg) on the MXU's M dimension.
    batch = 16
    x = jax.random.normal(kx, (batch, D_IN), jnp.float32)

    w1, b1 = _init_linear(k1, D_IN, D_H1)
    w2, b2 = _init_linear(k2, D_H1, D_H2)
    w3, b3 = _init_linear(k3, D_H2, D_H3)
    w4, b4 = _init_linear(k4, D_H3, D_OUT)

    # One-time parameter packing (int8 quantization + padding), out of the hot path.
    params = prepare_params(w1, b1, w2, b2, w3, b3, w4, b4)
    params = jax.tree_util.tree_map(jax.block_until_ready, params)

    out = jax.block_until_ready(linmod_forward(x, params))
    ref = _reference(x, w1, b1, w2, b2, w3, b3, w4, b4)

    assert out.shape == (batch, D_OUT)
    # x is streamed in bf16 and W1 in int8 with per-column scales (f32
    # accumulation), so allow a small tolerance vs. the pure-f32 reference.
    assert jnp.allclose(out, ref, atol=2e-2, rtol=2e-2), "mismatch vs reference"

    print("KERNEL_OK")
</pallas_src>

<mosaic_0001>
module attributes {stable_mosaic.version = 11 : i64} {
  func.func @_layer1_split_kernel(%arg0: i32, %arg1: i32, %arg2: memref<16x3072xbf16, #tpu.memory_space<vmem>>, %arg3: memref<3072x512xi8, #tpu.memory_space<vmem>>, %arg4: memref<1x512xf32, #tpu.memory_space<vmem>>, %arg5: memref<1x512xf32, #tpu.memory_space<vmem>>, %arg6: memref<16x512xf32, #tpu.memory_space<vmem>>, %arg7: memref<16x512xf32, #tpu.memory_space<vmem>>) attributes {dimension_semantics = [#tpu.dimension_semantics<parallel>, #tpu.dimension_semantics<arbitrary>], iteration_bounds = array<i64: 2, 4>, scalar_prefetch = 0 : i64, scratch_operands = 1 : i64, tpu.core_type = #tpu.core_type<tc>, window_params = [{transform_indices = @transform_0, window_bounds = array<i64: 16, 3072>}, {transform_indices = @transform_1, window_bounds = array<i64: 3072, 512>}, {transform_indices = @transform_2, window_bounds = array<i64: 1, 512>}, {transform_indices = @transform_3, window_bounds = array<i64: 1, 512>}, {transform_indices = @transform_4, window_bounds = array<i64: 16, 512>}]} {
    %c0_i32 = arith.constant 0 : i32
    %0 = arith.cmpi eq, %arg1, %c0_i32 : i32
    %1 = arith.extui %0 : i1 to i32
    %c0_i32_0 = arith.constant 0 : i32
    %2 = arith.cmpi ne, %1, %c0_i32_0 : i32
    scf.if %2 {
      %cst_9 = arith.constant 0.000000e+00 : f32
      %13 = vector.broadcast %cst_9 : f32 to vector<16x512xf32>
      %c0_10 = arith.constant 0 : index
      %c0_11 = arith.constant 0 : index
      %14 = vector.load %arg7[%c0_10, %c0_11] : memref<16x512xf32, #tpu.memory_space<vmem>>, vector<16x512xf32>
      tpu.vector_store %arg7[%c0_10, %c0_11], %13 {strides = array<i32>} : memref<16x512xf32, #tpu.memory_space<vmem>>, vector<16x512xf32>,
    } else {
    }
    %c0 = arith.constant 0 : index
    %c0_1 = arith.constant 0 : index
    %3 = vector.load %arg7[%c0, %c0_1] : memref<16x512xf32, #tpu.memory_space<vmem>>, vector<16x512xf32>
    %c0_2 = arith.constant 0 : index
    %c0_3 = arith.constant 0 : index
    %4 = vector.load %arg2[%c0_2, %c0_3] : memref<16x3072xbf16, #tpu.memory_space<vmem>>, vector<16x3072xbf16>
    %c0_4 = arith.constant 0 : index
    %c0_5 = arith.constant 0 : index
    %5 = vector.load %arg3[%c0_4, %c0_5] : memref<3072x512xi8, #tpu.memory_space<vmem>>, vector<3072x512xi8>
    %6 = arith.sitofp %5 : vector<3072x512xi8> to vector<3072x512xbf16>
    %cst = arith.constant dense<0.000000e+00> : vector<16x512xf32>
    %7 = tpu.matmul %4, %6, %cst {dimension_numbers = #tpu.dot_dimension_numbers<[1], [0], [0], [1], [0, 0, 1, 1], [], []>} : vector<16x3072xbf16>, vector<3072x512xbf16>, vector<16x512xf32> -> vector<16x512xf32>
    %8 = arith.addf %3, %7 : vector<16x512xf32>
    %c0_6 = arith.constant 0 : index
    %c0_7 = arith.constant 0 : index
    %9 = vector.load %arg7[%c0_6, %c0_7] : memref<16x512xf32, #tpu.memory_space<vmem>>, vector<16x512xf32>
    tpu.vector_store %arg7[%c0_6, %c0_7], %8 {strides = array<i32>} : memref<16x512xf32, #tpu.memory_space<vmem>>, vector<16x512xf32>,
    %c3_i32 = arith.constant 3 : i32
    %10 = arith.cmpi eq, %arg1, %c3_i32 : i32
    %11 = arith.extui %10 : i1 to i32
    %c0_i32_8 = arith.constant 0 : i32
    %12 = arith.cmpi ne, %11, %c0_i32_8 : i32
    scf.if %12 {
      %c0_9 = arith.constant 0 : index
      %c0_10 = arith.constant 0 : index
      %13 = vector.load %arg7[%c0_9, %c0_10] : memref<16x512xf32, #tpu.memory_space<vmem>>, vector<16x512xf32>
      %c0_11 = arith.constant 0 : index
      %c0_12 = arith.constant 0 : index
      %14 = vector.load %arg4[%c0_11, %c0_12] : memref<1x512xf32, #tpu.memory_space<vmem>>, vector<1x512xf32>
      %15 = vector.broadcast %14 : vector<1x512xf32> to vector<16x512xf32>
      %16 = arith.mulf %13, %15 : vector<16x512xf32>
      %c0_13 = arith.constant 0 : index
      %c0_14 = arith.constant 0 : index
      %17 = vector.load %arg5[%c0_13, %c0_14] : memref<1x512xf32, #tpu.memory_space<vmem>>, vector<1x512xf32>
      %18 = vector.broadcast %17 : vector<1x512xf32> to vector<16x512xf32>
      %19 = arith.addf %16, %18 : vector<16x512xf32>
      %cst_15 = arith.constant 0.000000e+00 : f32
      %20 = vector.broadcast %cst_15 : f32 to vector<16x512xf32>
      %21 = arith.maximumf %19, %20 : vector<16x512xf32>
      %c0_16 = arith.constant 0 : index
      %c0_17 = arith.constant 0 : index
      %22 = vector.load %arg6[%c0_16, %c0_17] : memref<16x512xf32, #tpu.memory_space<vmem>>, vector<16x512xf32>
      tpu.vector_store %arg6[%c0_16, %c0_17], %21 {strides = array<i32>} : memref<16x512xf32, #tpu.memory_space<vmem>>, vector<16x512xf32>,
    } else {
    }
    return
  }
  func.func @transform_0(%arg0: i32, %arg1: i32) -> (i32, i32) {
    %c0_i32 = arith.constant 0 : i32
    %c0_i32_0 = arith.constant 0 : i32
    return %c0_i32, %arg1 : i32, i32
  }
  func.func @transform_1(%arg0: i32, %arg1: i32) -> (i32, i32) {
    %c0_i32 = arith.constant 0 : i32
    return %arg1, %arg0 : i32, i32
  }
  func.func @transform_2(%arg0: i32, %arg1: i32) -> (i32, i32) {
    %c0_i32 = arith.constant 0 : i32
    %c0_i32_0 = arith.constant 0 : i32
    return %c0_i32, %arg0 : i32, i32
  }
  func.func @transform_3(%arg0: i32, %arg1: i32) -> (i32, i32) {
    %c0_i32 = arith.constant 0 : i32
    %c0_i32_0 = arith.constant 0 : i32
    return %c0_i32, %arg0 : i32, i32
  }
  func.func @transform_4(%arg0: i32, %arg1: i32) -> (i32, i32) {
    %c0_i32 = arith.constant 0 : i32
    %c0_i32_0 = arith.constant 0 : i32
    return %c0_i32, %arg0 : i32, i32
  }
}

module attributes {stable_mosaic.version = 11 : i64} {
  func.func @_tail_kernel(%arg0: memref<16x1024xf32, #tpu.memory_space<vmem>>, %arg1: memref<1024x100xf32, #tpu.memory_space<vmem>>, %arg2: memref<1x100xf32, #tpu.memory_space<vmem>>, %arg3: memref<100x10xf32, #tpu.memory_space<vmem>>, %arg4: memref<1x10xf32, #tpu.memory_space<vmem>>, %arg5: memref<10x10xf32, #tpu.memory_space<vmem>>, %arg6: memref<1x10xf32, #tpu.memory_space<vmem>>, %arg7: memref<16x10xf32, #tpu.memory_space<vmem>>) attributes {dimension_semantics = [], scalar_prefetch = 0 : i64, scratch_operands = 0 : i64, tpu.core_type = #tpu.core_type<tc>} {
    %c0 = arith.constant 0 : index
    %c0_0 = arith.constant 0 : index
    %0 = vector.load %arg0[%c0, %c0_0] : memref<16x1024xf32, #tpu.memory_space<vmem>>, vector<16x1024xf32>
    %c0_1 = arith.constant 0 : index
    %c0_2 = arith.constant 0 : index
    %1 = vector.load %arg1[%c0_1, %c0_2] : memref<1024x100xf32, #tpu.memory_space<vmem>>, vector<1024x100xf32>
    %cst = arith.constant dense<0.000000e+00> : vector<16x100xf32>
    %2 = tpu.matmul %0, %1, %cst {dimension_numbers = #tpu.dot_dimension_numbers<[1], [0], [0], [1], [0, 0, 1, 1], [], []>} : vector<16x1024xf32>, vector<1024x100xf32>, vector<16x100xf32> -> vector<16x100xf32>
    %c0_3 = arith.constant 0 : index
    %c0_4 = arith.constant 0 : index
    %3 = vector.load %arg2[%c0_3, %c0_4] : memref<1x100xf32, #tpu.memory_space<vmem>>, vector<1x100xf32>
    %4 = vector.broadcast %3 : vector<1x100xf32> to vector<16x100xf32>
    %5 = arith.addf %2, %4 : vector<16x100xf32>
    %cst_5 = arith.constant 0.000000e+00 : f32
    %6 = vector.broadcast %cst_5 : f32 to vector<16x100xf32>
    %7 = arith.maximumf %5, %6 : vector<16x100xf32>
    %c0_6 = arith.constant 0 : index
    %c0_7 = arith.constant 0 : index
    %8 = vector.load %arg3[%c0_6, %c0_7] : memref<100x10xf32, #tpu.memory_space<vmem>>, vector<100x10xf32>
    %cst_8 = arith.constant dense<0.000000e+00> : vector<16x10xf32>
    %9 = tpu.matmul %7, %8, %cst_8 {dimension_numbers = #tpu.dot_dimension_numbers<[1], [0], [0], [1], [0, 0, 1, 1], [], []>} : vector<16x100xf32>, vector<100x10xf32>, vector<16x10xf32> -> vector<16x10xf32>
    %c0_9 = arith.constant 0 : index
    %c0_10 = arith.constant 0 : index
    %10 = vector.load %arg4[%c0_9, %c0_10] : memref<1x10xf32, #tpu.memory_space<vmem>>, vector<1x10xf32>
    %11 = vector.broadcast %10 : vector<1x10xf32> to vector<16x10xf32>
    %12 = arith.addf %9, %11 : vector<16x10xf32>
    %13 = arith.negf %12 : vector<16x10xf32>
    %14 = math.exp %13 : vector<16x10xf32>
    %cst_11 = arith.constant 1.000000e+00 : f32
    %15 = vector.broadcast %cst_11 : f32 to vector<16x10xf32>
    %16 = arith.addf %15, %14 : vector<16x10xf32>
    %17 = arith.divf %15, %16 : vector<16x10xf32>
    %c0_12 = arith.constant 0 : index
    %c0_13 = arith.constant 0 : index
    %18 = vector.load %arg5[%c0_12, %c0_13] : memref<10x10xf32, #tpu.memory_space<vmem>>, vector<10x10xf32>
    %cst_14 = arith.constant dense<0.000000e+00> : vector<16x10xf32>
    %19 = tpu.matmul %17, %18, %cst_14 {dimension_numbers = #tpu.dot_dimension_numbers<[1], [0], [0], [1], [0, 0, 1, 1], [], []>} : vector<16x10xf32>, vector<10x10xf32>, vector<16x10xf32> -> vector<16x10xf32>
    %c0_15 = arith.constant 0 : index
    %c0_16 = arith.constant 0 : index
    %20 = vector.load %arg6[%c0_15, %c0_16] : memref<1x10xf32, #tpu.memory_space<vmem>>, vector<1x10xf32>
    %21 = vector.broadcast %20 : vector<1x10xf32> to vector<16x10xf32>
    %22 = arith.addf %19, %21 : vector<16x10xf32>
    %c0_17 = arith.constant 0 : index
    %c0_18 = arith.constant 0 : index
    %23 = vector.load %arg7[%c0_17, %c0_18] : memref<16x10xf32, #tpu.memory_space<vmem>>, vector<16x10xf32>
    tpu.vector_store %arg7[%c0_17, %c0_18], %22 {strides = array<i32>} : memref<16x10xf32, #tpu.memory_space<vmem>>, vector<16x10xf32>,
    return
  }
}

</mosaic_0001>

<llo_original>
// kernel: linmod_forward.3
$region0: #{linmod_forward.3}
  #allocation0 [shape = 'u32[]', space=smem, size = 0x4, offset = 0x4, fixed_abs, tag = 'smem constant byte address 0x4 - core index']
  #allocation1 [shape = 'u32[144,128]{1,0:T(1,128)}', space=vmem, size = 0x12000, scoped, tag = 'internal scratch']
  %s0 = inlined_call_operand.vmem [shape: f32[16,1024], index: 0, kind: input, shape index: {}]
  %s1 = inlined_call_operand.vmem [shape: f32[1024,100], index: 1, kind: input, shape index: {}]
  %s2 = inlined_call_operand.vmem [shape: f32[1,100], index: 2, kind: input, shape index: {}]
  %s3 = inlined_call_operand.vmem [shape: f32[100,10], index: 3, kind: input, shape index: {}]
  %s4 = inlined_call_operand.vmem [shape: f32[1,10], index: 4, kind: input, shape index: {}]
  %s5 = inlined_call_operand.vmem [shape: f32[10,10], index: 5, kind: input, shape index: {}]
  %s6 = inlined_call_operand.vmem [shape: f32[1,10], index: 6, kind: input, shape index: {}]
  %s7 = inlined_call_operand.hbm [shape: f32[16,10], index: 7, kind: output, shape index: {}]
  %s8 = sld [smem:[#allocation0]]
  $region38: #{linmod_forward.3} parent=0
    _
  %s10 = ssub.s32 1, %s8
  %s11 = scalar_select 0, %s10, %s8
  $region1: #{linmod_forward.3} parent=0
    #allocation2 [shape = 'u8[8192]{0}', space=vmem, size = 0x2000, scoped, tag = 'output window, operand 0, single buffered']
    #allocation3 [shape = 's32[1]{0}', space=sflag, size = 0x4, scoped, tag = 'scoped memory for linmod_forward.3']
    %12 = vsyncpa [#allocation3], 0
    // Predicated region
    $region2: #{linmod_forward.3} parent=1 // pred_check
      _
    $region3: #{linmod_forward.3} parent=1 // pred_check_branch
      %14 = sbr.rel (0) target = $region5
    $region4: #{linmod_forward.3} parent=1 // pred_region
      _
    $region5: #{linmod_forward.3} parent=1 // pred_fallthru
      _
    // Predicated region
    $region6: #{linmod_forward.3} parent=1 // pred_check
      _
    $region7: #{linmod_forward.3} parent=1 // pred_check_branch
      %16 = sbr.rel (0) target = $region9
    $region8: #{linmod_forward.3} parent=1 // pred_region
      _
    $region9: #{linmod_forward.3} parent=1 // pred_fallthru
      _
    // Predicated region
    $region10: #{linmod_forward.3} parent=1 // pred_check
      _
    $region11: #{linmod_forward.3} parent=1 // pred_check_branch
      %18 = sbr.rel (0) target = $region13
    $region12: #{linmod_forward.3} parent=1 // pred_region
      _
    $region13: #{linmod_forward.3} parent=1 // pred_fallthru
      _
    // Predicated region
    $region14: #{linmod_forward.3} parent=1 // pred_check
      _
    $region15: #{linmod_forward.3} parent=1 // pred_check_branch
      %20 = sbr.rel (0) target = $region17
    $region16: #{linmod_forward.3} parent=1 // pred_region
      _
    $region17: #{linmod_forward.3} parent=1 // pred_fallthru
      _
    // Predicated region
    $region18: #{linmod_forward.3} parent=1 // pred_check
      _
    $region19: #{linmod_forward.3} parent=1 // pred_check_branch
      %22 = sbr.rel (0) target = $region21
    $region20: #{linmod_forward.3} parent=1 // pred_region
      _
    $region21: #{linmod_forward.3} parent=1 // pred_fallthru
      _
    // Predicated region
    $region22: #{linmod_forward.3} parent=1 // pred_check
      _
    $region23: #{linmod_forward.3} parent=1 // pred_check_branch
      %24 = sbr.rel (0) target = $region25
    $region24: #{linmod_forward.3} parent=1 // pred_region
      _
    $region25: #{linmod_forward.3} parent=1 // pred_fallthru
      _
    // Predicated region
    $region26: #{linmod_forward.3} parent=1 // pred_check
      _
    $region27: #{linmod_forward.3} parent=1 // pred_check_branch
      %26 = sbr.rel (0) target = $region29
    $region28: #{linmod_forward.3} parent=1 // pred_region
      _
    $region29: #{linmod_forward.3} parent=1 // pred_fallthru
      _
    %v27 = vld [vmem:[%s0] sm:$0xff]
    %v28 = vld [vmem:[%s0 + $0x8] sm:$0xff]
    %v29 = vld [vmem:[%s0 + $0x10] sm:$0xff]
    %v30 = vld [vmem:[%s0 + $0x18] sm:$0xff]
    %v31 = vld [vmem:[%s0 + $0x20] sm:$0xff]
    %v32 = vld [vmem:[%s0 + $0x28] sm:$0xff]
    %v33 = vld [vmem:[%s0 + $0x30] sm:$0xff]
    %v34 = vld [vmem:[%s0 + $0x38] sm:$0xff]
    %v35 = vld [vmem:[%s0 + $0x40] sm:$0xff]
    %v36 = vld [vmem:[%s0 + $0x48] sm:$0xff]
    %v37 = vld [vmem:[%s0 + $0x50] sm:$0xff]
    %v38 = vld [vmem:[%s0 + $0x58] sm:$0xff]
    %v39 = vld [vmem:[%s0 + $0x60] sm:$0xff]
    %v40 = vld [vmem:[%s0 + $0x68] sm:$0xff]
    %v41 = vld [vmem:[%s0 + $0x70] sm:$0xff]
    %v42 = vld [vmem:[%s0 + $0x78] sm:$0xff]
    %v43 = vld [vmem:[%s1] sm:$0xff]
    %v44 = vld [vmem:[%s1 + $0x8] sm:$0xff]
    %v45 = vld [vmem:[%s1 + $0x10] sm:$0xff]
    %v46 = vld [vmem:[%s1 + $0x18] sm:$0xff]
    %v47 = vld [vmem:[%s1 + $0x20] sm:$0xff]
    %v48 = vld [vmem:[%s1 + $0x28] sm:$0xff]
    %v49 = vld [vmem:[%s1 + $0x30] sm:$0xff]
    %v50 = vld [vmem:[%s1 + $0x38] sm:$0xff]
    %v51 = vld [vmem:[%s1 + $0x40] sm:$0xff]
    %v52 = vld [vmem:[%s1 + $0x48] sm:$0xff]
    %v53 = vld [vmem:[%s1 + $0x50] sm:$0xff]
    %v54 = vld [vmem:[%s1 + $0x58] sm:$0xff]
    %v55 = vld [vmem:[%s1 + $0x60] sm:$0xff]
    %v56 = vld [vmem:[%s1 + $0x68] sm:$0xff]
    %v57 = vld [vmem:[%s1 + $0x70] sm:$0xff]
    %v58 = vld [vmem:[%s1 + $0x78] sm:$0xff]
    %v59 = vld [vmem:[%s1 + $0x80] sm:$0xff]
    %v60 = vld [vmem:[%s1 + $0x88] sm:$0xff]
    %v61 = vld [vmem:[%s1 + $0x90] sm:$0xff]
    %v62 = vld [vmem:[%s1 + $0x98] sm:$0xff]
    %v63 = vld [vmem:[%s1 + $0xa0] sm:$0xff]
    %v64 = vld [vmem:[%s1 + $0xa8] sm:$0xff]
    %v65 = vld [vmem:[%s1 + $0xb0] sm:$0xff]
    %v66 = vld [vmem:[%s1 + $0xb8] sm:$0xff]
    %v67 = vld [vmem:[%s1 + $0xc0] sm:$0xff]
    %v68 = vld [vmem:[%s1 + $0xc8] sm:$0xff]
    %v69 = vld [vmem:[%s1 + $0xd0] sm:$0xff]
    %v70 = vld [vmem:[%s1 + $0xd8] sm:$0xff]
    %v71 = vld [vmem:[%s1 + $0xe0] sm:$0xff]
    %v72 = vld [vmem:[%s1 + $0xe8] sm:$0xff]
    %v73 = vld [vmem:[%s1 + $0xf0] sm:$0xff]
    %v74 = vld [vmem:[%s1 + $0xf8] sm:$0xff]
    %v75 = vld [vmem:[%s1 + $0x100] sm:$0xff]
    %v76 = vld [vmem:[%s1 + $0x108] sm:$0xff]
    %v77 = vld [vmem:[%s1 + $0x110] sm:$0xff]
    %v78 = vld [vmem:[%s1 + $0x118] sm:$0xff]
    %v79 = vld [vmem:[%s1 + $0x120] sm:$0xff]
    %v80 = vld [vmem:[%s1 + $0x128] sm:$0xff]
    %v81 = vld [vmem:[%s1 + $0x130] sm:$0xff]
    %v82 = vld [vmem:[%s1 + $0x138] sm:$0xff]
    %v83 = vld [vmem:[%s1 + $0x140] sm:$0xff]
    %v84 = vld [vmem:[%s1 + $0x148] sm:$0xff]
    %v85 = vld [vmem:[%s1 + $0x150] sm:$0xff]
    %v86 = vld [vmem:[%s1 + $0x158] sm:$0xff]
    %v87 = vld [vmem:[%s1 + $0x160] sm:$0xff]
    %v88 = vld [vmem:[%s1 + $0x168] sm:$0xff]
    %v89 = vld [vmem:[%s1 + $0x170] sm:$0xff]
    %v90 = vld [vmem:[%s1 + $0x178] sm:$0xff]
    %v91 = vld [vmem:[%s1 + $0x180] sm:$0xff]
    %v92 = vld [vmem:[%s1 + $0x188] sm:$0xff]
    %v93 = vld [vmem:[%s1 + $0x190] sm:$0xff]
    %v94 = vld [vmem:[%s1 + $0x198] sm:$0xff]
    %v95 = vld [vmem:[%s1 + $0x1a0] sm:$0xff]
    %v96 = vld [vmem:[%s1 + $0x1a8] sm:$0xff]
    %v97 = vld [vmem:[%s1 + $0x1b0] sm:$0xff]
    %v98 = vld [vmem:[%s1 + $0x1b8] sm:$0xff]
    %v99 = vld [vmem:[%s1 + $0x1c0] sm:$0xff]
    %v100 = vld [vmem:[%s1 + $0x1c8] sm:$0xff]
    %v101 = vld [vmem:[%s1 + $0x1d0] sm:$0xff]
    %v102 = vld [vmem:[%s1 + $0x1d8] sm:$0xff]
    %v103 = vld [vmem:[%s1 + $0x1e0] sm:$0xff]
    %v104 = vld [vmem:[%s1 + $0x1e8] sm:$0xff]
    %v105 = vld [vmem:[%s1 + $0x1f0] sm:$0xff]
    %v106 = vld [vmem:[%s1 + $0x1f8] sm:$0xff]
    %v107 = vld [vmem:[%s1 + $0x200] sm:$0xff]
    %v108 = vld [vmem:[%s1 + $0x208] sm:$0xff]
    %v109 = vld [vmem:[%s1 + $0x210] sm:$0xff]
    %v110 = vld [vmem:[%s1 + $0x218] sm:$0xff]
    %v111 = vld [vmem:[%s1 + $0x220] sm:$0xff]
    %v112 = vld [vmem:[%s1 + $0x228] sm:$0xff]
    %v113 = vld [vmem:[%s1 + $0x230] sm:$0xff]
    %v114 = vld [vmem:[%s1 + $0x238] sm:$0xff]
    %v115 = vld [vmem:[%s1 + $0x240] sm:$0xff]
    %v116 = vld [vmem:[%s1 + $0x248] sm:$0xff]
    %v117 = vld [vmem:[%s1 + $0x250] sm:$0xff]
    %v118 = vld [vmem:[%s1 + $0x258] sm:$0xff]
    %v119 = vld [vmem:[%s1 + $0x260] sm:$0xff]
    %v120 = vld [vmem:[%s1 + $0x268] sm:$0xff]
    %v121 = vld [vmem:[%s1 + $0x270] sm:$0xff]
    %v122 = vld [vmem:[%s1 + $0x278] sm:$0xff]
    %v123 = vld [vmem:[%s1 + $0x280] sm:$0xff]
    %v124 = vld [vmem:[%s1 + $0x288] sm:$0xff]
    %v125 = vld [vmem:[%s1 + $0x290] sm:$0xff]
    %v126 = vld [vmem:[%s1 + $0x298] sm:$0xff]
    %v127 = vld [vmem:[%s1 + $0x2a0] sm:$0xff]
    %v128 = vld [vmem:[%s1 + $0x2a8] sm:$0xff]
    %v129 = vld [vmem:[%s1 + $0x2b0] sm:$0xff]
    %v130 = vld [vmem:[%s1 + $0x2b8] sm:$0xff]
    %v131 = vld [vmem:[%s1 + $0x2c0] sm:$0xff]
    %v132 = vld [vmem:[%s1 + $0x2c8] sm:$0xff]
    %v133 = vld [vmem:[%s1 + $0x2d0] sm:$0xff]
    %v134 = vld [vmem:[%s1 + $0x2d8] sm:$0xff]
    %v135 = vld [vmem:[%s1 + $0x2e0] sm:$0xff]
    %v136 = vld [vmem:[%s1 + $0x2e8] sm:$0xff]
    %v137 = vld [vmem:[%s1 + $0x2f0] sm:$0xff]
    %v138 = vld [vmem:[%s1 + $0x2f8] sm:$0xff]
    %v139 = vld [vmem:[%s1 + $0x300] sm:$0xff]
    %v140 = vld [vmem:[%s1 + $0x308] sm:$0xff]
    %v141 = vld [vmem:[%s1 + $0x310] sm:$0xff]
    %v142 = vld [vmem:[%s1 + $0x318] sm:$0xff]
    %v143 = vld [vmem:[%s1 + $0x320] sm:$0xff]
    %v144 = vld [vmem:[%s1 + $0x328] sm:$0xff]
    %v145 = vld [vmem:[%s1 + $0x330] sm:$0xff]
    %v146 = vld [vmem:[%s1 + $0x338] sm:$0xff]
    %v147 = vld [vmem:[%s1 + $0x340] sm:$0xff]
    %v148 = vld [vmem:[%s1 + $0x348] sm:$0xff]
    %v149 = vld [vmem:[%s1 + $0x350] sm:$0xff]
    %v150 = vld [vmem:[%s1 + $0x358] sm:$0xff]
    %v151 = vld [vmem:[%s1 + $0x360] sm:$0xff]
    %v152 = vld [vmem:[%s1 + $0x368] sm:$0xff]
    %v153 = vld [vmem:[%s1 + $0x370] sm:$0xff]
    %v154 = vld [vmem:[%s1 + $0x378] sm:$0xff]
    %v155 = vld [vmem:[%s1 + $0x380] sm:$0xff]
    %v156 = vld [vmem:[%s1 + $0x388] sm:$0xff]
    %v157 = vld [vmem:[%s1 + $0x390] sm:$0xff]
    %v158 = vld [vmem:[%s1 + $0x398] sm:$0xff]
    %v159 = vld [vmem:[%s1 + $0x3a0] sm:$0xff]
    %v160 = vld [vmem:[%s1 + $0x3a8] sm:$0xff]
    %v161 = vld [vmem:[%s1 + $0x3b0] sm:$0xff]
    %v162 = vld [vmem:[%s1 + $0x3b8] sm:$0xff]
    %v163 = vld [vmem:[%s1 + $0x3c0] sm:$0xff]
    %v164 = vld [vmem:[%s1 + $0x3c8] sm:$0xff]
    %v165 = vld [vmem:[%s1 + $0x3d0] sm:$0xff]
    %v166 = vld [vmem:[%s1 + $0x3d8] sm:$0xff]
    %v167 = vld [vmem:[%s1 + $0x3e0] sm:$0xff]
    %v168 = vld [vmem:[%s1 + $0x3e8] sm:$0xff]
    %v169 = vld [vmem:[%s1 + $0x3f0] sm:$0xff]
    %v170 = vld [vmem:[%s1 + $0x3f8] sm:$0xff]
    %v171 = vld [vmem:[%s2] sm:$0x1]
    %v173 = vlaneseq
    %v174 = vshrl.u32 %v173, 7
    %v175 = vsub.s32 0, %v174
    %v176 = vrot.slane %v171, %v175
    %178 = vmatprep.subr.mxu0 0.0
    %179 = vmatpush1.msra.mxu0 %v43
    %180 = vmatprep.subr.mxu0 0.0
    %181 = vmatpush1.msra.mxu0 %v44
    %182 = vmatprep.subr.mxu0 0.0
    %183 = vmatpush1.msra.mxu0 %v45
    %184 = vmatprep.subr.mxu0 0.0
    %185 = vmatpush1.msra.mxu0 %v46
    %186 = vmatprep.subr.mxu0 0.0
    %187 = vmatpush1.msra.mxu0 %v47
    %188 = vmatprep.subr.mxu0 0.0
    %189 = vmatpush1.msra.mxu0 %v48
    %190 = vmatprep.subr.mxu0 0.0
    %191 = vmatpush1.msra.mxu0 %v49
    %192 = vmatprep.subr.mxu0 0.0
    %193 = vmatpush1.msra.mxu0 %v50
    %194 = vmatprep.subr.mxu0 0.0
    %195 = vmatpush1.msra.mxu0 %v51
    %196 = vmatprep.subr.mxu0 0.0
    %197 = vmatpush1.msra.mxu0 %v52
    %198 = vmatprep.subr.mxu0 0.0
    %199 = vmatpush1.msra.mxu0 %v53
    %200 = vmatprep.subr.mxu0 0.0
    %201 = vmatpush1.msra.mxu0 %v54
    %202 = vmatprep.subr.mxu0 0.0
    %203 = vmatpush1.msra.mxu0 %v55
    %204 = vmatprep.subr.mxu0 0.0
    %205 = vmatpush1.msra.mxu0 %v56
    %206 = vmatprep.subr.mxu0 0.0
    %207 = vmatpush1.msra.mxu0 %v57
    %208 = vmatprep.subr.mxu0 0.0
    %209 = vmatpush1.msra.mxu0 %v58
    %210 = vmatprep.subr.mxu0 0.0
    %211 = vmatpush1.msra.mxu0 %v59
    %212 = vmatprep.subr.mxu0 0.0
    %213 = vmatpush1.msra.mxu0 %v60
    %214 = vmatprep.subr.mxu0 0.0
    %215 = vmatpush1.msra.mxu0 %v61
    %216 = vmatprep.subr.mxu0 0.0
    %217 = vmatpush1.msra.mxu0 %v62
    %218 = vmatprep.subr.mxu0 0.0
    %219 = vmatpush1.msra.mxu0 %v63
    %220 = vmatprep.subr.mxu0 0.0
    %221 = vmatpush1.msra.mxu0 %v64
    %222 = vmatprep.subr.mxu0 0.0
    %223 = vmatpush1.msra.mxu0 %v65
    %224 = vmatprep.subr.mxu0 0.0
    %225 = vmatpush1.msra.mxu0 %v66
    %226 = vmatprep.subr.mxu0 0.0
    %227 = vmatpush1.msra.mxu0 %v67
    %228 = vmatprep.subr.mxu0 0.0
    %229 = vmatpush1.msra.mxu0 %v68
    %230 = vmatprep.subr.mxu0 0.0
    %231 = vmatpush1.msra.mxu0 %v69
    %232 = vmatprep.subr.mxu0 0.0
    %233 = vmatpush1.msra.mxu0 %v70
    %234 = vmatprep.subr.mxu0 0.0
    %235 = vmatpush1.msra.mxu0 %v71
    %236 = vmatprep.subr.mxu0 0.0
    %237 = vmatpush1.msra.mxu0 %v72
    %238 = vmatprep.subr.mxu0 0.0
    %239 = vmatpush1.msra.mxu0 %v73
    %240 = vmatprep.subr.mxu0 0.0
    %241 = vmatpush1.msra.mxu0 %v74
    %242 = vmatprep.mubr.f32.mxu0 %v28
    %243 = vmatmul.mubr.f32.gmra.mrb[0].mxu0 %v27
    %v244 = vpop.f32.mrb[0].mxu0
    %v245 = vadd.f32 %v176, %v244
    %v246 = vpop.f32.mrb[0].mxu0
    %247 = vmatprep.mubr.f32.mxu0 %v36
    %248 = vmatmul.mubr.f32.gmra.mrb[0].mxu0 %v35
    %v249 = vpop.f32.mrb[0].mxu0
    %v250 = vadd.f32 %v176, %v249
    %v251 = vpop.f32.mrb[0].mxu0
    %252 = vdwg.mxu0
    %253 = vmatprep.subr.mxu0 0.0
    %254 = vmatpush1.msra.mxu0 %v75
    %255 = vmatprep.subr.mxu0 0.0
    %256 = vmatpush1.msra.mxu0 %v76
    %257 = vmatprep.subr.mxu0 0.0
    %258 = vmatpush1.msra.mxu0 %v77
    %259 = vmatprep.subr.mxu0 0.0
    %260 = vmatpush1.msra.mxu0 %v78
    %261 = vmatprep.subr.mxu0 0.0
    %262 = vmatpush1.msra.mxu0 %v79
    %263 = vmatprep.subr.mxu0 0.0
    %264 = vmatpush1.msra.mxu0 %v80
    %265 = vmatprep.subr.mxu0 0.0
    %266 = vmatpush1.msra.mxu0 %v81
    %267 = vmatprep.subr.mxu0 0.0
    %268 = vmatpush1.msra.mxu0 %v82
    %269 = vmatprep.subr.mxu0 0.0
    %270 = vmatpush1.msra.mxu0 %v83
    %271 = vmatprep.subr.mxu0 0.0
    %272 = vmatpush1.msra.mxu0 %v84
    %273 = vmatprep.subr.mxu0 0.0
    %274 = vmatpush1.msra.mxu0 %v85
    %275 = vmatprep.subr.mxu0 0.0
    %276 = vmatpush1.msra.mxu0 %v86
    %277 = vmatprep.subr.mxu0 0.0
    %278 = vmatpush1.msra.mxu0 %v87
    %279 = vmatprep.subr.mxu0 0.0
    %280 = vmatpush1.msra.mxu0 %v88
    %281 = vmatprep.subr.mxu0 0.0
    %282 = vmatpush1.msra.mxu0 %v89
    %283 = vmatprep.subr.mxu0 0.0
    %284 = vmatpush1.msra.mxu0 %v90
    %285 = vmatprep.subr.mxu0 0.0
    %286 = vmatpush1.msra.mxu0 %v91
    %287 = vmatprep.subr.mxu0 0.0
    %288 = vmatpush1.msra.mxu0 %v92
    %289 = vmatprep.subr.mxu0 0.0
    %290 = vmatpush1.msra.mxu0 %v93
    %291 = vmatprep.subr.mxu0 0.0
    %292 = vmatpush1.msra.mxu0 %v94
    %293 = vmatprep.subr.mxu0 0.0
    %294 = vmatpush1.msra.mxu0 %v95
    %295 = vmatprep.subr.mxu0 0.0
    %296 = vmatpush1.msra.mxu0 %v96
    %297 = vmatprep.subr.mxu0 0.0
    %298 = vmatpush1.msra.mxu0 %v97
    %299 = vmatprep.subr.mxu0 0.0
    %300 = vmatpush1.msra.mxu0 %v98
    %301 = vmatprep.subr.mxu0 0.0
    %302 = vmatpush1.msra.mxu0 %v99
    %303 = vmatprep.subr.mxu0 0.0
    %304 = vmatpush1.msra.mxu0 %v100
    %305 = vmatprep.subr.mxu0 0.0
    %306 = vmatpush1.msra.mxu0 %v101
    %307 = vmatprep.subr.mxu0 0.0
    %308 = vmatpush1.msra.mxu0 %v102
    %309 = vmatprep.subr.mxu0 0.0
    %310 = vmatpush1.msra.mxu0 %v103
    %311 = vmatprep.subr.mxu0 0.0
    %312 = vmatpush1.msra.mxu0 %v104
    %313 = vmatprep.subr.mxu0 0.0
    %314 = vmatpush1.msra.mxu0 %v105
    %315 = vmatprep.subr.mxu0 0.0
    %316 = vmatpush1.msra.mxu0 %v106
    %317 = vmatprep.mubr.f32.mxu0 %v30
    %318 = vmatmul.mubr.f32.gmra.mrb[0].mxu0 %v29
    %v319 = vpop.f32.mrb[0].mxu0
    %v320 = vadd.f32 %v245, %v319
    %v321 = vpop.f32.mrb[0].mxu0
    %322 = vmatprep.mubr.f32.mxu0 %v38
    %323 = vmatmul.mubr.f32.gmra.mrb[0].mxu0 %v37
    %v324 = vpop.f32.mrb[0].mxu0
    %v325 = vadd.f32 %v250, %v324
    %v326 = vpop.f32.mrb[0].mxu0
    %327 = vdwg.mxu0
    %328 = vmatprep.subr.mxu0 0.0
    %329 = vmatpush1.msra.mxu0 %v107
    %330 = vmatprep.subr.mxu0 0.0
    %331 = vmatpush1.msra.mxu0 %v108
    %332 = vmatprep.subr.mxu0 0.0
    %333 = vmatpush1.msra.mxu0 %v109
    %334 = vmatprep.subr.mxu0 0.0
    %335 = vmatpush1.msra.mxu0 %v110
    %336 = vmatprep.subr.mxu0 0.0
    %337 = vmatpush1.msra.mxu0 %v111
    %338 = vmatprep.subr.mxu0 0.0
    %339 = vmatpush1.msra.mxu0 %v112
    %340 = vmatprep.subr.mxu0 0.0
    %341 = vmatpush1.msra.mxu0 %v113
    %342 = vmatprep.subr.mxu0 0.0
    %343 = vmatpush1.msra.mxu0 %v114
    %344 = vmatprep.subr.mxu0 0.0
    %345 = vmatpush1.msra.mxu0 %v115
    %346 = vmatprep.subr.mxu0 0.0
    %347 = vmatpush1.msra.mxu0 %v116
    %348 = vmatprep.subr.mxu0 0.0
    %349 = vmatpush1.msra.mxu0 %v117
    %350 = vmatprep.subr.mxu0 0.0
    %351 = vmatpush1.msra.mxu0 %v118
    %352 = vmatprep.subr.mxu0 0.0
    %353 = vmatpush1.msra.mxu0 %v119
    %354 = vmatprep.subr.mxu0 0.0
    %355 = vmatpush1.msra.mxu0 %v120
    %356 = vmatprep.subr.mxu0 0.0
    %357 = vmatpush1.msra.mxu0 %v121
    %358 = vmatprep.subr.mxu0 0.0
    %359 = vmatpush1.msra.mxu0 %v122
    %360 = vmatprep.subr.mxu0 0.0
    %361 = vmatpush1.msra.mxu0 %v123
    %362 = vmatprep.subr.mxu0 0.0
    %363 = vmatpush1.msra.mxu0 %v124
    %364 = vmatprep.subr.mxu0 0.0
    %365 = vmatpush1.msra.mxu0 %v125
    %366 = vmatprep.subr.mxu0 0.0
    %367 = vmatpush1.msra.mxu0 %v126
    %368 = vmatprep.subr.mxu0 0.0
    %369 = vmatpush1.msra.mxu0 %v127
    %370 = vmatprep.subr.mxu0 0.0
    %371 = vmatpush1.msra.mxu0 %v128
    %372 = vmatprep.subr.mxu0 0.0
    %373 = vmatpush1.msra.mxu0 %v129
    %374 = vmatprep.subr.mxu0 0.0
    %375 = vmatpush1.msra.mxu0 %v130
    %376 = vmatprep.subr.mxu0 0.0
    %377 = vmatpush1.msra.mxu0 %v131
    %378 = vmatprep.subr.mxu0 0.0
    %379 = vmatpush1.msra.mxu0 %v132
    %380 = vmatprep.subr.mxu0 0.0
    %381 = vmatpush1.msra.mxu0 %v133
    %382 = vmatprep.subr.mxu0 0.0
    %383 = vmatpush1.msra.mxu0 %v134
    %384 = vmatprep.subr.mxu0 0.0
    %385 = vmatpush1.msra.mxu0 %v135
    %386 = vmatprep.subr.mxu0 0.0
    %387 = vmatpush1.msra.mxu0 %v136
    %388 = vmatprep.subr.mxu0 0.0
    %389 = vmatpush1.msra.mxu0 %v137
    %390 = vmatprep.subr.mxu0 0.0
    %391 = vmatpush1.msra.mxu0 %v138
    %392 = vmatprep.mubr.f32.mxu0 %v32
    %393 = vmatmul.mubr.f32.gmra.mrb[0].mxu0 %v31
    %v394 = vpop.f32.mrb[0].mxu0
    %v395 = vadd.f32 %v320, %v394
    %v396 = vpop.f32.mrb[0].mxu0
    %397 = vmatprep.mubr.f32.mxu0 %v40
    %398 = vmatmul.mubr.f32.gmra.mrb[0].mxu0 %v39
    %v399 = vpop.f32.mrb[0].mxu0
    %v400 = vadd.f32 %v325, %v399
    %v401 = vpop.f32.mrb[0].mxu0
    %402 = vdwg.mxu0
    %403 = vmatprep.subr.mxu0 0.0
    %404 = vmatpush1.msra.mxu0 %v139
    %405 = vmatprep.subr.mxu0 0.0
    %406 = vmatpush1.msra.mxu0 %v140
    %407 = vmatprep.subr.mxu0 0.0
    %408 = vmatpush1.msra.mxu0 %v141
    %409 = vmatprep.subr.mxu0 0.0
    %410 = vmatpush1.msra.mxu0 %v142
    %411 = vmatprep.subr.mxu0 0.0
    %412 = vmatpush1.msra.mxu0 %v143
    %413 = vmatprep.subr.mxu0 0.0
    %414 = vmatpush1.msra.mxu0 %v144
    %415 = vmatprep.subr.mxu0 0.0
    %416 = vmatpush1.msra.mxu0 %v145
    %417 = vmatprep.subr.mxu0 0.0
    %418 = vmatpush1.msra.mxu0 %v146
    %419 = vmatprep.subr.mxu0 0.0
    %420 = vmatpush1.msra.mxu0 %v147
    %421 = vmatprep.subr.mxu0 0.0
    %422 = vmatpush1.msra.mxu0 %v148
    %423 = vmatprep.subr.mxu0 0.0
    %424 = vmatpush1.msra.mxu0 %v149
    %425 = vmatprep.subr.mxu0 0.0
    %426 = vmatpush1.msra.mxu0 %v150
    %427 = vmatprep.subr.mxu0 0.0
    %428 = vmatpush1.msra.mxu0 %v151
    %429 = vmatprep.subr.mxu0 0.0
    %430 = vmatpush1.msra.mxu0 %v152
    %431 = vmatprep.subr.mxu0 0.0
    %432 = vmatpush1.msra.mxu0 %v153
    %433 = vmatprep.subr.mxu0 0.0
    %434 = vmatpush1.msra.mxu0 %v154
    %435 = vmatprep.subr.mxu0 0.0
    %436 = vmatpush1.msra.mxu0 %v155
    %437 = vmatprep.subr.mxu0 0.0
    %438 = vmatpush1.msra.mxu0 %v156
    %439 = vmatprep.subr.mxu0 0.0
    %440 = vmatpush1.msra.mxu0 %v157
    %441 = vmatprep.subr.mxu0 0.0
    %442 = vmatpush1.msra.mxu0 %v158
    %443 = vmatprep.subr.mxu0 0.0
    %444 = vmatpush1.msra.mxu0 %v159
    %445 = vmatprep.subr.mxu0 0.0
    %446 = vmatpush1.msra.mxu0 %v160
    %447 = vmatprep.subr.mxu0 0.0
    %448 = vmatpush1.msra.mxu0 %v161
    %449 = vmatprep.subr.mxu0 0.0
    %450 = vmatpush1.msra.mxu0 %v162
    %451 = vmatprep.subr.mxu0 0.0
    %452 = vmatpush1.msra.mxu0 %v163
    %453 = vmatprep.subr.mxu0 0.0
    %454 = vmatpush1.msra.mxu0 %v164
    %455 = vmatprep.subr.mxu0 0.0
    %456 = vmatpush1.msra.mxu0 %v165
    %457 = vmatprep.subr.mxu0 0.0
    %458 = vmatpush1.msra.mxu0 %v166
    %459 = vmatprep.subr.mxu0 0.0
    %460 = vmatpush1.msra.mxu0 %v167
    %461 = vmatprep.subr.mxu0 0.0
    %462 = vmatpush1.msra.mxu0 %v168
    %463 = vmatprep.subr.mxu0 0.0
    %464 = vmatpush1.msra.mxu0 %v169
    %465 = vmatprep.subr.mxu0 0.0
    %466 = vmatpush1.msra.mxu0 %v170
    %467 = vmatprep.mubr.f32.mxu0 %v34
    %468 = vmatmul.mubr.f32.gmra.mrb[0].mxu0 %v33
    %v469 = vpop.f32.mrb[0].mxu0
    %v470 = vadd.f32 %v395, %v469
    %v471 = vpop.f32.mrb[0].mxu0
    %472 = vmatprep.mubr.f32.mxu0 %v42
    %473 = vmatmul.mubr.f32.gmra.mrb[0].mxu0 %v41
    %v474 = vpop.f32.mrb[0].mxu0
    %v475 = vadd.f32 %v400, %v474
    %v476 = vpop.f32.mrb[0].mxu0
    %477 = vdwg.mxu0
    %v478 = vmax.f32 %v470, 0.0
    %v479 = vmax.f32 %v475, 0.0
    %v480 = vld [vmem:[%s3] sm:$0xff]
    %v481 = vld [vmem:[%s3 + $0x8] sm:$0xff]
    %v482 = vld [vmem:[%s3 + $0x10] sm:$0xff]
    %v483 = vld [vmem:[%s3 + $0x18] sm:$0xff]
    %v484 = vld [vmem:[%s3 + $0x20] sm:$0xff]
    %v485 = vld [vmem:[%s3 + $0x28] sm:$0xff]
    %v486 = vld [vmem:[%s3 + $0x30] sm:$0xff]
    %v487 = vld [vmem:[%s3 + $0x38] sm:$0xff]
    %v488 = vld [vmem:[%s3 + $0x40] sm:$0xff]
    %v489 = vld [vmem:[%s3 + $0x48] sm:$0xff]
    %v490 = vld [vmem:[%s3 + $0x50] sm:$0xff]
    %v491 = vld [vmem:[%s3 + $0x58] sm:$0xff]
    %v492 = vld [vmem:[%s3 + $0x60] sm:$0xf]
    %v493 = vld [vmem:[%s4] sm:$0x1]
    %v495 = vlaneseq
    %v496 = vshrl.u32 %v495, 7
    %v497 = vsub.s32 0, %v496
    %v498 = vrot.slane %v493, %v497
    %vm500 = vcmask 818176
    %v502 = vsel %vm500, %v478, 0
    %v505 = vsel %vm500, %v479, 0
    %vm507 = vcmask 1043456
    %v509 = vsel %vm507, %v492, 0
    %511 = vmatprep.subr.mxu0 0.0
    %512 = vmatpush1.msra.mxu0 %v480
    %513 = vmatprep.subr.mxu0 0.0
    %514 = vmatpush1.msra.mxu0 %v481
    %515 = vmatprep.subr.mxu0 0.0
    %516 = vmatpush1.msra.mxu0 %v482
    %517 = vmatprep.subr.mxu0 0.0
    %518 = vmatpush1.msra.mxu0 %v483
    %519 = vmatprep.subr.mxu0 0.0
    %520 = vmatpush1.msra.mxu0 %v484
    %521 = vmatprep.subr.mxu0 0.0
    %522 = vmatpush1.msra.mxu0 %v485
    %523 = vmatprep.subr.mxu0 0.0
    %524 = vmatpush1.msra.mxu0 %v486
    %525 = vmatprep.subr.mxu0 0.0
    %526 = vmatpush1.msra.mxu0 %v487
    %527 = vmatprep.subr.mxu0 0.0
    %528 = vmatpush1.msra.mxu0 %v488
    %529 = vmatprep.subr.mxu0 0.0
    %530 = vmatpush1.msra.mxu0 %v489
    %531 = vmatprep.subr.mxu0 0.0
    %532 = vmatpush1.msra.mxu0 %v490
    %533 = vmatprep.subr.mxu0 0.0
    %534 = vmatpush1.msra.mxu0 %v491
    %535 = vmatprep.subr.mxu0 0.0
    %536 = vmatpush1.msra.mxu0 %v509
    %537 = vmatprep.subr.mxu0 0.0
    %538 = vmatpush1.msra.mxu0 0.0
    %539 = vmatprep.subr.mxu0 0.0
    %540 = vmatpush1.msra.mxu0 0.0
    %541 = vmatprep.subr.mxu0 0.0
    %542 = vmatpush1.msra.mxu0 0.0
    %543 = vmatprep.subr.mxu0 0.0
    %544 = vmatpush1.msra.mxu0 0.0
    %545 = vmatprep.subr.mxu0 0.0
    %546 = vmatpush1.msra.mxu0 0.0
    %547 = vmatprep.subr.mxu0 0.0
    %548 = vmatpush1.msra.mxu0 0.0
    %549 = vmatprep.subr.mxu0 0.0
    %550 = vmatpush1.msra.mxu0 0.0
    %551 = vmatprep.subr.mxu0 0.0
    %552 = vmatpush1.msra.mxu0 0.0
    %553 = vmatprep.subr.mxu0 0.0
    %554 = vmatpush1.msra.mxu0 0.0
    %555 = vmatprep.subr.mxu0 0.0
    %556 = vmatpush1.msra.mxu0 0.0
    %557 = vmatprep.subr.mxu0 0.0
    %558 = vmatpush1.msra.mxu0 0.0
    %559 = vmatprep.subr.mxu0 0.0
    %560 = vmatpush1.msra.mxu0 0.0
    %561 = vmatprep.subr.mxu0 0.0
    %562 = vmatpush1.msra.mxu0 0.0
    %563 = vmatprep.subr.mxu0 0.0
    %564 = vmatpush1.msra.mxu0 0.0
    %565 = vmatprep.subr.mxu0 0.0
    %566 = vmatpush1.msra.mxu0 0.0
    %567 = vmatprep.subr.mxu0 0.0
    %568 = vmatpush1.msra.mxu0 0.0
    %569 = vmatprep.subr.mxu0 0.0
    %570 = vmatpush1.msra.mxu0 0.0
    %571 = vmatprep.subr.mxu0 0.0
    %572 = vmatpush1.msra.mxu0 0.0
    %573 = vmatprep.subr.mxu0 0.0
    %574 = vmatpush1.msra.mxu0 0.0
    %575 = vmatprep.mubr.f32.mxu0 0.0
    %576 = vmatmul.mubr.f32.gmra.mrb[0].mxu0 %v502
    %v577 = vpop.f32.mrb[0].mxu0
    %v578 = vadd.f32 %v498, %v577
    %v579 = vpop.f32.mrb[0].mxu0
    %580 = vmatprep.mubr.f32.mxu0 0.0
    %581 = vmatmul.mubr.f32.gmra.mrb[0].mxu0 %v505
    %v582 = vpop.f32.mrb[0].mxu0
    %v583 = vadd.f32 %v498, %v582
    %v584 = vpop.f32.mrb[0].mxu0
    %585 = vdwg.mxu0
    %v586 = vxor.u32 %v578, 2147483648
    %v587 = vxor.u32 %v583, 2147483648
    %v588 = vmul.f32 %v586, 1.442695
    %v589 = vpow.pop %v588
    %v590 = vmul.f32 %v587, 1.442695
    %v591 = vpow.pop %v590
    %v592 = vadd.f32 %v589, 1.0
    %v593 = vadd.f32 %v591, 1.0
    %v594 = vrcp.pop %v592
    %v595 = vmul.f32 1.0, %v594
    %v596 = vrcp.pop %v593
    %v597 = vmul.f32 1.0, %v596
    %v598 = vld [vmem:[%s5] sm:$0xff]
    %v599 = vld [vmem:[%s5 + $0x8] sm:$0x3]
    %v600 = vld [vmem:[%s6] sm:$0x1]
    %v602 = vlaneseq
    %v603 = vshrl.u32 %v602, 7
    %v604 = vsub.s32 0, %v603
    %v605 = vrot.slane %v600, %v604
    %vm607 = vcmask 80896
    %v609 = vsel %vm607, %v595, 0
    %v612 = vsel %vm607, %v597, 0
    %vm614 = vcmask 1041408
    %v616 = vsel %vm614, %v599, 0
    %618 = vmatprep.subr.mxu0 0.0
    %619 = vmatpush1.msra.mxu0 %v598
    %620 = vmatprep.subr.mxu0 0.0
    %621 = vmatpush1.msra.mxu0 %v616
    %622 = vmatprep.subr.mxu0 0.0
    %623 = vmatpush1.msra.mxu0 0.0
    %624 = vmatprep.subr.mxu0 0.0
    %625 = vmatpush1.msra.mxu0 0.0
    %626 = vmatprep.subr.mxu0 0.0
    %627 = vmatpush1.msra.mxu0 0.0
    %628 = vmatprep.subr.mxu0 0.0
    %629 = vmatpush1.msra.mxu0 0.0
    %630 = vmatprep.subr.mxu0 0.0
    %631 = vmatpush1.msra.mxu0 0.0
    %632 = vmatprep.subr.mxu0 0.0
    %633 = vmatpush1.msra.mxu0 0.0
    %634 = vmatprep.subr.mxu0 0.0
    %635 = vmatpush1.msra.mxu0 0.0
    %636 = vmatprep.subr.mxu0 0.0
    %637 = vmatpush1.msra.mxu0 0.0
    %638 = vmatprep.subr.mxu0 0.0
    %639 = vmatpush1.msra.mxu0 0.0
    %640 = vmatprep.subr.mxu0 0.0
    %641 = vmatpush1.msra.mxu0 0.0
    %642 = vmatprep.subr.mxu0 0.0
    %643 = vmatpush1.msra.mxu0 0.0
    %644 = vmatprep.subr.mxu0 0.0
    %645 = vmatpush1.msra.mxu0 0.0
    %646 = vmatprep.subr.mxu0 0.0
    %647 = vmatpush1.msra.mxu0 0.0
    %648 = vmatprep.subr.mxu0 0.0
    %649 = vmatpush1.msra.mxu0 0.0
    %650 = vmatprep.subr.mxu0 0.0
    %651 = vmatpush1.msra.mxu0 0.0
    %652 = vmatprep.subr.mxu0 0.0
    %653 = vmatpush1.msra.mxu0 0.0
    %654 = vmatprep.subr.mxu0 0.0
    %655 = vmatpush1.msra.mxu0 0.0
    %656 = vmatprep.subr.mxu0 0.0
    %657 = vmatpush1.msra.mxu0 0.0
    %658 = vmatprep.subr.mxu0 0.0
    %659 = vmatpush1.msra.mxu0 0.0
    %660 = vmatprep.subr.mxu0 0.0
    %661 = vmatpush1.msra.mxu0 0.0
    %662 = vmatprep.subr.mxu0 0.0
    %663 = vmatpush1.msra.mxu0 0.0
    %664 = vmatprep.subr.mxu0 0.0
    %665 = vmatpush1.msra.mxu0 0.0
    %666 = vmatprep.subr.mxu0 0.0
    %667 = vmatpush1.msra.mxu0 0.0
    %668 = vmatprep.subr.mxu0 0.0
    %669 = vmatpush1.msra.mxu0 0.0
    %670 = vmatprep.subr.mxu0 0.0
    %671 = vmatpush1.msra.mxu0 0.0
    %672 = vmatprep.subr.mxu0 0.0
    %673 = vmatpush1.msra.mxu0 0.0
    %674 = vmatprep.subr.mxu0 0.0
    %675 = vmatpush1.msra.mxu0 0.0
    %676 = vmatprep.subr.mxu0 0.0
    %677 = vmatpush1.msra.mxu0 0.0
    %678 = vmatprep.subr.mxu0 0.0
    %679 = vmatpush1.msra.mxu0 0.0
    %680 = vmatprep.subr.mxu0 0.0
    %681 = vmatpush1.msra.mxu0 0.0
    %682 = vmatprep.mubr.f32.mxu0 0.0
    %683 = vmatmul.mubr.f32.gmra.mrb[0].mxu0 %v609
    %v684 = vpop.f32.mrb[0].mxu0
    %v685 = vadd.f32 %v605, %v684
    %v686 = vpop.f32.mrb[0].mxu0
    %687 = vmatprep.mubr.f32.mxu0 0.0
    %688 = vmatmul.mubr.f32.gmra.mrb[0].mxu0 %v612
    %v689 = vpop.f32.mrb[0].mxu0
    %v690 = vadd.f32 %v605, %v689
    %v691 = vpop.f32.mrb[0].mxu0
    %692 = vdwg.mxu0
    %693 = vst.msk [vmem:[#allocation2] sm:$0xff] %vm607, %v685
    %694 = vst.msk [vmem:[#allocation2 + $0x8] sm:$0xff] %vm607, %v690
    // Predicated region
    $region30: #{linmod_forward.3} parent=1 // pred_check
      _
    $region31: #{linmod_forward.3} parent=1 // pred_check_branch
      %696 = sbr.rel (0) target = $region33
    $region32: #{linmod_forward.3} parent=1 // pred_region
      %s698 = ssub.s32 256, 256
      %699 = vsyncadd [#allocation3], %s698
      %s700 = sshll.u32 [#allocation2], 4
      %s701 = int_to_ptr.vmem [resolvable:$true] %s700
      %706 = dma.vmem_to_hbm [thread:$0]  %s701, 256, %s7, [#allocation3], 128, 128, 8
    $region33: #{linmod_forward.3} parent=1 // pred_fallthru
      _
    // Predicated region
    $region34: #{linmod_forward.3} parent=1 // pred_check
      _
    $region35: #{linmod_forward.3} parent=1 // pred_check_branch
      %708 = sbr.rel (0) target = $region37
    $region36: #{linmod_forward.3} parent=1 // pred_region
      %709 = dma.done [#allocation3], 256
    $region37: #{linmod_forward.3} parent=1 // pred_fallthru
      _
    %710 = vsyncpa [#allocation3], 1

// kernel: linmod_forward.2
$region0: #{linmod_forward.2}
  #allocation0 [shape = 'u32[]', space=smem, size = 0x4, offset = 0x4, fixed_abs, tag = 'smem constant byte address 0x4 - core index']
  #allocation1 [shape = 'u32[144,128]{1,0:T(1,128)}', space=vmem, size = 0x12000, scoped, tag = 'internal scratch']
  #allocation2 [shape = 'f32[16,512]{1,0:T(8,128)}', space=vmem, size = 0x8000, scoped, tag = 'scratch operand']
  %s0 = inlined_call_operand.vmem [shape: bf16[16,12288], index: 0, kind: input, shape index: {}]
  %s1 = inlined_call_operand.hbm [shape: s8[12288,1024], index: 1, kind: input, shape index: {}]
  %s2 = inlined_call_operand.hbm [shape: f32[1,1024], index: 2, kind: input, shape index: {}]
  %s3 = inlined_call_operand.hbm [shape: f32[1,1024], index: 3, kind: input, shape index: {}]
  %s4 = inlined_call_operand.vmem [shape: f32[16,1024], index: 4, kind: output, shape index: {}]
  %s5 = sld [smem:[#allocation0]]
  $region111: #{linmod_forward.2} parent=0
    _
  %s7 = ssub.s32 1, %s5
  %s8 = scalar_select 0, %s7, %s5
  $region1: #{linmod_forward.2} parent=0
    #allocation3 [shape = 'u8[196608]{0}', space=vmem, size = 0x30000, scoped, tag = 'input window, operand 0']
    #allocation4 [shape = 'u8[3145728]{0}', space=vmem, size = 0x300000, scoped, tag = 'input window, operand 1']
    #allocation5 [shape = 's32[2]{0}', space=sflag, size = 0x8, scoped, tag = 'scoped memory for linmod_forward.2']
    #allocation6 [shape = 'u8[4096]{0}', space=vmem, size = 0x1000, scoped, tag = 'input window, operand 2']
    #allocation7 [shape = 's32[2]{0}', space=sflag, size = 0x8, scoped, tag = 'scoped memory for linmod_forward.2']
    #allocation8 [shape = 'u8[4096]{0}', space=vmem, size = 0x1000, scoped, tag = 'input window, operand 3']
    #allocation9 [shape = 'u8[65536]{0}', space=vmem, size = 0x10000, scoped, tag = 'output window, operand 0']
    %9 = vsyncpa [#allocation5], 0
    %s10 = scalar_lea.sflag [#allocation5], 1
    %11 = vsyncpa %s10, 0
    %12 = vsyncpa [#allocation7], 0
    %s13 = scalar_lea.sflag [#allocation7], 1
    %14 = vsyncpa %s13, 0
    loop: start=0, step=1, limit=10
    $region2: #{linmod_forward.2} parent=1 // loop_pre_header
      _
    $region3: #{linmod_forward.2} parent=1 // loop_header
      %s16 = sphi 0, %s20
      %p17 = scmp.ge.s32.totalorder %s16, 10
      %s23 = sphi 0, %s35
      %s24 = sphi 0, %s31
      %s25 = sphi 0, %s23
      %s26 = sphi 0, %s24
      %s27 = sphi 0, %s25
      %s28 = sphi 0, %s26
      %s38 = sphi 0, %s40
      %s41 = sphi 0, %s38
      %s42 = sphi 0, %s41
      %s58 = sphi 0, %s42
      %s66 = sphi 0, %s68
      %s69 = sphi 0, %s66
      %s70 = sphi 0, %s69
      %s86 = sphi 0, %s70
      %s92 = sphi 0, %s94
      %s95 = sphi 0, %s92
      %s96 = sphi 0, %s95
      %s112 = sphi 0, %s96
      %s118 = sphi 0, %s120
      %s121 = sphi 0, %s118
      %s122 = sphi 0, %s121
      %s138 = sphi 0, %s122
      %s144 = sphi 0, %s146
      %s147 = sphi 0, %s144
      %s148 = sphi 0, %s147
      %s164 = sphi 0, %s148
    $region4: #{linmod_forward.2} parent=1 // loop_header_branch
      %19 = sbr.rel (%p17) target = $region8
    $region5: #{linmod_forward.2} parent=1 // loop_body
      %s21 = ssub.s32 %s16, 1
      %s22 = ssub.s32 %s16, 2
      %s29 = sadd.s32 1, %s24
      %p30 = scmp.ge.s32.totalorder %s29, 4
      %s31 = scalar_select %p30, 0, %s29
      %s32 = sadd.s32 1, %s23
      %s33 = scalar_select %p30, %s32, %s23
      %p34 = scmp.ge.s32.totalorder %s33, 2
      %s35 = scalar_select %p34, 0, %s33
      %s36 = ssub.s32 %s24, %s31
      %p37 = scmp.eq.s32.totalorder %s36, 0
      %s39 = sadd.s32 %s38, 1
      %s40 = scalar_select %p37, %s38, %s39
      %p43 = pneg %p37
      %p44 = scmp.eq.s32.totalorder %s16, 7
      %p45 = por %p43, %p44
      %p46 = scmp.ne.s32.totalorder %s38, %s41
      %p47 = scmp.eq.s32.totalorder %s16, 0
      %p48 = por %p46, %p47
      %p49 = scmp.ne.s32.totalorder %s38, %s41
      %p50 = scmp.eq.s32.totalorder %s21, 7
      %p51 = por %p49, %p50
      %p52 = scmp.ne.s32.totalorder %s41, %s42
      %p53 = scmp.eq.s32.totalorder %s21, 0
      %p54 = por %p52, %p53
      %p55 = scmp.ne.s32.totalorder %s41, %s42
      %p56 = scmp.eq.s32.totalorder %s22, 7
      %p57 = por %p55, %p56
      %p59 = scmp.ne.s32.totalorder %s42, %s58
      %p60 = scmp.eq.s32.totalorder %s22, 0
      %p61 = por %p59, %p60
      %s62 = ssub.s32 %s24, %s31
      %s63 = ssub.s32 %s23, %s35
      %s64 = sor.u32 %s62, %s63
      %p65 = scmp.eq.s32.totalorder %s64, 0
      %s67 = sadd.s32 %s66, 1
      %s68 = scalar_select %p65, %s66, %s67
      %p71 = pneg %p65
      %p72 = scmp.eq.s32.totalorder %s16, 7
      %p73 = por %p71, %p72
      %p74 = scmp.ne.s32.totalorder %s66, %s69
      %p75 = scmp.eq.s32.totalorder %s16, 0
      %p76 = por %p74, %p75
      %p77 = scmp.ne.s32.totalorder %s66, %s69
      %p78 = scmp.eq.s32.totalorder %s21, 7
      %p79 = por %p77, %p78
      %p80 = scmp.ne.s32.totalorder %s69, %s70
      %p81 = scmp.eq.s32.totalorder %s21, 0
      %p82 = por %p80, %p81
      %p83 = scmp.ne.s32.totalorder %s69, %s70
      %p84 = scmp.eq.s32.totalorder %s22, 7
      %p85 = por %p83, %p84
      %p87 = scmp.ne.s32.totalorder %s70, %s86
      %p88 = scmp.eq.s32.totalorder %s22, 0
      %p89 = por %p87, %p88
      %s90 = ssub.s32 %s23, %s35
      %p91 = scmp.eq.s32.totalorder %s90, 0
      %s93 = sadd.s32 %s92, 1
      %s94 = scalar_select %p91, %s92, %s93
      %p97 = pneg %p91
      %p98 = scmp.eq.s32.totalorder %s16, 7
      %p99 = por %p97, %p98
      %p100 = scmp.ne.s32.totalorder %s92, %s95
      %p101 = scmp.eq.s32.totalorder %s16, 0
      %p102 = por %p100, %p101
      %p103 = scmp.ne.s32.totalorder %s92, %s95
      %p104 = scmp.eq.s32.totalorder %s21, 7
      %p105 = por %p103, %p104
      %p106 = scmp.ne.s32.totalorder %s95, %s96
      %p107 = scmp.eq.s32.totalorder %s21, 0
      %p108 = por %p106, %p107
      %p109 = scmp.ne.s32.totalorder %s95, %s96
      %p110 = scmp.eq.s32.totalorder %s22, 7
      %p111 = por %p109, %p110
      %p113 = scmp.ne.s32.totalorder %s96, %s112
      %p114 = scmp.eq.s32.totalorder %s22, 0
      %p115 = por %p113, %p114
      %s116 = ssub.s32 %s23, %s35
      %p117 = scmp.eq.s32.totalorder %s116, 0
      %s119 = sadd.s32 %s118, 1
      %s120 = scalar_select %p117, %s118, %s119
      %p123 = pneg %p117
      %p124 = scmp.eq.s32.totalorder %s16, 7
      %p125 = por %p123, %p124
      %p126 = scmp.ne.s32.totalorder %s118, %s121
      %p127 = scmp.eq.s32.totalorder %s16, 0
      %p128 = por %p126, %p127
      %p129 = scmp.ne.s32.totalorder %s118, %s121
      %p130 = scmp.eq.s32.totalorder %s21, 7
      %p131 = por %p129, %p130
      %p132 = scmp.ne.s32.totalorder %s121, %s122
      %p133 = scmp.eq.s32.totalorder %s21, 0
      %p134 = por %p132, %p133
      %p135 = scmp.ne.s32.totalorder %s121, %s122
      %p136 = scmp.eq.s32.totalorder %s22, 7
      %p137 = por %p135, %p136
      %p139 = scmp.ne.s32.totalorder %s122, %s138
      %p140 = scmp.eq.s32.totalorder %s22, 0
      %p141 = por %p139, %p140
      %s142 = ssub.s32 %s23, %s35
      %p143 = scmp.eq.s32.totalorder %s142, 0
      %s145 = sadd.s32 %s144, 1
      %s146 = scalar_select %p143, %s144, %s145
      %p149 = pneg %p143
      %p150 = scmp.eq.s32.totalorder %s16, 7
      %p151 = por %p149, %p150
      %p152 = scmp.ne.s32.totalorder %s144, %s147
      %p153 = scmp.eq.s32.totalorder %s16, 0
      %p154 = por %p152, %p153
      %p155 = scmp.ne.s32.totalorder %s144, %s147
      %p156 = scmp.eq.s32.totalorder %s21, 7
      %p157 = por %p155, %p156
      %p158 = scmp.ne.s32.totalorder %s147, %s148
      %p159 = scmp.eq.s32.totalorder %s21, 0
      %p160 = por %p158, %p159
      %p161 = scmp.ne.s32.totalorder %s147, %s148
      %p162 = scmp.eq.s32.totalorder %s22, 7
      %p163 = por %p161, %p162
      %p165 = scmp.ne.s32.totalorder %s148, %s164
      %p166 = scmp.eq.s32.totalorder %s22, 0
      %p167 = por %p165, %p166
      %p168 = scmp.le.s32.totalorder 1, %s16
      %p169 = scmp.lt.s32.totalorder %s16, 9
      %p170 = pnand %p168, %p169
      %p171 = pneg %p170
      // Predicated region
      $region9: #{linmod_forward.2} parent=5 // pred_check
        _
      $region10: #{linmod_forward.2} parent=5 // pred_check_branch
        %173 = sbr.rel (%p170) target = $region12
      $region11: #{linmod_forward.2} parent=5 // pred_region
        %s174 = ssub.s32 %s16, 1
      $region12: #{linmod_forward.2} parent=5 // pred_fallthru
        _
      %p175 = scmp.lt.s32.totalorder %s16, 8
      // Predicated region
      $region13: #{linmod_forward.2} parent=5 // pred_check
        %p176 = pneg %p175
      $region14: #{linmod_forward.2} parent=5 // pred_check_branch
        %178 = sbr.rel (%p176) target = $region16
      $region15: #{linmod_forward.2} parent=5 // pred_region
        // Predicated region
        $region17: #{linmod_forward.2} parent=15 // pred_check
          %p179 = pneg %p48
        $region18: #{linmod_forward.2} parent=15 // pred_check_branch
          %181 = sbr.rel (%p179) target = $region20
        $region19: #{linmod_forward.2} parent=15 // pred_region
          %s182 = sand.u32 %s38, 1
          %s183 = sand.u32 %s38, 1
          %s184 = smul.addr %s183, 192
          %s185 = scalar_lea.vmem [#allocation3], %s184
          %s186 = smul.u32 24, %s24
          %s187 = smul.addr %s186, 4
          %s188 = scalar_lea.vmem %s0, %s187
          // Predicated region
          $region21: #{linmod_forward.2} parent=19 // pred_check
            _
          $region22: #{linmod_forward.2} parent=19 // pred_check_branch
            %190 = sbr.rel (0) target = $region24
          $region23: #{linmod_forward.2} parent=19 // pred_region
            // Predicated region
            $region25: #{linmod_forward.2} parent=23 // pred_check
              _
            $region26: #{linmod_forward.2} parent=23 // pred_check_branch
              %192 = sbr.rel (0) target = $region28
            $region27: #{linmod_forward.2} parent=23 // pred_region
              loop: start=0, step=1, limit=1
              $region29: #{linmod_forward.2} parent=27 // loop_pre_header
                _
              $region30: #{linmod_forward.2} parent=27 // loop_header
                %s194 = sphi 0, %s198
                %p195 = scmp.ge.s32.totalorder %s194, 1
                %s199 = sphi %s188, %s188
                %s200 = sphi %s185, %s185
              $region31: #{linmod_forward.2} parent=27 // loop_header_branch
                %197 = sbr.rel (%p195) target = $region35
              $region32: #{linmod_forward.2} parent=27 // loop_body
                %v201 = vld [vmem:[%s199] sm:$0xff]
                %202 = vst [vmem:[%s200] sm:$0xff] %v201
                %v203 = vld [vmem:[%s199 + $0x8] sm:$0xff]
                %204 = vst [vmem:[%s200 + $0x8] sm:$0xff] %v203
                %v205 = vld [vmem:[%s199 + $0x10] sm:$0xff]
                %206 = vst [vmem:[%s200 + $0x10] sm:$0xff] %v205
                %v207 = vld [vmem:[%s199 + $0x18] sm:$0xff]
                %208 = vst [vmem:[%s200 + $0x18] sm:$0xff] %v207
                %v209 = vld [vmem:[%s199 + $0x20] sm:$0xff]
                %210 = vst [vmem:[%s200 + $0x20] sm:$0xff] %v209
                %v211 = vld [vmem:[%s199 + $0x28] sm:$0xff]
                %212 = vst [vmem:[%s200 + $0x28] sm:$0xff] %v211
                %v213 = vld [vmem:[%s199 + $0x30] sm:$0xff]
                %214 = vst [vmem:[%s200 + $0x30] sm:$0xff] %v213
                %v215 = vld [vmem:[%s199 + $0x38] sm:$0xff]
                %216 = vst [vmem:[%s200 + $0x38] sm:$0xff] %v215
                %v217 = vld [vmem:[%s199 + $0x40] sm:$0xff]
                %218 = vst [vmem:[%s200 + $0x40] sm:$0xff] %v217
                %v219 = vld [vmem:[%s199 + $0x48] sm:$0xff]
                %220 = vst [vmem:[%s200 + $0x48] sm:$0xff] %v219
                %v221 = vld [vmem:[%s199 + $0x50] sm:$0xff]
                %222 = vst [vmem:[%s200 + $0x50] sm:$0xff] %v221
                %v223 = vld [vmem:[%s199 + $0x58] sm:$0xff]
                %224 = vst [vmem:[%s200 + $0x58] sm:$0xff] %v223
                %v225 = vld [vmem:[%s199 + $0x180] sm:$0xff]
                %226 = vst [vmem:[%s200 + $0x60] sm:$0xff] %v225
                %v227 = vld [vmem:[%s199 + $0x188] sm:$0xff]
                %228 = vst [vmem:[%s200 + $0x68] sm:$0xff] %v227
                %v229 = vld [vmem:[%s199 + $0x190] sm:$0xff]
                %230 = vst [vmem:[%s200 + $0x70] sm:$0xff] %v229
                %v231 = vld [vmem:[%s199 + $0x198] sm:$0xff]
                %232 = vst [vmem:[%s200 + $0x78] sm:$0xff] %v231
                %v233 = vld [vmem:[%s199 + $0x1a0] sm:$0xff]
                %234 = vst [vmem:[%s200 + $0x80] sm:$0xff] %v233
                %v235 = vld [vmem:[%s199 + $0x1a8] sm:$0xff]
                %236 = vst [vmem:[%s200 + $0x88] sm:$0xff] %v235
                %v237 = vld [vmem:[%s199 + $0x1b0] sm:$0xff]
                %238 = vst [vmem:[%s200 + $0x90] sm:$0xff] %v237
                %v239 = vld [vmem:[%s199 + $0x1b8] sm:$0xff]
                %240 = vst [vmem:[%s200 + $0x98] sm:$0xff] %v239
                %v241 = vld [vmem:[%s199 + $0x1c0] sm:$0xff]
                %242 = vst [vmem:[%s200 + $0xa0] sm:$0xff] %v241
                %v243 = vld [vmem:[%s199 + $0x1c8] sm:$0xff]
                %244 = vst [vmem:[%s200 + $0xa8] sm:$0xff] %v243
                %v245 = vld [vmem:[%s199 + $0x1d0] sm:$0xff]
                %246 = vst [vmem:[%s200 + $0xb0] sm:$0xff] %v245
                %v247 = vld [vmem:[%s199 + $0x1d8] sm:$0xff]
                %248 = vst [vmem:[%s200 + $0xb8] sm:$0xff] %v247
              $region33: #{linmod_forward.2} parent=27 // loop_footer
                %s198 = sadd.s32 1, %s194
              $region34: #{linmod_forward.2} parent=27 // loop_footer_branch
                %193 = sbr.rel target = $region30
              $region35: #{linmod_forward.2} parent=27 // loop_exit
                _
            $region28: #{linmod_forward.2} parent=23 // pred_fallthru
              _
            // Predicated region
            $region36: #{linmod_forward.2} parent=23 // pred_check
              _
            $region37: #{linmod_forward.2} parent=23 // pred_check_branch
              %250 = sbr.rel target = $region39
            $region38: #{linmod_forward.2} parent=23 // pred_region
              _
            $region39: #{linmod_forward.2} parent=23 // pred_fallthru
              _
          $region24: #{linmod_forward.2} parent=19 // pred_fallthru
            _
          %251 = vnop
        $region20: #{linmod_forward.2} parent=15 // pred_fallthru
          _
        // Predicated region
        $region40: #{linmod_forward.2} parent=15 // pred_check
          %p252 = pneg %p76
        $region41: #{linmod_forward.2} parent=15 // pred_check_branch
          %254 = sbr.rel (%p252) target = $region43
        $region42: #{linmod_forward.2} parent=15 // pred_region
          %s255 = sand.u32 %s66, 1
          %s256 = scalar_lea.sflag [#allocation5], %s255
          %s257 = sand.u32 %s66, 1
          %s258 = smul.addr %s257, 3072
          %s259 = scalar_lea.vmem [#allocation4], %s258
          %s260 = smul.u32 96, %s24
          %s261 = smul.u32 4, %s23
          %s263 = ssub.s32 49152, 49152
          %264 = vsyncadd %s256, %s263
          %s265 = smul.addr %s260, 8
          %s266 = sadd.s32 %s261, %s265
          %s267 = smul.addr %s266, 128
          %s268 = scalar_lea.hbm %s1, %s267
          %s269 = sshll.u32 %s259, 4
          %s270 = int_to_ptr.vmem [resolvable:$true] %s269
          %275 = dma.hbm_to_vmem [thread:$0]  %s268, 49152, %s270, %s256, 1024, 512, 32
        $region43: #{linmod_forward.2} parent=15 // pred_fallthru
          _
        // Predicated region
        $region44: #{linmod_forward.2} parent=15 // pred_check
          %p276 = pneg %p102
        $region45: #{linmod_forward.2} parent=15 // pred_check_branch
          %278 = sbr.rel (%p276) target = $region47
        $region46: #{linmod_forward.2} parent=15 // pred_region
          %s279 = sand.u32 %s16, 1
          %s280 = scalar_lea.sflag [#allocation7], %s279
          %s281 = sand.u32 %s92, 1
          %s282 = smul.addr %s281, 4
          %s283 = scalar_lea.vmem [#allocation6], %s282
          %s284 = smul.u32 4, %s23
          %s286 = ssub.s32 64, 64
          %287 = vsyncadd %s280, %s286
          %s288 = smul.addr %s284, 16
          %s289 = scalar_lea.hbm %s2, %s288
          %s291 = sshll.u32 %s283, 4
          %s292 = int_to_ptr.vmem [resolvable:$true] %s291
          %294 = dma.hbm_to_vmem [thread:$0]  %s289, 64, %s292, %s280
        $region47: #{linmod_forward.2} parent=15 // pred_fallthru
          _
        // Predicated region
        $region48: #{linmod_forward.2} parent=15 // pred_check
          %p295 = pneg %p128
        $region49: #{linmod_forward.2} parent=15 // pred_check_branch
          %297 = sbr.rel (%p295) target = $region51
        $region50: #{linmod_forward.2} parent=15 // pred_region
          %s298 = sand.u32 %s16, 1
          %s299 = scalar_lea.sflag [#allocation7], %s298
          %s300 = sand.u32 %s118, 1
          %s301 = smul.addr %s300, 4
          %s302 = scalar_lea.vmem [#allocation8], %s301
          %s303 = smul.u32 4, %s23
          %s305 = ssub.s32 64, 64
          %306 = vsyncadd %s299, %s305
          %s307 = smul.addr %s303, 16
          %s308 = scalar_lea.hbm %s3, %s307
          %s310 = sshll.u32 %s302, 4
          %s311 = int_to_ptr.vmem [resolvable:$true] %s310
          %313 = dma.hbm_to_vmem [thread:$0]  %s308, 64, %s311, %s299
        $region51: #{linmod_forward.2} parent=15 // pred_fallthru
          _
      $region16: #{linmod_forward.2} parent=5 // pred_fallthru
        _
      %p314 = scmp.le.s32.totalorder 1, %s16
      %p315 = scmp.lt.s32.totalorder %s16, 9
      %p316 = pnand %p314, %p315
      %p317 = pneg %p316
      // Predicated region
      $region52: #{linmod_forward.2} parent=5 // pred_check
        _
      $region53: #{linmod_forward.2} parent=5 // pred_check_branch
        %319 = sbr.rel (%p316) target = $region55
      $region54: #{linmod_forward.2} parent=5 // pred_region
        %s320 = ssub.s32 %s16, 1
        %s321 = sand.u32 %s41, 1
        %s322 = sand.u32 %s41, 1
        %s323 = smul.addr %s322, 192
        %s324 = scalar_lea.vmem [#allocation3], %s323
        // Predicated region
        $region56: #{linmod_forward.2} parent=54 // pred_check
          %p325 = pneg %p54
        $region57: #{linmod_forward.2} parent=54 // pred_check_branch
          %327 = sbr.rel (%p325) target = $region59
        $region58: #{linmod_forward.2} parent=54 // pred_region
          _
        $region59: #{linmod_forward.2} parent=54 // pred_fallthru
          _
        %s328 = sand.u32 %s69, 1
        %s329 = scalar_lea.sflag [#allocation5], %s328
        %s330 = sand.u32 %s69, 1
        %s331 = smul.addr %s330, 3072
        %s332 = scalar_lea.vmem [#allocation4], %s331
        // Predicated region
        $region60: #{linmod_forward.2} parent=54 // pred_check
          %p333 = pneg %p82
        $region61: #{linmod_forward.2} parent=54 // pred_check_branch
          %335 = sbr.rel (%p333) target = $region63
        $region62: #{linmod_forward.2} parent=54 // pred_region
          %336 = dma.done %s329, 49152
        $region63: #{linmod_forward.2} parent=54 // pred_fallthru
          _
        %s337 = sand.u32 %s21, 1
        %s338 = scalar_lea.sflag [#allocation7], %s337
        %s339 = sand.u32 %s95, 1
        %s340 = smul.addr %s339, 4
        %s341 = scalar_lea.vmem [#allocation6], %s340
        // Predicated region
        $region64: #{linmod_forward.2} parent=54 // pred_check
          %p342 = pneg %p108
        $region65: #{linmod_forward.2} parent=54 // pred_check_branch
          %344 = sbr.rel (%p342) target = $region67
        $region66: #{linmod_forward.2} parent=54 // pred_region
          %345 = dma.done %s338, 64
        $region67: #{linmod_forward.2} parent=54 // pred_fallthru
          _
        %s346 = sand.u32 %s21, 1
        %s347 = scalar_lea.sflag [#allocation7], %s346
        %s348 = sand.u32 %s121, 1
        %s349 = smul.addr %s348, 4
        %s350 = scalar_lea.vmem [#allocation8], %s349
        // Predicated region
        $region68: #{linmod_forward.2} parent=54 // pred_check
          %p351 = pneg %p134
        $region69: #{linmod_forward.2} parent=54 // pred_check_branch
          %353 = sbr.rel (%p351) target = $region71
        $region70: #{linmod_forward.2} parent=54 // pred_region
          %354 = dma.done %s347, 64
        $region71: #{linmod_forward.2} parent=54 // pred_fallthru
          _
        %s355 = sand.u32 %s41, 1
        %s356 = sand.u32 %s41, 1
        %s357 = smul.addr %s356, 192
        %s358 = scalar_lea.vmem [#allocation3], %s357
        %p359 = pneg %p54
        %p360 = pneg %p51
        %s361 = sand.u32 %s69, 1
        %s362 = scalar_lea.sflag [#allocation5], %s361
        %s363 = sand.u32 %s69, 1
        %s364 = smul.addr %s363, 3072
        %s365 = scalar_lea.vmem [#allocation4], %s364
        %p366 = pneg %p82
        %p367 = pneg %p79
        %s368 = sand.u32 %s21, 1
        %s369 = scalar_lea.sflag [#allocation7], %s368
        %s370 = sand.u32 %s95, 1
        %s371 = smul.addr %s370, 4
        %s372 = scalar_lea.vmem [#allocation6], %s371
        %p373 = pneg %p108
        %p374 = pneg %p105
        %s375 = sand.u32 %s21, 1
        %s376 = scalar_lea.sflag [#allocation7], %s375
        %s377 = sand.u32 %s121, 1
        %s378 = smul.addr %s377, 4
        %s379 = scalar_lea.vmem [#allocation8], %s378
        %p380 = pneg %p134
        %p381 = pneg %p131
        %p382 = pneg %p160
        %p383 = pneg %p157
        %s384 = sand.u32 %s147, 1
        %s385 = sand.u32 %s147, 1
        %s386 = smul.addr %s385, 64
        %s387 = scalar_lea.vmem [#allocation9], %s386
        %s388 = smul.u32 24, %s26
        %s389 = smul.u32 96, %s26
        %s390 = smul.u32 4, %s25
        %s391 = smul.u32 4, %s25
        %s392 = smul.u32 4, %s25
        %s393 = smul.u32 4, %s25
        %p394 = scmp.eq.s32.totalorder %s26, 0
        // Predicated region
        $region72: #{linmod_forward.2} parent=54 // pred_check
          %p395 = pneg %p394
        $region73: #{linmod_forward.2} parent=54 // pred_check_branch
          %397 = sbr.rel (%p395) target = $region75
        $region74: #{linmod_forward.2} parent=54 // pred_region
          %398 = vst [vmem:[#allocation2] sm:$0xff] 0.0
          %399 = vst [vmem:[#allocation2 + $0x8] sm:$0xff] 0.0
          %400 = vst [vmem:[#allocation2 + $0x10] sm:$0xff] 0.0
          %401 = vst [vmem:[#allocation2 + $0x18] sm:$0xff] 0.0
          %402 = vst [vmem:[#allocation2 + $0x20] sm:$0xff] 0.0
          %403 = vst [vmem:[#allocation2 + $0x28] sm:$0xff] 0.0
          %404 = vst [vmem:[#allocation2 + $0x30] sm:$0xff] 0.0
          %405 = vst [vmem:[#allocation2 + $0x38] sm:$0xff] 0.0
        $region75: #{linmod_forward.2} parent=54 // pred_fallthru
          _
        %v406 = vld [vmem:[#allocation2] sm:$0xff]
        %v407 = vld [vmem:[#allocation2 + $0x8] sm:$0xff]
        %v408 = vld [vmem:[#allocation2 + $0x10] sm:$0xff]
        %v409 = vld [vmem:[#allocation2 + $0x18] sm:$0xff]
        %v410 = vld [vmem:[#allocation2 + $0x20] sm:$0xff]
        %v411 = vld [vmem:[#allocation2 + $0x28] sm:$0xff]
        %v412 = vld [vmem:[#allocation2 + $0x30] sm:$0xff]
        %v413 = vld [vmem:[#allocation2 + $0x38] sm:$0xff]
        %v414 = vld [vmem:[%s324] sm:$0xff]
        %v415 = vld [vmem:[%s324 + $0x8] sm:$0xff]
        %v416 = vld [vmem:[%s324 + $0x10] sm:$0xff]
        %v417 = vld [vmem:[%s324 + $0x18] sm:$0xff]
        %v418 = vld [vmem:[%s324 + $0x20] sm:$0xff]
        %v419 = vld [vmem:[%s324 + $0x28] sm:$0xff]
        %v420 = vld [vmem:[%s324 + $0x30] sm:$0xff]
        %v421 = vld [vmem:[%s324 + $0x38] sm:$0xff]
        %v422 = vld [vmem:[%s324 + $0x40] sm:$0xff]
        %v423 = vld [vmem:[%s324 + $0x48] sm:$0xff]
        %v424 = vld [vmem:[%s324 + $0x50] sm:$0xff]
        %v425 = vld [vmem:[%s324 + $0x58] sm:$0xff]
        %v426 = vld [vmem:[%s324 + $0x60] sm:$0xff]
        %v427 = vld [vmem:[%s324 + $0x68] sm:$0xff]
        %v428 = vld [vmem:[%s324 + $0x70] sm:$0xff]
        %v429 = vld [vmem:[%s324 + $0x78] sm:$0xff]
        %v430 = vld [vmem:[%s324 + $0x80] sm:$0xff]
        %v431 = vld [vmem:[%s324 + $0x88] sm:$0xff]
        %v432 = vld [vmem:[%s324 + $0x90] sm:$0xff]
        %v433 = vld [vmem:[%s324 + $0x98] sm:$0xff]
        %v434 = vld [vmem:[%s324 + $0xa0] sm:$0xff]
        %v435 = vld [vmem:[%s324 + $0xa8] sm:$0xff]
        %v436 = vld [vmem:[%s324 + $0xb0] sm:$0xff]
        %v437 = vld [vmem:[%s324 + $0xb8] sm:$0xff]
        %v438 = vld [vmem:[%s332] sm:$0xff]
        %v439 = vld [vmem:[%s332 + $0x8] sm:$0xff]
        %v440 = vld [vmem:[%s332 + $0x10] sm:$0xff]
        %v441 = vld [vmem:[%s332 + $0x18] sm:$0xff]
        %v442 = vld [vmem:[%s332 + $0x20] sm:$0xff]
        %v443 = vld [vmem:[%s332 + $0x28] sm:$0xff]
        %v444 = vld [vmem:[%s332 + $0x30] sm:$0xff]
        %v445 = vld [vmem:[%s332 + $0x38] sm:$0xff]
        %v446 = vld [vmem:[%s332 + $0x40] sm:$0xff]
        %v447 = vld [vmem:[%s332 + $0x48] sm:$0xff]
        %v448 = vld [vmem:[%s332 + $0x50] sm:$0xff]
        %v449 = vld [vmem:[%s332 + $0x58] sm:$0xff]
        %v450 = vld [vmem:[%s332 + $0x60] sm:$0xff]
        %v451 = vld [vmem:[%s332 + $0x68] sm:$0xff]
        %v452 = vld [vmem:[%s332 + $0x70] sm:$0xff]
        %v453 = vld [vmem:[%s332 + $0x78] sm:$0xff]
        %v454 = vld [vmem:[%s332 + $0x80] sm:$0xff]
        %v455 = vld [vmem:[%s332 + $0x88] sm:$0xff]
        %v456 = vld [vmem:[%s332 + $0x90] sm:$0xff]
        %v457 = vld [vmem:[%s332 + $0x98] sm:$0xff]
        %v458 = vld [vmem:[%s332 + $0xa0] sm:$0xff]
        %v459 = vld [vmem:[%s332 + $0xa8] sm:$0xff]
        %v460 = vld [vmem:[%s332 + $0xb0] sm:$0xff]
        %v461 = vld [vmem:[%s332 + $0xb8] sm:$0xff]
        %v462 = vld [vmem:[%s332 + $0xc0] sm:$0xff]
        %v463 = vld [vmem:[%s332 + $0xc8] sm:$0xff]
        %v464 = vld [vmem:[%s332 + $0xd0] sm:$0xff]
        %v465 = vld [vmem:[%s332 + $0xd8] sm:$0xff]
        %v466 = vld [vmem:[%s332 + $0xe0] sm:$0xff]
        %v467 = vld [vmem:[%s332 + $0xe8] sm:$0xff]
        %v468 = vld [vmem:[%s332 + $0xf0] sm:$0xff]
        %v469 = vld [vmem:[%s332 + $0xf8] sm:$0xff]
        %v470 = vld [vmem:[%s332 + $0x100] sm:$0xff]
        %v471 = vld [vmem:[%s332 + $0x108] sm:$0xff]
        %v472 = vld [vmem:[%s332 + $0x110] sm:$0xff]
        %v473 = vld [vmem:[%s332 + $0x118] sm:$0xff]
        %v474 = vld [vmem:[%s332 + $0x120] sm:$0xff]
        %v475 = vld [vmem:[%s332 + $0x128] sm:$0xff]
        %v476 = vld [vmem:[%s332 + $0x130] sm:$0xff]
        %v477 = vld [vmem:[%s332 + $0x138] sm:$0xff]
        %v478 = vld [vmem:[%s332 + $0x140] sm:$0xff]
        %v479 = vld [vmem:[%s332 + $0x148] sm:$0xff]
        %v480 = vld [vmem:[%s332 + $0x150] sm:$0xff]
        %v481 = vld [vmem:[%s332 + $0x158] sm:$0xff]
        %v482 = vld [vmem:[%s332 + $0x160] sm:$0xff]
        %v483 = vld [vmem:[%s332 + $0x168] sm:$0xff]
        %v484 = vld [vmem:[%s332 + $0x170] sm:$0xff]
        %v485 = vld [vmem:[%s332 + $0x178] sm:$0xff]
        %v486 = vld [vmem:[%s332 + $0x180] sm:$0xff]
        %v487 = vld [vmem:[%s332 + $0x188] sm:$0xff]
        %v488 = vld [vmem:[%s332 + $0x190] sm:$0xff]
        %v489 = vld [vmem:[%s332 + $0x198] sm:$0xff]
        %v490 = vld [vmem:[%s332 + $0x1a0] sm:$0xff]
        %v491 = vld [vmem:[%s332 + $0x1a8] sm:$0xff]
        %v492 = vld [vmem:[%s332 + $0x1b0] sm:$0xff]
        %v493 = vld [vmem:[%s332 + $0x1b8] sm:$0xff]
        %v494 = vld [vmem:[%s332 + $0x1c0] sm:$0xff]
        %v495 = vld [vmem:[%s332 + $0x1c8] sm:$0xff]
        %v496 = vld [vmem:[%s332 + $0x1d0] sm:$0xff]
        %v497 = vld [vmem:[%s332 + $0x1d8] sm:$0xff]
        %v498 = vld [vmem:[%s332 + $0x1e0] sm:$0xff]
        %v499 = vld [vmem:[%s332 + $0x1e8] sm:$0xff]
        %v500 = vld [vmem:[%s332 + $0x1f0] sm:$0xff]
        %v501 = vld [vmem:[%s332 + $0x1f8] sm:$0xff]
        %v502 = vld [vmem:[%s332 + $0x200] sm:$0xff]
        %v503 = vld [vmem:[%s332 + $0x208] sm:$0xff]
        %v504 = vld [vmem:[%s332 + $0x210] sm:$0xff]
        %v505 = vld [vmem:[%s332 + $0x218] sm:$0xff]
        %v506 = vld [vmem:[%s332 + $0x220] sm:$0xff]
        %v507 = vld [vmem:[%s332 + $0x228] sm:$0xff]
        %v508 = vld [vmem:[%s332 + $0x230] sm:$0xff]
        %v509 = vld [vmem:[%s332 + $0x238] sm:$0xff]
        %v510 = vld [vmem:[%s332 + $0x240] sm:$0xff]
        %v511 = vld [vmem:[%s332 + $0x248] sm:$0xff]
        %v512 = vld [vmem:[%s332 + $0x250] sm:$0xff]
        %v513 = vld [vmem:[%s332 + $0x258] sm:$0xff]
        %v514 = vld [vmem:[%s332 + $0x260] sm:$0xff]
        %v515 = vld [vmem:[%s332 + $0x268] sm:$0xff]
        %v516 = vld [vmem:[%s332 + $0x270] sm:$0xff]
        %v517 = vld [vmem:[%s332 + $0x278] sm:$0xff]
        %v518 = vld [vmem:[%s332 + $0x280] sm:$0xff]
        %v519 = vld [vmem:[%s332 + $0x288] sm:$0xff]
        %v520 = vld [vmem:[%s332 + $0x290] sm:$0xff]
        %v521 = vld [vmem:[%s332 + $0x298] sm:$0xff]
        %v522 = vld [vmem:[%s332 + $0x2a0] sm:$0xff]
        %v523 = vld [vmem:[%s332 + $0x2a8] sm:$0xff]
        %v524 = vld [vmem:[%s332 + $0x2b0] sm:$0xff]
        %v525 = vld [vmem:[%s332 + $0x2b8] sm:$0xff]
        %v526 = vld [vmem:[%s332 + $0x2c0] sm:$0xff]
        %v527 = vld [vmem:[%s332 + $0x2c8] sm:$0xff]
        %v528 = vld [vmem:[%s332 + $0x2d0] sm:$0xff]
        %v529 = vld [vmem:[%s332 + $0x2d8] sm:$0xff]
        %v530 = vld [vmem:[%s332 + $0x2e0] sm:$0xff]
        %v531 = vld [vmem:[%s332 + $0x2e8] sm:$0xff]
        %v532 = vld [vmem:[%s332 + $0x2f0] sm:$0xff]
        %v533 = vld [vmem:[%s332 + $0x2f8] sm:$0xff]
        %v534 = vld [vmem:[%s332 + $0x300] sm:$0xff]
        %v535 = vld [vmem:[%s332 + $0x308] sm:$0xff]
        %v536 = vld [vmem:[%s332 + $0x310] sm:$0xff]
        %v537 = vld [vmem:[%s332 + $0x318] sm:$0xff]
        %v538 = vld [vmem:[%s332 + $0x320] sm:$0xff]
        %v539 = vld [vmem:[%s332 + $0x328] sm:$0xff]
        %v540 = vld [vmem:[%s332 + $0x330] sm:$0xff]
        %v541 = vld [vmem:[%s332 + $0x338] sm:$0xff]
        %v542 = vld [vmem:[%s332 + $0x340] sm:$0xff]
        %v543 = vld [vmem:[%s332 + $0x348] sm:$0xff]
        %v544 = vld [vmem:[%s332 + $0x350] sm:$0xff]
        %v545 = vld [vmem:[%s332 + $0x358] sm:$0xff]
        %v546 = vld [vmem:[%s332 + $0x360] sm:$0xff]
        %v547 = vld [vmem:[%s332 + $0x368] sm:$0xff]
        %v548 = vld [vmem:[%s332 + $0x370] sm:$0xff]
        %v549 = vld [vmem:[%s332 + $0x378] sm:$0xff]
        %v550 = vld [vmem:[%s332 + $0x380] sm:$0xff]
        %v551 = vld [vmem:[%s332 + $0x388] sm:$0xff]
        %v552 = vld [vmem:[%s332 + $0x390] sm:$0xff]
        %v553 = vld [vmem:[%s332 + $0x398] sm:$0xff]
        %v554 = vld [vmem:[%s332 + $0x3a0] sm:$0xff]
        %v555 = vld [vmem:[%s332 + $0x3a8] sm:$0xff]
        %v556 = vld [vmem:[%s332 + $0x3b0] sm:$0xff]
        %v557 = vld [vmem:[%s332 + $0x3b8] sm:$0xff]
        %v558 = vld [vmem:[%s332 + $0x3c0] sm:$0xff]
        %v559 = vld [vmem:[%s332 + $0x3c8] sm:$0xff]
        %v560 = vld [vmem:[%s332 + $0x3d0] sm:$0xff]
        %v561 = vld [vmem:[%s332 + $0x3d8] sm:$0xff]
        %v562 = vld [vmem:[%s332 + $0x3e0] sm:$0xff]
        %v563 = vld [vmem:[%s332 + $0x3e8] sm:$0xff]
        %v564 = vld [vmem:[%s332 + $0x3f0] sm:$0xff]
        %v565 = vld [vmem:[%s332 + $0x3f8] sm:$0xff]
        %v566 = vld [vmem:[%s332 + $0x400] sm:$0xff]
        %v567 = vld [vmem:[%s332 + $0x408] sm:$0xff]
        %v568 = vld [vmem:[%s332 + $0x410] sm:$0xff]
        %v569 = vld [vmem:[%s332 + $0x418] sm:$0xff]
        %v570 = vld [vmem:[%s332 + $0x420] sm:$0xff]
        %v571 = vld [vmem:[%s332 + $0x428] sm:$0xff]
        %v572 = vld [vmem:[%s332 + $0x430] sm:$0xff]
        %v573 = vld [vmem:[%s332 + $0x438] sm:$0xff]
        %v574 = vld [vmem:[%s332 + $0x440] sm:$0xff]
        %v575 = vld [vmem:[%s332 + $0x448] sm:$0xff]
        %v576 = vld [vmem:[%s332 + $0x450] sm:$0xff]
        %v577 = vld [vmem:[%s332 + $0x458] sm:$0xff]
        %v578 = vld [vmem:[%s332 + $0x460] sm:$0xff]
        %v579 = vld [vmem:[%s332 + $0x468] sm:$0xff]
        %v580 = vld [vmem:[%s332 + $0x470] sm:$0xff]
        %v581 = vld [vmem:[%s332 + $0x478] sm:$0xff]
        %v582 = vld [vmem:[%s332 + $0x480] sm:$0xff]
        %v583 = vld [vmem:[%s332 + $0x488] sm:$0xff]
        %v584 = vld [vmem:[%s332 + $0x490] sm:$0xff]
        %v585 = vld [vmem:[%s332 + $0x498] sm:$0xff]
        %v586 = vld [vmem:[%s332 + $0x4a0] sm:$0xff]
        %v587 = vld [vmem:[%s332 + $0x4a8] sm:$0xff]
        %v588 = vld [vmem:[%s332 + $0x4b0] sm:$0xff]
        %v589 = vld [vmem:[%s332 + $0x4b8] sm:$0xff]
        %v590 = vld [vmem:[%s332 + $0x4c0] sm:$0xff]
        %v591 = vld [vmem:[%s332 + $0x4c8] sm:$0xff]
        %v592 = vld [vmem:[%s332 + $0x4d0] sm:$0xff]
        %v593 = vld [vmem:[%s332 + $0x4d8] sm:$0xff]
        %v594 = vld [vmem:[%s332 + $0x4e0] sm:$0xff]
        %v595 = vld [vmem:[%s332 + $0x4e8] sm:$0xff]
        %v596 = vld [vmem:[%s332 + $0x4f0] sm:$0xff]
        %v597 = vld [vmem:[%s332 + $0x4f8] sm:$0xff]
        %v598 = vld [vmem:[%s332 + $0x500] sm:$0xff]
        %v599 = vld [vmem:[%s332 + $0x508] sm:$0xff]
        %v600 = vld [vmem:[%s332 + $0x510] sm:$0xff]
        %v601 = vld [vmem:[%s332 + $0x518] sm:$0xff]
        %v602 = vld [vmem:[%s332 + $0x520] sm:$0xff]
        %v603 = vld [vmem:[%s332 + $0x528] sm:$0xff]
        %v604 = vld [vmem:[%s332 + $0x530] sm:$0xff]
        %v605 = vld [vmem:[%s332 + $0x538] sm:$0xff]
        %v606 = vld [vmem:[%s332 + $0x540] sm:$0xff]
        %v607 = vld [vmem:[%s332 + $0x548] sm:$0xff]
        %v608 = vld [vmem:[%s332 + $0x550] sm:$0xff]
        %v609 = vld [vmem:[%s332 + $0x558] sm:$0xff]
        %v610 = vld [vmem:[%s332 + $0x560] sm:$0xff]
        %v611 = vld [vmem:[%s332 + $0x568] sm:$0xff]
        %v612 = vld [vmem:[%s332 + $0x570] sm:$0xff]
        %v613 = vld [vmem:[%s332 + $0x578] sm:$0xff]
        %v614 = vld [vmem:[%s332 + $0x580] sm:$0xff]
        %v615 = vld [vmem:[%s332 + $0x588] sm:$0xff]
        %v616 = vld [vmem:[%s332 + $0x590] sm:$0xff]
        %v617 = vld [vmem:[%s332 + $0x598] sm:$0xff]
        %v618 = vld [vmem:[%s332 + $0x5a0] sm:$0xff]
        %v619 = vld [vmem:[%s332 + $0x5a8] sm:$0xff]
        %v620 = vld [vmem:[%s332 + $0x5b0] sm:$0xff]
        %v621 = vld [vmem:[%s332 + $0x5b8] sm:$0xff]
        %v622 = vld [vmem:[%s332 + $0x5c0] sm:$0xff]
        %v623 = vld [vmem:[%s332 + $0x5c8] sm:$0xff]
        %v624 = vld [vmem:[%s332 + $0x5d0] sm:$0xff]
        %v625 = vld [vmem:[%s332 + $0x5d8] sm:$0xff]
        %v626 = vld [vmem:[%s332 + $0x5e0] sm:$0xff]
        %v627 = vld [vmem:[%s332 + $0x5e8] sm:$0xff]
        %v628 = vld [vmem:[%s332 + $0x5f0] sm:$0xff]
        %v629 = vld [vmem:[%s332 + $0x5f8] sm:$0xff]
        %v630 = vld [vmem:[%s332 + $0x600] sm:$0xff]
        %v631 = vld [vmem:[%s332 + $0x608] sm:$0xff]
        %v632 = vld [vmem:[%s332 + $0x610] sm:$0xff]
        %v633 = vld [vmem:[%s332 + $0x618] sm:$0xff]
        %v634 = vld [vmem:[%s332 + $0x620] sm:$0xff]
        %v635 = vld [vmem:[%s332 + $0x628] sm:$0xff]
        %v636 = vld [vmem:[%s332 + $0x630] sm:$0xff]
        %v637 = vld [vmem:[%s332 + $0x638] sm:$0xff]
        %v638 = vld [vmem:[%s332 + $0x640] sm:$0xff]
        %v639 = vld [vmem:[%s332 + $0x648] sm:$0xff]
        %v640 = vld [vmem:[%s332 + $0x650] sm:$0xff]
        %v641 = vld [vmem:[%s332 + $0x658] sm:$0xff]
        %v642 = vld [vmem:[%s332 + $0x660] sm:$0xff]
        %v643 = vld [vmem:[%s332 + $0x668] sm:$0xff]
        %v644 = vld [vmem:[%s332 + $0x670] sm:$0xff]
        %v645 = vld [vmem:[%s332 + $0x678] sm:$0xff]
        %v646 = vld [vmem:[%s332 + $0x680] sm:$0xff]
        %v647 = vld [vmem:[%s332 + $0x688] sm:$0xff]
        %v648 = vld [vmem:[%s332 + $0x690] sm:$0xff]
        %v649 = vld [vmem:[%s332 + $0x698] sm:$0xff]
        %v650 = vld [vmem:[%s332 + $0x6a0] sm:$0xff]
        %v651 = vld [vmem:[%s332 + $0x6a8] sm:$0xff]
        %v652 = vld [vmem:[%s332 + $0x6b0] sm:$0xff]
        %v653 = vld [vmem:[%s332 + $0x6b8] sm:$0xff]
        %v654 = vld [vmem:[%s332 + $0x6c0] sm:$0xff]
        %v655 = vld [vmem:[%s332 + $0x6c8] sm:$0xff]
        %v656 = vld [vmem:[%s332 + $0x6d0] sm:$0xff]
        %v657 = vld [vmem:[%s332 + $0x6d8] sm:$0xff]
        %v658 = vld [vmem:[%s332 + $0x6e0] sm:$0xff]
        %v659 = vld [vmem:[%s332 + $0x6e8] sm:$0xff]
        %v660 = vld [vmem:[%s332 + $0x6f0] sm:$0xff]
        %v661 = vld [vmem:[%s332 + $0x6f8] sm:$0xff]
        %v662 = vld [vmem:[%s332 + $0x700] sm:$0xff]
        %v663 = vld [vmem:[%s332 + $0x708] sm:$0xff]
        %v664 = vld [vmem:[%s332 + $0x710] sm:$0xff]
        %v665 = vld [vmem:[%s332 + $0x718] sm:$0xff]
        %v666 = vld [vmem:[%s332 + $0x720] sm:$0xff]
        %v667 = vld [vmem:[%s332 + $0x728] sm:$0xff]
        %v668 = vld [vmem:[%s332 + $0x730] sm:$0xff]
        %v669 = vld [vmem:[%s332 + $0x738] sm:$0xff]
        %v670 = vld [vmem:[%s332 + $0x740] sm:$0xff]
        %v671 = vld [vmem:[%s332 + $0x748] sm:$0xff]
        %v672 = vld [vmem:[%s332 + $0x750] sm:$0xff]
        %v673 = vld [vmem:[%s332 + $0x758] sm:$0xff]
        %v674 = vld [vmem:[%s332 + $0x760] sm:$0xff]
        %v675 = vld [vmem:[%s332 + $0x768] sm:$0xff]
        %v676 = vld [vmem:[%s332 + $0x770] sm:$0xff]
        %v677 = vld [vmem:[%s332 + $0x778] sm:$0xff]
        %v678 = vld [vmem:[%s332 + $0x780] sm:$0xff]
        %v679 = vld [vmem:[%s332 + $0x788] sm:$0xff]
        %v680 = vld [vmem:[%s332 + $0x790] sm:$0xff]
        %v681 = vld [vmem:[%s332 + $0x798] sm:$0xff]
        %v682 = vld [vmem:[%s332 + $0x7a0] sm:$0xff]
        %v683 = vld [vmem:[%s332 + $0x7a8] sm:$0xff]
        %v684 = vld [vmem:[%s332 + $0x7b0] sm:$0xff]
        %v685 = vld [vmem:[%s332 + $0x7b8] sm:$0xff]
        %v686 = vld [vmem:[%s332 + $0x7c0] sm:$0xff]
        %v687 = vld [vmem:[%s332 + $0x7c8] sm:$0xff]
        %v688 = vld [vmem:[%s332 + $0x7d0] sm:$0xff]
        %v689 = vld [vmem:[%s332 + $0x7d8] sm:$0xff]
        %v690 = vld [vmem:[%s332 + $0x7e0] sm:$0xff]
        %v691 = vld [vmem:[%s332 + $0x7e8] sm:$0xff]
        %v692 = vld [vmem:[%s332 + $0x7f0] sm:$0xff]
        %v693 = vld [vmem:[%s332 + $0x7f8] sm:$0xff]
        %v694 = vld [vmem:[%s332 + $0x800] sm:$0xff]
        %v695 = vld [vmem:[%s332 + $0x808] sm:$0xff]
        %v696 = vld [vmem:[%s332 + $0x810] sm:$0xff]
        %v697 = vld [vmem:[%s332 + $0x818] sm:$0xff]
        %v698 = vld [vmem:[%s332 + $0x820] sm:$0xff]
        %v699 = vld [vmem:[%s332 + $0x828] sm:$0xff]
        %v700 = vld [vmem:[%s332 + $0x830] sm:$0xff]
        %v701 = vld [vmem:[%s332 + $0x838] sm:$0xff]
        %v702 = vld [vmem:[%s332 + $0x840] sm:$0xff]
        %v703 = vld [vmem:[%s332 + $0x848] sm:$0xff]
        %v704 = vld [vmem:[%s332 + $0x850] sm:$0xff]
        %v705 = vld [vmem:[%s332 + $0x858] sm:$0xff]
        %v706 = vld [vmem:[%s332 + $0x860] sm:$0xff]
        %v707 = vld [vmem:[%s332 + $0x868] sm:$0xff]
        %v708 = vld [vmem:[%s332 + $0x870] sm:$0xff]
        %v709 = vld [vmem:[%s332 + $0x878] sm:$0xff]
        %v710 = vld [vmem:[%s332 + $0x880] sm:$0xff]
        %v711 = vld [vmem:[%s332 + $0x888] sm:$0xff]
        %v712 = vld [vmem:[%s332 + $0x890] sm:$0xff]
        %v713 = vld [vmem:[%s332 + $0x898] sm:$0xff]
        %v714 = vld [vmem:[%s332 + $0x8a0] sm:$0xff]
        %v715 = vld [vmem:[%s332 + $0x8a8] sm:$0xff]
        %v716 = vld [vmem:[%s332 + $0x8b0] sm:$0xff]
        %v717 = vld [vmem:[%s332 + $0x8b8] sm:$0xff]
        %v718 = vld [vmem:[%s332 + $0x8c0] sm:$0xff]
        %v719 = vld [vmem:[%s332 + $0x8c8] sm:$0xff]
        %v720 = vld [vmem:[%s332 + $0x8d0] sm:$0xff]
        %v721 = vld [vmem:[%s332 + $0x8d8] sm:$0xff]
        %v722 = vld [vmem:[%s332 + $0x8e0] sm:$0xff]
        %v723 = vld [vmem:[%s332 + $0x8e8] sm:$0xff]
        %v724 = vld [vmem:[%s332 + $0x8f0] sm:$0xff]
        %v725 = vld [vmem:[%s332 + $0x8f8] sm:$0xff]
        %v726 = vld [vmem:[%s332 + $0x900] sm:$0xff]
        %v727 = vld [vmem:[%s332 + $0x908] sm:$0xff]
        %v728 = vld [vmem:[%s332 + $0x910] sm:$0xff]
        %v729 = vld [vmem:[%s332 + $0x918] sm:$0xff]
        %v730 = vld [vmem:[%s332 + $0x920] sm:$0xff]
        %v731 = vld [vmem:[%s332 + $0x928] sm:$0xff]
        %v732 = vld [vmem:[%s332 + $0x930] sm:$0xff]
        %v733 = vld [vmem:[%s332 + $0x938] sm:$0xff]
        %v734 = vld [vmem:[%s332 + $0x940] sm:$0xff]
        %v735 = vld [vmem:[%s332 + $0x948] sm:$0xff]
        %v736 = vld [vmem:[%s332 + $0x950] sm:$0xff]
        %v737 = vld [vmem:[%s332 + $0x958] sm:$0xff]
        %v738 = vld [vmem:[%s332 + $0x960] sm:$0xff]
        %v739 = vld [vmem:[%s332 + $0x968] sm:$0xff]
        %v740 = vld [vmem:[%s332 + $0x970] sm:$0xff]
        %v741 = vld [vmem:[%s332 + $0x978] sm:$0xff]
        %v742 = vld [vmem:[%s332 + $0x980] sm:$0xff]
        %v743 = vld [vmem:[%s332 + $0x988] sm:$0xff]
        %v744 = vld [vmem:[%s332 + $0x990] sm:$0xff]
        %v745 = vld [vmem:[%s332 + $0x998] sm:$0xff]
        %v746 = vld [vmem:[%s332 + $0x9a0] sm:$0xff]
        %v747 = vld [vmem:[%s332 + $0x9a8] sm:$0xff]
        %v748 = vld [vmem:[%s332 + $0x9b0] sm:$0xff]
        %v749 = vld [vmem:[%s332 + $0x9b8] sm:$0xff]
        %v750 = vld [vmem:[%s332 + $0x9c0] sm:$0xff]
        %v751 = vld [vmem:[%s332 + $0x9c8] sm:$0xff]
        %v752 = vld [vmem:[%s332 + $0x9d0] sm:$0xff]
        %v753 = vld [vmem:[%s332 + $0x9d8] sm:$0xff]
        %v754 = vld [vmem:[%s332 + $0x9e0] sm:$0xff]
        %v755 = vld [vmem:[%s332 + $0x9e8] sm:$0xff]
        %v756 = vld [vmem:[%s332 + $0x9f0] sm:$0xff]
        %v757 = vld [vmem:[%s332 + $0x9f8] sm:$0xff]
        %v758 = vld [vmem:[%s332 + $0xa00] sm:$0xff]
        %v759 = vld [vmem:[%s332 + $0xa08] sm:$0xff]
        %v760 = vld [vmem:[%s332 + $0xa10] sm:$0xff]
        %v761 = vld [vmem:[%s332 + $0xa18] sm:$0xff]
        %v762 = vld [vmem:[%s332 + $0xa20] sm:$0xff]
        %v763 = vld [vmem:[%s332 + $0xa28] sm:$0xff]
        %v764 = vld [vmem:[%s332 + $0xa30] sm:$0xff]
        %v765 = vld [vmem:[%s332 + $0xa38] sm:$0xff]
        %v766 = vld [vmem:[%s332 + $0xa40] sm:$0xff]
        %v767 = vld [vmem:[%s332 + $0xa48] sm:$0xff]
        %v768 = vld [vmem:[%s332 + $0xa50] sm:$0xff]
        %v769 = vld [vmem:[%s332 + $0xa58] sm:$0xff]
        %v770 = vld [vmem:[%s332 + $0xa60] sm:$0xff]
        %v771 = vld [vmem:[%s332 + $0xa68] sm:$0xff]
        %v772 = vld [vmem:[%s332 + $0xa70] sm:$0xff]
        %v773 = vld [vmem:[%s332 + $0xa78] sm:$0xff]
        %v774 = vld [vmem:[%s332 + $0xa80] sm:$0xff]
        %v775 = vld [vmem:[%s332 + $0xa88] sm:$0xff]
        %v776 = vld [vmem:[%s332 + $0xa90] sm:$0xff]
        %v777 = vld [vmem:[%s332 + $0xa98] sm:$0xff]
        %v778 = vld [vmem:[%s332 + $0xaa0] sm:$0xff]
        %v779 = vld [vmem:[%s332 + $0xaa8] sm:$0xff]
        %v780 = vld [vmem:[%s332 + $0xab0] sm:$0xff]
        %v781 = vld [vmem:[%s332 + $0xab8] sm:$0xff]
        %v782 = vld [vmem:[%s332 + $0xac0] sm:$0xff]
        %v783 = vld [vmem:[%s332 + $0xac8] sm:$0xff]
        %v784 = vld [vmem:[%s332 + $0xad0] sm:$0xff]
        %v785 = vld [vmem:[%s332 + $0xad8] sm:$0xff]
        %v786 = vld [vmem:[%s332 + $0xae0] sm:$0xff]
        %v787 = vld [vmem:[%s332 + $0xae8] sm:$0xff]
        %v788 = vld [vmem:[%s332 + $0xaf0] sm:$0xff]
        %v789 = vld [vmem:[%s332 + $0xaf8] sm:$0xff]
        %v790 = vld [vmem:[%s332 + $0xb00] sm:$0xff]
        %v791 = vld [vmem:[%s332 + $0xb08] sm:$0xff]
        %v792 = vld [vmem:[%s332 + $0xb10] sm:$0xff]
        %v793 = vld [vmem:[%s332 + $0xb18] sm:$0xff]
        %v794 = vld [vmem:[%s332 + $0xb20] sm:$0xff]
        %v795 = vld [vmem:[%s332 + $0xb28] sm:$0xff]
        %v796 = vld [vmem:[%s332 + $0xb30] sm:$0xff]
        %v797 = vld [vmem:[%s332 + $0xb38] sm:$0xff]
        %v798 = vld [vmem:[%s332 + $0xb40] sm:$0xff]
        %v799 = vld [vmem:[%s332 + $0xb48] sm:$0xff]
        %v800 = vld [vmem:[%s332 + $0xb50] sm:$0xff]
        %v801 = vld [vmem:[%s332 + $0xb58] sm:$0xff]
        %v802 = vld [vmem:[%s332 + $0xb60] sm:$0xff]
        %v803 = vld [vmem:[%s332 + $0xb68] sm:$0xff]
        %v804 = vld [vmem:[%s332 + $0xb70] sm:$0xff]
        %v805 = vld [vmem:[%s332 + $0xb78] sm:$0xff]
        %v806 = vld [vmem:[%s332 + $0xb80] sm:$0xff]
        %v807 = vld [vmem:[%s332 + $0xb88] sm:$0xff]
        %v808 = vld [vmem:[%s332 + $0xb90] sm:$0xff]
        %v809 = vld [vmem:[%s332 + $0xb98] sm:$0xff]
        %v810 = vld [vmem:[%s332 + $0xba0] sm:$0xff]
        %v811 = vld [vmem:[%s332 + $0xba8] sm:$0xff]
        %v812 = vld [vmem:[%s332 + $0xbb0] sm:$0xff]
        %v813 = vld [vmem:[%s332 + $0xbb8] sm:$0xff]
        %v814 = vld [vmem:[%s332 + $0xbc0] sm:$0xff]
        %v815 = vld [vmem:[%s332 + $0xbc8] sm:$0xff]
        %v816 = vld [vmem:[%s332 + $0xbd0] sm:$0xff]
        %v817 = vld [vmem:[%s332 + $0xbd8] sm:$0xff]
        %v818 = vld [vmem:[%s332 + $0xbe0] sm:$0xff]
        %v819 = vld [vmem:[%s332 + $0xbe8] sm:$0xff]
        %v820 = vld [vmem:[%s332 + $0xbf0] sm:$0xff]
        %v821 = vld [vmem:[%s332 + $0xbf8] sm:$0xff]
        %v822 = vunpack.c.l.s8.bf16 %v438
        %v823 = vunpack.c.l.s8.bf16 %v439
        %v824 = vunpack.c.l.s8.bf16 %v440
        %v825 = vunpack.c.l.s8.bf16 %v441
        %v826 = vunpack.c.h.s8.bf16 %v438
        %v827 = vunpack.c.h.s8.bf16 %v439
        %v828 = vunpack.c.h.s8.bf16 %v440
        %v829 = vunpack.c.h.s8.bf16 %v441
        %v830 = vunpack.c.l.s8.bf16 %v442
        %v831 = vunpack.c.l.s8.bf16 %v443
        %v832 = vunpack.c.l.s8.bf16 %v444
        %v833 = vunpack.c.l.s8.bf16 %v445
        %v834 = vunpack.c.h.s8.bf16 %v442
        %v835 = vunpack.c.h.s8.bf16 %v443
        %v836 = vunpack.c.h.s8.bf16 %v444
        %v837 = vunpack.c.h.s8.bf16 %v445
        %v838 = vunpack.c.l.s8.bf16 %v446
        %v839 = vunpack.c.l.s8.bf16 %v447
        %v840 = vunpack.c.l.s8.bf16 %v448
        %v841 = vunpack.c.l.s8.bf16 %v449
        %v842 = vunpack.c.h.s8.bf16 %v446
        %v843 = vunpack.c.h.s8.bf16 %v447
        %v844 = vunpack.c.h.s8.bf16 %v448
        %v845 = vunpack.c.h.s8.bf16 %v449
        %v846 = vunpack.c.l.s8.bf16 %v450
        %v847 = vunpack.c.l.s8.bf16 %v451
        %v848 = vunpack.c.l.s8.bf16 %v452
        %v849 = vunpack.c.l.s8.bf16 %v453
        %v850 = vunpack.c.h.s8.bf16 %v450
        %v851 = vunpack.c.h.s8.bf16 %v451
        %v852 = vunpack.c.h.s8.bf16 %v452
        %v853 = vunpack.c.h.s8.bf16 %v453
        %v854 = vunpack.c.l.s8.bf16 %v454
        %v855 = vunpack.c.l.s8.bf16 %v455
        %v856 = vunpack.c.l.s8.bf16 %v456
        %v857 = vunpack.c.l.s8.bf16 %v457
        %v858 = vunpack.c.h.s8.bf16 %v454
        %v859 = vunpack.c.h.s8.bf16 %v455
        %v860 = vunpack.c.h.s8.bf16 %v456
        %v861 = vunpack.c.h.s8.bf16 %v457
        %v862 = vunpack.c.l.s8.bf16 %v458
        %v863 = vunpack.c.l.s8.bf16 %v459
        %v864 = vunpack.c.l.s8.bf16 %v460
        %v865 = vunpack.c.l.s8.bf16 %v461
        %v866 = vunpack.c.h.s8.bf16 %v458
        %v867 = vunpack.c.h.s8.bf16 %v459
        %v868 = vunpack.c.h.s8.bf16 %v460
        %v869 = vunpack.c.h.s8.bf16 %v461
        %v870 = vunpack.c.l.s8.bf16 %v462
        %v871 = vunpack.c.l.s8.bf16 %v463
        %v872 = vunpack.c.l.s8.bf16 %v464
        %v873 = vunpack.c.l.s8.bf16 %v465
        %v874 = vunpack.c.h.s8.bf16 %v462
        %v875 = vunpack.c.h.s8.bf16 %v463
        %v876 = vunpack.c.h.s8.bf16 %v464
        %v877 = vunpack.c.h.s8.bf16 %v465
        %v878 = vunpack.c.l.s8.bf16 %v466
        %v879 = vunpack.c.l.s8.bf16 %v467
        %v880 = vunpack.c.l.s8.bf16 %v468
        %v881 = vunpack.c.l.s8.bf16 %v469
        %v882 = vunpack.c.h.s8.bf16 %v466
        %v883 = vunpack.c.h.s8.bf16 %v467
        %v884 = vunpack.c.h.s8.bf16 %v468
        %v885 = vunpack.c.h.s8.bf16 %v469
        %v886 = vunpack.c.l.s8.bf16 %v470
        %v887 = vunpack.c.l.s8.bf16 %v471
        %v888 = vunpack.c.l.s8.bf16 %v472
        %v889 = vunpack.c.l.s8.bf16 %v473
        %v890 = vunpack.c.h.s8.bf16 %v470
        %v891 = vunpack.c.h.s8.bf16 %v471
        %v892 = vunpack.c.h.s8.bf16 %v472
        %v893 = vunpack.c.h.s8.bf16 %v473
        %v894 = vunpack.c.l.s8.bf16 %v474
        %v895 = vunpack.c.l.s8.bf16 %v475
        %v896 = vunpack.c.l.s8.bf16 %v476
        %v897 = vunpack.c.l.s8.bf16 %v477
        %v898 = vunpack.c.h.s8.bf16 %v474
        %v899 = vunpack.c.h.s8.bf16 %v475
        %v900 = vunpack.c.h.s8.bf16 %v476
        %v901 = vunpack.c.h.s8.bf16 %v477
        %v902 = vunpack.c.l.s8.bf16 %v478
        %v903 = vunpack.c.l.s8.bf16 %v479
        %v904 = vunpack.c.l.s8.bf16 %v480
        %v905 = vunpack.c.l.s8.bf16 %v481
        %v906 = vunpack.c.h.s8.bf16 %v478
        %v907 = vunpack.c.h.s8.bf16 %v479
        %v908 = vunpack.c.h.s8.bf16 %v480
        %v909 = vunpack.c.h.s8.bf16 %v481
        %v910 = vunpack.c.l.s8.bf16 %v482
        %v911 = vunpack.c.l.s8.bf16 %v483
        %v912 = vunpack.c.l.s8.bf16 %v484
        %v913 = vunpack.c.l.s8.bf16 %v485
        %v914 = vunpack.c.h.s8.bf16 %v482
        %v915 = vunpack.c.h.s8.bf16 %v483
        %v916 = vunpack.c.h.s8.bf16 %v484
        %v917 = vunpack.c.h.s8.bf16 %v485
        %v918 = vunpack.c.l.s8.bf16 %v486
        %v919 = vunpack.c.l.s8.bf16 %v487
        %v920 = vunpack.c.l.s8.bf16 %v488
        %v921 = vunpack.c.l.s8.bf16 %v489
        %v922 = vunpack.c.h.s8.bf16 %v486
        %v923 = vunpack.c.h.s8.bf16 %v487
        %v924 = vunpack.c.h.s8.bf16 %v488
        %v925 = vunpack.c.h.s8.bf16 %v489
        %v926 = vunpack.c.l.s8.bf16 %v490
        %v927 = vunpack.c.l.s8.bf16 %v491
        %v928 = vunpack.c.l.s8.bf16 %v492
        %v929 = vunpack.c.l.s8.bf16 %v493
        %v930 = vunpack.c.h.s8.bf16 %v490
        %v931 = vunpack.c.h.s8.bf16 %v491
        %v932 = vunpack.c.h.s8.bf16 %v492
        %v933 = vunpack.c.h.s8.bf16 %v493
        %v934 = vunpack.c.l.s8.bf16 %v494
        %v935 = vunpack.c.l.s8.bf16 %v495
        %v936 = vunpack.c.l.s8.bf16 %v496
        %v937 = vunpack.c.l.s8.bf16 %v497
        %v938 = vunpack.c.h.s8.bf16 %v494
        %v939 = vunpack.c.h.s8.bf16 %v495
        %v940 = vunpack.c.h.s8.bf16 %v496
        %v941 = vunpack.c.h.s8.bf16 %v497
        %v942 = vunpack.c.l.s8.bf16 %v498
        %v943 = vunpack.c.l.s8.bf16 %v499
        %v944 = vunpack.c.l.s8.bf16 %v500
        %v945 = vunpack.c.l.s8.bf16 %v501
        %v946 = vunpack.c.h.s8.bf16 %v498
        %v947 = vunpack.c.h.s8.bf16 %v499
        %v948 = vunpack.c.h.s8.bf16 %v500
        %v949 = vunpack.c.h.s8.bf16 %v501
        %v950 = vunpack.c.l.s8.bf16 %v502
        %v951 = vunpack.c.l.s8.bf16 %v503
        %v952 = vunpack.c.l.s8.bf16 %v504
        %v953 = vunpack.c.l.s8.bf16 %v505
        %v954 = vunpack.c.h.s8.bf16 %v502
        %v955 = vunpack.c.h.s8.bf16 %v503
        %v956 = vunpack.c.h.s8.bf16 %v504
        %v957 = vunpack.c.h.s8.bf16 %v505
        %v958 = vunpack.c.l.s8.bf16 %v506
        %v959 = vunpack.c.l.s8.bf16 %v507
        %v960 = vunpack.c.l.s8.bf16 %v508
        %v961 = vunpack.c.l.s8.bf16 %v509
        %v962 = vunpack.c.h.s8.bf16 %v506
        %v963 = vunpack.c.h.s8.bf16 %v507
        %v964 = vunpack.c.h.s8.bf16 %v508
        %v965 = vunpack.c.h.s8.bf16 %v509
        %v966 = vunpack.c.l.s8.bf16 %v510
        %v967 = vunpack.c.l.s8.bf16 %v511
        %v968 = vunpack.c.l.s8.bf16 %v512
        %v969 = vunpack.c.l.s8.bf16 %v513
        %v970 = vunpack.c.h.s8.bf16 %v510
        %v971 = vunpack.c.h.s8.bf16 %v511
        %v972 = vunpack.c.h.s8.bf16 %v512
        %v973 = vunpack.c.h.s8.bf16 %v513
        %v974 = vunpack.c.l.s8.bf16 %v514
        %v975 = vunpack.c.l.s8.bf16 %v515
        %v976 = vunpack.c.l.s8.bf16 %v516
        %v977 = vunpack.c.l.s8.bf16 %v517
        %v978 = vunpack.c.h.s8.bf16 %v514
        %v979 = vunpack.c.h.s8.bf16 %v515
        %v980 = vunpack.c.h.s8.bf16 %v516
        %v981 = vunpack.c.h.s8.bf16 %v517
        %v982 = vunpack.c.l.s8.bf16 %v518
        %v983 = vunpack.c.l.s8.bf16 %v519
        %v984 = vunpack.c.l.s8.bf16 %v520
        %v985 = vunpack.c.l.s8.bf16 %v521
        %v986 = vunpack.c.h.s8.bf16 %v518
        %v987 = vunpack.c.h.s8.bf16 %v519
        %v988 = vunpack.c.h.s8.bf16 %v520
        %v989 = vunpack.c.h.s8.bf16 %v521
        %v990 = vunpack.c.l.s8.bf16 %v522
        %v991 = vunpack.c.l.s8.bf16 %v523
        %v992 = vunpack.c.l.s8.bf16 %v524
        %v993 = vunpack.c.l.s8.bf16 %v525
        %v994 = vunpack.c.h.s8.bf16 %v522
        %v995 = vunpack.c.h.s8.bf16 %v523
        %v996 = vunpack.c.h.s8.bf16 %v524
        %v997 = vunpack.c.h.s8.bf16 %v525
        %v998 = vunpack.c.l.s8.bf16 %v526
        %v999 = vunpack.c.l.s8.bf16 %v527
        %v1000 = vunpack.c.l.s8.bf16 %v528
        %v1001 = vunpack.c.l.s8.bf16 %v529
        %v1002 = vunpack.c.h.s8.bf16 %v526
        %v1003 = vunpack.c.h.s8.bf16 %v527
        %v1004 = vunpack.c.h.s8.bf16 %v528
        %v1005 = vunpack.c.h.s8.bf16 %v529
        %v1006 = vunpack.c.l.s8.bf16 %v530
        %v1007 = vunpack.c.l.s8.bf16 %v531
        %v1008 = vunpack.c.l.s8.bf16 %v532
        %v1009 = vunpack.c.l.s8.bf16 %v533
        %v1010 = vunpack.c.h.s8.bf16 %v530
        %v1011 = vunpack.c.h.s8.bf16 %v531
        %v1012 = vunpack.c.h.s8.bf16 %v532
        %v1013 = vunpack.c.h.s8.bf16 %v533
        %v1014 = vunpack.c.l.s8.bf16 %v534
        %v1015 = vunpack.c.l.s8.bf16 %v535
        %v1016 = vunpack.c.l.s8.bf16 %v536
        %v1017 = vunpack.c.l.s8.bf16 %v537
        %v1018 = vunpack.c.h.s8.bf16 %v534
        %v1019 = vunpack.c.h.s8.bf16 %v535
        %v1020 = vunpack.c.h.s8.bf16 %v536
        %v1021 = vunpack.c.h.s8.bf16 %v537
        %v1022 = vunpack.c.l.s8.bf16 %v538
        %v1023 = vunpack.c.l.s8.bf16 %v539
        %v1024 = vunpack.c.l.s8.bf16 %v540
        %v1025 = vunpack.c.l.s8.bf16 %v541
        %v1026 = vunpack.c.h.s8.bf16 %v538
        %v1027 = vunpack.c.h.s8.bf16 %v539
        %v1028 = vunpack.c.h.s8.bf16 %v540
        %v1029 = vunpack.c.h.s8.bf16 %v541
        %v1030 = vunpack.c.l.s8.bf16 %v542
        %v1031 = vunpack.c.l.s8.bf16 %v543
        %v1032 = vunpack.c.l.s8.bf16 %v544
        %v1033 = vunpack.c.l.s8.bf16 %v545
        %v1034 = vunpack.c.h.s8.bf16 %v542
        %v1035 = vunpack.c.h.s8.bf16 %v543
        %v1036 = vunpack.c.h.s8.bf16 %v544
        %v1037 = vunpack.c.h.s8.bf16 %v545
        %v1038 = vunpack.c.l.s8.bf16 %v546
        %v1039 = vunpack.c.l.s8.bf16 %v547
        %v1040 = vunpack.c.l.s8.bf16 %v548
        %v1041 = vunpack.c.l.s8.bf16 %v549
        %v1042 = vunpack.c.h.s8.bf16 %v546
        %v1043 = vunpack.c.h.s8.bf16 %v547
        %v1044 = vunpack.c.h.s8.bf16 %v548
        %v1045 = vunpack.c.h.s8.bf16 %v549
        %v1046 = vunpack.c.l.s8.bf16 %v550
        %v1047 = vunpack.c.l.s8.bf16 %v551
        %v1048 = vunpack.c.l.s8.bf16 %v552
        %v1049 = vunpack.c.l.s8.bf16 %v553
        %v1050 = vunpack.c.h.s8.bf16 %v550
        %v1051 = vunpack.c.h.s8.bf16 %v551
        %v1052 = vunpack.c.h.s8.bf16 %v552
        %v1053 = vunpack.c.h.s8.bf16 %v553
        %v1054 = vunpack.c.l.s8.bf16 %v554
        %v1055 = vunpack.c.l.s8.bf16 %v555
        %v1056 = vunpack.c.l.s8.bf16 %v556
        %v1057 = vunpack.c.l.s8.bf16 %v557
        %v1058 = vunpack.c.h.s8.bf16 %v554
        %v1059 = vunpack.c.h.s8.bf16 %v555
        %v1060 = vunpack.c.h.s8.bf16 %v556
        %v1061 = vunpack.c.h.s8.bf16 %v557
        %v1062 = vunpack.c.l.s8.bf16 %v558
        %v1063 = vunpack.c.l.s8.bf16 %v559
        %v1064 = vunpack.c.l.s8.bf16 %v560
        %v1065 = vunpack.c.l.s8.bf16 %v561
        %v1066 = vunpack.c.h.s8.bf16 %v558
        %v1067 = vunpack.c.h.s8.bf16 %v559
        %v1068 = vunpack.c.h.s8.bf16 %v560
        %v1069 = vunpack.c.h.s8.bf16 %v561
        %v1070 = vunpack.c.l.s8.bf16 %v562
        %v1071 = vunpack.c.l.s8.bf16 %v563
        %v1072 = vunpack.c.l.s8.bf16 %v564
        %v1073 = vunpack.c.l.s8.bf16 %v565
        %v1074 = vunpack.c.h.s8.bf16 %v562
        %v1075 = vunpack.c.h.s8.bf16 %v563
        %v1076 = vunpack.c.h.s8.bf16 %v564
        %v1077 = vunpack.c.h.s8.bf16 %v565
        %v1078 = vunpack.c.l.s8.bf16 %v566
        %v1079 = vunpack.c.l.s8.bf16 %v567
        %v1080 = vunpack.c.l.s8.bf16 %v568
        %v1081 = vunpack.c.l.s8.bf16 %v569
        %v1082 = vunpack.c.h.s8.bf16 %v566
        %v1083 = vunpack.c.h.s8.bf16 %v567
        %v1084 = vunpack.c.h.s8.bf16 %v568
        %v1085 = vunpack.c.h.s8.bf16 %v569
        %v1086 = vunpack.c.l.s8.bf16 %v570
        %v1087 = vunpack.c.l.s8.bf16 %v571
        %v1088 = vunpack.c.l.s8.bf16 %v572
        %v1089 = vunpack.c.l.s8.bf16 %v573
        %v1090 = vunpack.c.h.s8.bf16 %v570
        %v1091 = vunpack.c.h.s8.bf16 %v571
        %v1092 = vunpack.c.h.s8.bf16 %v572
        %v1093 = vunpack.c.h.s8.bf16 %v573
        %v1094 = vunpack.c.l.s8.bf16 %v574
        %v1095 = vunpack.c.l.s8.bf16 %v575
        %v1096 = vunpack.c.l.s8.bf16 %v576
        %v1097 = vunpack.c.l.s8.bf16 %v577
        %v1098 = vunpack.c.h.s8.bf16 %v574
        %v1099 = vunpack.c.h.s8.bf16 %v575
        %v1100 = vunpack.c.h.s8.bf16 %v576
        %v1101 = vunpack.c.h.s8.bf16 %v577
        %v1102 = vunpack.c.l.s8.bf16 %v578
        %v1103 = vunpack.c.l.s8.bf16 %v579
        %v1104 = vunpack.c.l.s8.bf16 %v580
        %v1105 = vunpack.c.l.s8.bf16 %v581
        %v1106 = vunpack.c.h.s8.bf16 %v578
        %v1107 = vunpack.c.h.s8.bf16 %v579
        %v1108 = vunpack.c.h.s8.bf16 %v580
        %v1109 = vunpack.c.h.s8.bf16 %v581
        %v1110 = vunpack.c.l.s8.bf16 %v582
        %v1111 = vunpack.c.l.s8.bf16 %v583
        %v1112 = vunpack.c.l.s8.bf16 %v584
        %v1113 = vunpack.c.l.s8.bf16 %v585
        %v1114 = vunpack.c.h.s8.bf16 %v582
        %v1115 = vunpack.c.h.s8.bf16 %v583
        %v1116 = vunpack.c.h.s8.bf16 %v584
        %v1117 = vunpack.c.h.s8.bf16 %v585
        %v1118 = vunpack.c.l.s8.bf16 %v586
        %v1119 = vunpack.c.l.s8.bf16 %v587
        %v1120 = vunpack.c.l.s8.bf16 %v588
        %v1121 = vunpack.c.l.s8.bf16 %v589
        %v1122 = vunpack.c.h.s8.bf16 %v586
        %v1123 = vunpack.c.h.s8.bf16 %v587
        %v1124 = vunpack.c.h.s8.bf16 %v588
        %v1125 = vunpack.c.h.s8.bf16 %v589
        %v1126 = vunpack.c.l.s8.bf16 %v590
        %v1127 = vunpack.c.l.s8.bf16 %v591
        %v1128 = vunpack.c.l.s8.bf16 %v592
        %v1129 = vunpack.c.l.s8.bf16 %v593
        %v1130 = vunpack.c.h.s8.bf16 %v590
        %v1131 = vunpack.c.h.s8.bf16 %v591
        %v1132 = vunpack.c.h.s8.bf16 %v592
        %v1133 = vunpack.c.h.s8.bf16 %v593
        %v1134 = vunpack.c.l.s8.bf16 %v594
        %v1135 = vunpack.c.l.s8.bf16 %v595
        %v1136 = vunpack.c.l.s8.bf16 %v596
        %v1137 = vunpack.c.l.s8.bf16 %v597
        %v1138 = vunpack.c.h.s8.bf16 %v594
        %v1139 = vunpack.c.h.s8.bf16 %v595
        %v1140 = vunpack.c.h.s8.bf16 %v596
        %v1141 = vunpack.c.h.s8.bf16 %v597
        %v1142 = vunpack.c.l.s8.bf16 %v598
        %v1143 = vunpack.c.l.s8.bf16 %v599
        %v1144 = vunpack.c.l.s8.bf16 %v600
        %v1145 = vunpack.c.l.s8.bf16 %v601
        %v1146 = vunpack.c.h.s8.bf16 %v598
        %v1147 = vunpack.c.h.s8.bf16 %v599
        %v1148 = vunpack.c.h.s8.bf16 %v600
        %v1149 = vunpack.c.h.s8.bf16 %v601
        %v1150 = vunpack.c.l.s8.bf16 %v602
        %v1151 = vunpack.c.l.s8.bf16 %v603
        %v1152 = vunpack.c.l.s8.bf16 %v604
        %v1153 = vunpack.c.l.s8.bf16 %v605
        %v1154 = vunpack.c.h.s8.bf16 %v602
        %v1155 = vunpack.c.h.s8.bf16 %v603
        %v1156 = vunpack.c.h.s8.bf16 %v604
        %v1157 = vunpack.c.h.s8.bf16 %v605
        %v1158 = vunpack.c.l.s8.bf16 %v606
        %v1159 = vunpack.c.l.s8.bf16 %v607
        %v1160 = vunpack.c.l.s8.bf16 %v608
        %v1161 = vunpack.c.l.s8.bf16 %v609
        %v1162 = vunpack.c.h.s8.bf16 %v606
        %v1163 = vunpack.c.h.s8.bf16 %v607
        %v1164 = vunpack.c.h.s8.bf16 %v608
        %v1165 = vunpack.c.h.s8.bf16 %v609
        %v1166 = vunpack.c.l.s8.bf16 %v610
        %v1167 = vunpack.c.l.s8.bf16 %v611
        %v1168 = vunpack.c.l.s8.bf16 %v612
        %v1169 = vunpack.c.l.s8.bf16 %v613
        %v1170 = vunpack.c.h.s8.bf16 %v610
        %v1171 = vunpack.c.h.s8.bf16 %v611
        %v1172 = vunpack.c.h.s8.bf16 %v612
        %v1173 = vunpack.c.h.s8.bf16 %v613
        %v1174 = vunpack.c.l.s8.bf16 %v614
        %v1175 = vunpack.c.l.s8.bf16 %v615
        %v1176 = vunpack.c.l.s8.bf16 %v616
        %v1177 = vunpack.c.l.s8.bf16 %v617
        %v1178 = vunpack.c.h.s8.bf16 %v614
        %v1179 = vunpack.c.h.s8.bf16 %v615
        %v1180 = vunpack.c.h.s8.bf16 %v616
        %v1181 = vunpack.c.h.s8.bf16 %v617
        %v1182 = vunpack.c.l.s8.bf16 %v618
        %v1183 = vunpack.c.l.s8.bf16 %v619
        %v1184 = vunpack.c.l.s8.bf16 %v620
        %v1185 = vunpack.c.l.s8.bf16 %v621
        %v1186 = vunpack.c.h.s8.bf16 %v618
        %v1187 = vunpack.c.h.s8.bf16 %v619
        %v1188 = vunpack.c.h.s8.bf16 %v620
        %v1189 = vunpack.c.h.s8.bf16 %v621
        %v1190 = vunpack.c.l.s8.bf16 %v622
        %v1191 = vunpack.c.l.s8.bf16 %v623
        %v1192 = vunpack.c.l.s8.bf16 %v624
        %v1193 = vunpack.c.l.s8.bf16 %v625
        %v1194 = vunpack.c.h.s8.bf16 %v622
        %v1195 = vunpack.c.h.s8.bf16 %v623
        %v1196 = vunpack.c.h.s8.bf16 %v624
        %v1197 = vunpack.c.h.s8.bf16 %v625
        %v1198 = vunpack.c.l.s8.bf16 %v626
        %v1199 = vunpack.c.l.s8.bf16 %v627
        %v1200 = vunpack.c.l.s8.bf16 %v628
        %v1201 = vunpack.c.l.s8.bf16 %v629
        %v1202 = vunpack.c.h.s8.bf16 %v626
        %v1203 = vunpack.c.h.s8.bf16 %v627
        %v1204 = vunpack.c.h.s8.bf16 %v628
        %v1205 = vunpack.c.h.s8.bf16 %v629
        %v1206 = vunpack.c.l.s8.bf16 %v630
        %v1207 = vunpack.c.l.s8.bf16 %v631
        %v1208 = vunpack.c.l.s8.bf16 %v632
        %v1209 = vunpack.c.l.s8.bf16 %v633
        %v1210 = vunpack.c.h.s8.bf16 %v630
        %v1211 = vunpack.c.h.s8.bf16 %v631
        %v1212 = vunpack.c.h.s8.bf16 %v632
        %v1213 = vunpack.c.h.s8.bf16 %v633
        %v1214 = vunpack.c.l.s8.bf16 %v634
        %v1215 = vunpack.c.l.s8.bf16 %v635
        %v1216 = vunpack.c.l.s8.bf16 %v636
        %v1217 = vunpack.c.l.s8.bf16 %v637
        %v1218 = vunpack.c.h.s8.bf16 %v634
        %v1219 = vunpack.c.h.s8.bf16 %v635
        %v1220 = vunpack.c.h.s8.bf16 %v636
        %v1221 = vunpack.c.h.s8.bf16 %v637
        %v1222 = vunpack.c.l.s8.bf16 %v638
        %v1223 = vunpack.c.l.s8.bf16 %v639
        %v1224 = vunpack.c.l.s8.bf16 %v640
        %v1225 = vunpack.c.l.s8.bf16 %v641
        %v1226 = vunpack.c.h.s8.bf16 %v638
        %v1227 = vunpack.c.h.s8.bf16 %v639
        %v1228 = vunpack.c.h.s8.bf16 %v640
        %v1229 = vunpack.c.h.s8.bf16 %v641
        %v1230 = vunpack.c.l.s8.bf16 %v642
        %v1231 = vunpack.c.l.s8.bf16 %v643
        %v1232 = vunpack.c.l.s8.bf16 %v644
        %v1233 = vunpack.c.l.s8.bf16 %v645
        %v1234 = vunpack.c.h.s8.bf16 %v642
        %v1235 = vunpack.c.h.s8.bf16 %v643
        %v1236 = vunpack.c.h.s8.bf16 %v644
        %v1237 = vunpack.c.h.s8.bf16 %v645
        %v1238 = vunpack.c.l.s8.bf16 %v646
        %v1239 = vunpack.c.l.s8.bf16 %v647
        %v1240 = vunpack.c.l.s8.bf16 %v648
        %v1241 = vunpack.c.l.s8.bf16 %v649
        %v1242 = vunpack.c.h.s8.bf16 %v646
        %v1243 = vunpack.c.h.s8.bf16 %v647
        %v1244 = vunpack.c.h.s8.bf16 %v648
        %v1245 = vunpack.c.h.s8.bf16 %v649
        %v1246 = vunpack.c.l.s8.bf16 %v650
        %v1247 = vunpack.c.l.s8.bf16 %v651
        %v1248 = vunpack.c.l.s8.bf16 %v652
        %v1249 = vunpack.c.l.s8.bf16 %v653
        %v1250 = vunpack.c.h.s8.bf16 %v650
        %v1251 = vunpack.c.h.s8.bf16 %v651
        %v1252 = vunpack.c.h.s8.bf16 %v652
        %v1253 = vunpack.c.h.s8.bf16 %v653
        %v1254 = vunpack.c.l.s8.bf16 %v654
        %v1255 = vunpack.c.l.s8.bf16 %v655
        %v1256 = vunpack.c.l.s8.bf16 %v656
        %v1257 = vunpack.c.l.s8.bf16 %v657
        %v1258 = vunpack.c.h.s8.bf16 %v654
        %v1259 = vunpack.c.h.s8.bf16 %v655
        %v1260 = vunpack.c.h.s8.bf16 %v656
        %v1261 = vunpack.c.h.s8.bf16 %v657
        %v1262 = vunpack.c.l.s8.bf16 %v658
        %v1263 = vunpack.c.l.s8.bf16 %v659
        %v1264 = vunpack.c.l.s8.bf16 %v660
        %v1265 = vunpack.c.l.s8.bf16 %v661
        %v1266 = vunpack.c.h.s8.bf16 %v658
        %v1267 = vunpack.c.h.s8.bf16 %v659
        %v1268 = vunpack.c.h.s8.bf16 %v660
        %v1269 = vunpack.c.h.s8.bf16 %v661
        %v1270 = vunpack.c.l.s8.bf16 %v662
        %v1271 = vunpack.c.l.s8.bf16 %v663
        %v1272 = vunpack.c.l.s8.bf16 %v664
        %v1273 = vunpack.c.l.s8.bf16 %v665
        %v1274 = vunpack.c.h.s8.bf16 %v662
        %v1275 = vunpack.c.h.s8.bf16 %v663
        %v1276 = vunpack.c.h.s8.bf16 %v664
        %v1277 = vunpack.c.h.s8.bf16 %v665
        %v1278 = vunpack.c.l.s8.bf16 %v666
        %v1279 = vunpack.c.l.s8.bf16 %v667
        %v1280 = vunpack.c.l.s8.bf16 %v668
        %v1281 = vunpack.c.l.s8.bf16 %v669
        %v1282 = vunpack.c.h.s8.bf16 %v666
        %v1283 = vunpack.c.h.s8.bf16 %v667
        %v1284 = vunpack.c.h.s8.bf16 %v668
        %v1285 = vunpack.c.h.s8.bf16 %v669
        %v1286 = vunpack.c.l.s8.bf16 %v670
        %v1287 = vunpack.c.l.s8.bf16 %v671
        %v1288 = vunpack.c.l.s8.bf16 %v672
        %v1289 = vunpack.c.l.s8.bf16 %v673
        %v1290 = vunpack.c.h.s8.bf16 %v670
        %v1291 = vunpack.c.h.s8.bf16 %v671
        %v1292 = vunpack.c.h.s8.bf16 %v672
        %v1293 = vunpack.c.h.s8.bf16 %v673
        %v1294 = vunpack.c.l.s8.bf16 %v674
        %v1295 = vunpack.c.l.s8.bf16 %v675
        %v1296 = vunpack.c.l.s8.bf16 %v676
        %v1297 = vunpack.c.l.s8.bf16 %v677
        %v1298 = vunpack.c.h.s8.bf16 %v674
        %v1299 = vunpack.c.h.s8.bf16 %v675
        %v1300 = vunpack.c.h.s8.bf16 %v676
        %v1301 = vunpack.c.h.s8.bf16 %v677
        %v1302 = vunpack.c.l.s8.bf16 %v678
        %v1303 = vunpack.c.l.s8.bf16 %v679
        %v1304 = vunpack.c.l.s8.bf16 %v680
        %v1305 = vunpack.c.l.s8.bf16 %v681
        %v1306 = vunpack.c.h.s8.bf16 %v678
        %v1307 = vunpack.c.h.s8.bf16 %v679
        %v1308 = vunpack.c.h.s8.bf16 %v680
        %v1309 = vunpack.c.h.s8.bf16 %v681
        %v1310 = vunpack.c.l.s8.bf16 %v682
        %v1311 = vunpack.c.l.s8.bf16 %v683
        %v1312 = vunpack.c.l.s8.bf16 %v684
        %v1313 = vunpack.c.l.s8.bf16 %v685
        %v1314 = vunpack.c.h.s8.bf16 %v682
        %v1315 = vunpack.c.h.s8.bf16 %v683
        %v1316 = vunpack.c.h.s8.bf16 %v684
        %v1317 = vunpack.c.h.s8.bf16 %v685
        %v1318 = vunpack.c.l.s8.bf16 %v686
        %v1319 = vunpack.c.l.s8.bf16 %v687
        %v1320 = vunpack.c.l.s8.bf16 %v688
        %v1321 = vunpack.c.l.s8.bf16 %v689
        %v1322 = vunpack.c.h.s8.bf16 %v686
        %v1323 = vunpack.c.h.s8.bf16 %v687
        %v1324 = vunpack.c.h.s8.bf16 %v688
        %v1325 = vunpack.c.h.s8.bf16 %v689
        %v1326 = vunpack.c.l.s8.bf16 %v690
        %v1327 = vunpack.c.l.s8.bf16 %v691
        %v1328 = vunpack.c.l.s8.bf16 %v692
        %v1329 = vunpack.c.l.s8.bf16 %v693
        %v1330 = vunpack.c.h.s8.bf16 %v690
        %v1331 = vunpack.c.h.s8.bf16 %v691
        %v1332 = vunpack.c.h.s8.bf16 %v692
        %v1333 = vunpack.c.h.s8.bf16 %v693
        %v1334 = vunpack.c.l.s8.bf16 %v694
        %v1335 = vunpack.c.l.s8.bf16 %v695
        %v1336 = vunpack.c.l.s8.bf16 %v696
        %v1337 = vunpack.c.l.s8.bf16 %v697
        %v1338 = vunpack.c.h.s8.bf16 %v694
        %v1339 = vunpack.c.h.s8.bf16 %v695
        %v1340 = vunpack.c.h.s8.bf16 %v696
        %v1341 = vunpack.c.h.s8.bf16 %v697
        %v1342 = vunpack.c.l.s8.bf16 %v698
        %v1343 = vunpack.c.l.s8.bf16 %v699
        %v1344 = vunpack.c.l.s8.bf16 %v700
        %v1345 = vunpack.c.l.s8.bf16 %v701
        %v1346 = vunpack.c.h.s8.bf16 %v698
        %v1347 = vunpack.c.h.s8.bf16 %v699
        %v1348 = vunpack.c.h.s8.bf16 %v700
        %v1349 = vunpack.c.h.s8.bf16 %v701
        %v1350 = vunpack.c.l.s8.bf16 %v702
        %v1351 = vunpack.c.l.s8.bf16 %v703
        %v1352 = vunpack.c.l.s8.bf16 %v704
        %v1353 = vunpack.c.l.s8.bf16 %v705
        %v1354 = vunpack.c.h.s8.bf16 %v702
        %v1355 = vunpack.c.h.s8.bf16 %v703
        %v1356 = vunpack.c.h.s8.bf16 %v704
        %v1357 = vunpack.c.h.s8.bf16 %v705
        %v1358 = vunpack.c.l.s8.bf16 %v706
        %v1359 = vunpack.c.l.s8.bf16 %v707
        %v1360 = vunpack.c.l.s8.bf16 %v708
        %v1361 = vunpack.c.l.s8.bf16 %v709
        %v1362 = vunpack.c.h.s8.bf16 %v706
        %v1363 = vunpack.c.h.s8.bf16 %v707
        %v1364 = vunpack.c.h.s8.bf16 %v708
        %v1365 = vunpack.c.h.s8.bf16 %v709
        %v1366 = vunpack.c.l.s8.bf16 %v710
        %v1367 = vunpack.c.l.s8.bf16 %v711
        %v1368 = vunpack.c.l.s8.bf16 %v712
        %v1369 = vunpack.c.l.s8.bf16 %v713
        %v1370 = vunpack.c.h.s8.bf16 %v710
        %v1371 = vunpack.c.h.s8.bf16 %v711
        %v1372 = vunpack.c.h.s8.bf16 %v712
        %v1373 = vunpack.c.h.s8.bf16 %v713
        %v1374 = vunpack.c.l.s8.bf16 %v714
        %v1375 = vunpack.c.l.s8.bf16 %v715
        %v1376 = vunpack.c.l.s8.bf16 %v716
        %v1377 = vunpack.c.l.s8.bf16 %v717
        %v1378 = vunpack.c.h.s8.bf16 %v714
        %v1379 = vunpack.c.h.s8.bf16 %v715
        %v1380 = vunpack.c.h.s8.bf16 %v716
        %v1381 = vunpack.c.h.s8.bf16 %v717
        %v1382 = vunpack.c.l.s8.bf16 %v718
        %v1383 = vunpack.c.l.s8.bf16 %v719
        %v1384 = vunpack.c.l.s8.bf16 %v720
        %v1385 = vunpack.c.l.s8.bf16 %v721
        %v1386 = vunpack.c.h.s8.bf16 %v718
        %v1387 = vunpack.c.h.s8.bf16 %v719
        %v1388 = vunpack.c.h.s8.bf16 %v720
        %v1389 = vunpack.c.h.s8.bf16 %v721
        %v1390 = vunpack.c.l.s8.bf16 %v722
        %v1391 = vunpack.c.l.s8.bf16 %v723
        %v1392 = vunpack.c.l.s8.bf16 %v724
        %v1393 = vunpack.c.l.s8.bf16 %v725
        %v1394 = vunpack.c.h.s8.bf16 %v722
        %v1395 = vunpack.c.h.s8.bf16 %v723
        %v1396 = vunpack.c.h.s8.bf16 %v724
        %v1397 = vunpack.c.h.s8.bf16 %v725
        %v1398 = vunpack.c.l.s8.bf16 %v726
        %v1399 = vunpack.c.l.s8.bf16 %v727
        %v1400 = vunpack.c.l.s8.bf16 %v728
        %v1401 = vunpack.c.l.s8.bf16 %v729
        %v1402 = vunpack.c.h.s8.bf16 %v726
        %v1403 = vunpack.c.h.s8.bf16 %v727
        %v1404 = vunpack.c.h.s8.bf16 %v728
        %v1405 = vunpack.c.h.s8.bf16 %v729
        %v1406 = vunpack.c.l.s8.bf16 %v730
        %v1407 = vunpack.c.l.s8.bf16 %v731
        %v1408 = vunpack.c.l.s8.bf16 %v732
        %v1409 = vunpack.c.l.s8.bf16 %v733
        %v1410 = vunpack.c.h.s8.bf16 %v730
        %v1411 = vunpack.c.h.s8.bf16 %v731
        %v1412 = vunpack.c.h.s8.bf16 %v732
        %v1413 = vunpack.c.h.s8.bf16 %v733
        %v1414 = vunpack.c.l.s8.bf16 %v734
        %v1415 = vunpack.c.l.s8.bf16 %v735
        %v1416 = vunpack.c.l.s8.bf16 %v736
        %v1417 = vunpack.c.l.s8.bf16 %v737
        %v1418 = vunpack.c.h.s8.bf16 %v734
        %v1419 = vunpack.c.h.s8.bf16 %v735
        %v1420 = vunpack.c.h.s8.bf16 %v736
        %v1421 = vunpack.c.h.s8.bf16 %v737
        %v1422 = vunpack.c.l.s8.bf16 %v738
        %v1423 = vunpack.c.l.s8.bf16 %v739
        %v1424 = vunpack.c.l.s8.bf16 %v740
        %v1425 = vunpack.c.l.s8.bf16 %v741
        %v1426 = vunpack.c.h.s8.bf16 %v738
        %v1427 = vunpack.c.h.s8.bf16 %v739
        %v1428 = vunpack.c.h.s8.bf16 %v740
        %v1429 = vunpack.c.h.s8.bf16 %v741
        %v1430 = vunpack.c.l.s8.bf16 %v742
        %v1431 = vunpack.c.l.s8.bf16 %v743
        %v1432 = vunpack.c.l.s8.bf16 %v744
        %v1433 = vunpack.c.l.s8.bf16 %v745
        %v1434 = vunpack.c.h.s8.bf16 %v742
        %v1435 = vunpack.c.h.s8.bf16 %v743
        %v1436 = vunpack.c.h.s8.bf16 %v744
        %v1437 = vunpack.c.h.s8.bf16 %v745
        %v1438 = vunpack.c.l.s8.bf16 %v746
        %v1439 = vunpack.c.l.s8.bf16 %v747
        %v1440 = vunpack.c.l.s8.bf16 %v748
        %v1441 = vunpack.c.l.s8.bf16 %v749
        %v1442 = vunpack.c.h.s8.bf16 %v746
        %v1443 = vunpack.c.h.s8.bf16 %v747
        %v1444 = vunpack.c.h.s8.bf16 %v748
        %v1445 = vunpack.c.h.s8.bf16 %v749
        %v1446 = vunpack.c.l.s8.bf16 %v750
        %v1447 = vunpack.c.l.s8.bf16 %v751
        %v1448 = vunpack.c.l.s8.bf16 %v752
        %v1449 = vunpack.c.l.s8.bf16 %v753
        %v1450 = vunpack.c.h.s8.bf16 %v750
        %v1451 = vunpack.c.h.s8.bf16 %v751
        %v1452 = vunpack.c.h.s8.bf16 %v752
        %v1453 = vunpack.c.h.s8.bf16 %v753
        %v1454 = vunpack.c.l.s8.bf16 %v754
        %v1455 = vunpack.c.l.s8.bf16 %v755
        %v1456 = vunpack.c.l.s8.bf16 %v756
        %v1457 = vunpack.c.l.s8.bf16 %v757
        %v1458 = vunpack.c.h.s8.bf16 %v754
        %v1459 = vunpack.c.h.s8.bf16 %v755
        %v1460 = vunpack.c.h.s8.bf16 %v756
        %v1461 = vunpack.c.h.s8.bf16 %v757
        %v1462 = vunpack.c.l.s8.bf16 %v758
        %v1463 = vunpack.c.l.s8.bf16 %v759
        %v1464 = vunpack.c.l.s8.bf16 %v760
        %v1465 = vunpack.c.l.s8.bf16 %v761
        %v1466 = vunpack.c.h.s8.bf16 %v758
        %v1467 = vunpack.c.h.s8.bf16 %v759
        %v1468 = vunpack.c.h.s8.bf16 %v760
        %v1469 = vunpack.c.h.s8.bf16 %v761
        %v1470 = vunpack.c.l.s8.bf16 %v762
        %v1471 = vunpack.c.l.s8.bf16 %v763
        %v1472 = vunpack.c.l.s8.bf16 %v764
        %v1473 = vunpack.c.l.s8.bf16 %v765
        %v1474 = vunpack.c.h.s8.bf16 %v762
        %v1475 = vunpack.c.h.s8.bf16 %v763
        %v1476 = vunpack.c.h.s8.bf16 %v764
        %v1477 = vunpack.c.h.s8.bf16 %v765
        %v1478 = vunpack.c.l.s8.bf16 %v766
        %v1479 = vunpack.c.l.s8.bf16 %v767
        %v1480 = vunpack.c.l.s8.bf16 %v768
        %v1481 = vunpack.c.l.s8.bf16 %v769
        %v1482 = vunpack.c.h.s8.bf16 %v766
        %v1483 = vunpack.c.h.s8.bf16 %v767
        %v1484 = vunpack.c.h.s8.bf16 %v768
        %v1485 = vunpack.c.h.s8.bf16 %v769
        %v1486 = vunpack.c.l.s8.bf16 %v770
        %v1487 = vunpack.c.l.s8.bf16 %v771
        %v1488 = vunpack.c.l.s8.bf16 %v772
        %v1489 = vunpack.c.l.s8.bf16 %v773
        %v1490 = vunpack.c.h.s8.bf16 %v770
        %v1491 = vunpack.c.h.s8.bf16 %v771
        %v1492 = vunpack.c.h.s8.bf16 %v772
        %v1493 = vunpack.c.h.s8.bf16 %v773
        %v1494 = vunpack.c.l.s8.bf16 %v774
        %v1495 = vunpack.c.l.s8.bf16 %v775
        %v1496 = vunpack.c.l.s8.bf16 %v776
        %v1497 = vunpack.c.l.s8.bf16 %v777
        %v1498 = vunpack.c.h.s8.bf16 %v774
        %v1499 = vunpack.c.h.s8.bf16 %v775
        %v1500 = vunpack.c.h.s8.bf16 %v776
        %v1501 = vunpack.c.h.s8.bf16 %v777
        %v1502 = vunpack.c.l.s8.bf16 %v778
        %v1503 = vunpack.c.l.s8.bf16 %v779
        %v1504 = vunpack.c.l.s8.bf16 %v780
        %v1505 = vunpack.c.l.s8.bf16 %v781
        %v1506 = vunpack.c.h.s8.bf16 %v778
        %v1507 = vunpack.c.h.s8.bf16 %v779
        %v1508 = vunpack.c.h.s8.bf16 %v780
        %v1509 = vunpack.c.h.s8.bf16 %v781
        %v1510 = vunpack.c.l.s8.bf16 %v782
        %v1511 = vunpack.c.l.s8.bf16 %v783
        %v1512 = vunpack.c.l.s8.bf16 %v784
        %v1513 = vunpack.c.l.s8.bf16 %v785
        %v1514 = vunpack.c.h.s8.bf16 %v782
        %v1515 = vunpack.c.h.s8.bf16 %v783
        %v1516 = vunpack.c.h.s8.bf16 %v784
        %v1517 = vunpack.c.h.s8.bf16 %v785
        %v1518 = vunpack.c.l.s8.bf16 %v786
        %v1519 = vunpack.c.l.s8.bf16 %v787
        %v1520 = vunpack.c.l.s8.bf16 %v788
        %v1521 = vunpack.c.l.s8.bf16 %v789
        %v1522 = vunpack.c.h.s8.bf16 %v786
        %v1523 = vunpack.c.h.s8.bf16 %v787
        %v1524 = vunpack.c.h.s8.bf16 %v788
        %v1525 = vunpack.c.h.s8.bf16 %v789
        %v1526 = vunpack.c.l.s8.bf16 %v790
        %v1527 = vunpack.c.l.s8.bf16 %v791
        %v1528 = vunpack.c.l.s8.bf16 %v792
        %v1529 = vunpack.c.l.s8.bf16 %v793
        %v1530 = vunpack.c.h.s8.bf16 %v790
        %v1531 = vunpack.c.h.s8.bf16 %v791
        %v1532 = vunpack.c.h.s8.bf16 %v792
        %v1533 = vunpack.c.h.s8.bf16 %v793
        %v1534 = vunpack.c.l.s8.bf16 %v794
        %v1535 = vunpack.c.l.s8.bf16 %v795
        %v1536 = vunpack.c.l.s8.bf16 %v796
        %v1537 = vunpack.c.l.s8.bf16 %v797
        %v1538 = vunpack.c.h.s8.bf16 %v794
        %v1539 = vunpack.c.h.s8.bf16 %v795
        %v1540 = vunpack.c.h.s8.bf16 %v796
        %v1541 = vunpack.c.h.s8.bf16 %v797
        %v1542 = vunpack.c.l.s8.bf16 %v798
        %v1543 = vunpack.c.l.s8.bf16 %v799
        %v1544 = vunpack.c.l.s8.bf16 %v800
        %v1545 = vunpack.c.l.s8.bf16 %v801
        %v1546 = vunpack.c.h.s8.bf16 %v798
        %v1547 = vunpack.c.h.s8.bf16 %v799
        %v1548 = vunpack.c.h.s8.bf16 %v800
        %v1549 = vunpack.c.h.s8.bf16 %v801
        %v1550 = vunpack.c.l.s8.bf16 %v802
        %v1551 = vunpack.c.l.s8.bf16 %v803
        %v1552 = vunpack.c.l.s8.bf16 %v804
        %v1553 = vunpack.c.l.s8.bf16 %v805
        %v1554 = vunpack.c.h.s8.bf16 %v802
        %v1555 = vunpack.c.h.s8.bf16 %v803
        %v1556 = vunpack.c.h.s8.bf16 %v804
        %v1557 = vunpack.c.h.s8.bf16 %v805
        %v1558 = vunpack.c.l.s8.bf16 %v806
        %v1559 = vunpack.c.l.s8.bf16 %v807
        %v1560 = vunpack.c.l.s8.bf16 %v808
        %v1561 = vunpack.c.l.s8.bf16 %v809
        %v1562 = vunpack.c.h.s8.bf16 %v806
        %v1563 = vunpack.c.h.s8.bf16 %v807
        %v1564 = vunpack.c.h.s8.bf16 %v808
        %v1565 = vunpack.c.h.s8.bf16 %v809
        %v1566 = vunpack.c.l.s8.bf16 %v810
        %v1567 = vunpack.c.l.s8.bf16 %v811
        %v1568 = vunpack.c.l.s8.bf16 %v812
        %v1569 = vunpack.c.l.s8.bf16 %v813
        %v1570 = vunpack.c.h.s8.bf16 %v810
        %v1571 = vunpack.c.h.s8.bf16 %v811
        %v1572 = vunpack.c.h.s8.bf16 %v812
        %v1573 = vunpack.c.h.s8.bf16 %v813
        %v1574 = vunpack.c.l.s8.bf16 %v814
        %v1575 = vunpack.c.l.s8.bf16 %v815
        %v1576 = vunpack.c.l.s8.bf16 %v816
        %v1577 = vunpack.c.l.s8.bf16 %v817
        %v1578 = vunpack.c.h.s8.bf16 %v814
        %v1579 = vunpack.c.h.s8.bf16 %v815
        %v1580 = vunpack.c.h.s8.bf16 %v816
        %v1581 = vunpack.c.h.s8.bf16 %v817
        %v1582 = vunpack.c.l.s8.bf16 %v818
        %v1583 = vunpack.c.l.s8.bf16 %v819
        %v1584 = vunpack.c.l.s8.bf16 %v820
        %v1585 = vunpack.c.l.s8.bf16 %v821
        %v1586 = vunpack.c.h.s8.bf16 %v818
        %v1587 = vunpack.c.h.s8.bf16 %v819
        %v1588 = vunpack.c.h.s8.bf16 %v820
        %v1589 = vunpack.c.h.s8.bf16 %v821
        %v1614 = vunpack.c.l.b16 %v414
        %v1615 = vunpack.c.h.b16 %v414
        %v1616 = vunpack.c.l.b16 %v415
        %v1617 = vunpack.c.h.b16 %v415
        %v1618 = vunpack.c.l.b16 %v416
        %v1619 = vunpack.c.h.b16 %v416
        %v1620 = vunpack.c.l.b16 %v417
        %v1621 = vunpack.c.h.b16 %v417
        %v1622 = vunpack.c.l.b16 %v418
        %v1623 = vunpack.c.h.b16 %v418
        %v1624 = vunpack.c.l.b16 %v419
        %v1625 = vunpack.c.h.b16 %v419
        %v1626 = vunpack.c.l.b16 %v420
        %v1627 = vunpack.c.h.b16 %v420
        %v1628 = vunpack.c.l.b16 %v421
        %v1629 = vunpack.c.h.b16 %v421
        %v1630 = vunpack.c.l.b16 %v422
        %v1631 = vunpack.c.h.b16 %v422
        %v1632 = vunpack.c.l.b16 %v423
        %v1633 = vunpack.c.h.b16 %v423
        %v1634 = vunpack.c.l.b16 %v424
        %v1635 = vunpack.c.h.b16 %v424
        %v1636 = vunpack.c.l.b16 %v425
        %v1637 = vunpack.c.h.b16 %v425
        %v1638 = vunpack.c.l.b16 %v426
        %v1639 = vunpack.c.h.b16 %v426
        %v1640 = vunpack.c.l.b16 %v427
        %v1641 = vunpack.c.h.b16 %v427
        %v1642 = vunpack.c.l.b16 %v428
        %v1643 = vunpack.c.h.b16 %v428
        %v1644 = vunpack.c.l.b16 %v429
        %v1645 = vunpack.c.h.b16 %v429
        %v1646 = vunpack.c.l.b16 %v430
        %v1647 = vunpack.c.h.b16 %v430
        %v1648 = vunpack.c.l.b16 %v431
        %v1649 = vunpack.c.h.b16 %v431
        %v1650 = vunpack.c.l.b16 %v432
        %v1651 = vunpack.c.h.b16 %v432
        %v1652 = vunpack.c.l.b16 %v433
        %v1653 = vunpack.c.h.b16 %v433
        %v1654 = vunpack.c.l.b16 %v434
        %v1655 = vunpack.c.h.b16 %v434
        %v1656 = vunpack.c.l.b16 %v435
        %v1657 = vunpack.c.h.b16 %v435
        %v1658 = vunpack.c.l.b16 %v436
        %v1659 = vunpack.c.h.b16 %v436
        %v1660 = vunpack.c.l.b16 %v437
        %v1661 = vunpack.c.h.b16 %v437
        %v1662 = vpack.c.b16 %v1638, %v1614
        %v1663 = vpack.c.b16 %v1639, %v1615
        %v1664 = vpack.c.b16 %v1640, %v1616
        %v1665 = vpack.c.b16 %v1641, %v1617
        %v1666 = vpack.c.b16 %v1642, %v1618
        %v1667 = vpack.c.b16 %v1643, %v1619
        %v1668 = vpack.c.b16 %v1644, %v1620
        %v1669 = vpack.c.b16 %v1645, %v1621
        %v1670 = vpack.c.b16 %v1646, %v1622
        %v1671 = vpack.c.b16 %v1647, %v1623
        %v1672 = vpack.c.b16 %v1648, %v1624
        %v1673 = vpack.c.b16 %v1649, %v1625
        %v1674 = vpack.c.b16 %v1650, %v1626
        %v1675 = vpack.c.b16 %v1651, %v1627
        %v1676 = vpack.c.b16 %v1652, %v1628
        %v1677 = vpack.c.b16 %v1653, %v1629
        %v1678 = vpack.c.b16 %v1654, %v1630
        %v1679 = vpack.c.b16 %v1655, %v1631
        %v1680 = vpack.c.b16 %v1656, %v1632
        %v1681 = vpack.c.b16 %v1657, %v1633
        %v1682 = vpack.c.b16 %v1658, %v1634
        %v1683 = vpack.c.b16 %v1659, %v1635
        %v1684 = vpack.c.b16 %v1660, %v1636
        %v1685 = vpack.c.b16 %v1661, %v1637
        %1710 = vmatprep.subr.bf16.mxu0 %v823
        %1711 = vmatpush1.bf16.msra.mxu0 %v822
        %1712 = vmatprep.subr.bf16.mxu0 %v827
        %1713 = vmatpush1.bf16.msra.mxu0 %v826
        %1714 = vmatprep.subr.bf16.mxu0 %v831
        %1715 = vmatpush1.bf16.msra.mxu0 %v830
        %1716 = vmatprep.subr.bf16.mxu0 %v835
        %1717 = vmatpush1.bf16.msra.mxu0 %v834
        %1718 = vmatprep.subr.bf16.mxu0 %v839
        %1719 = vmatpush1.bf16.msra.mxu0 %v838
        %1720 = vmatprep.subr.bf16.mxu0 %v843
        %1721 = vmatpush1.bf16.msra.mxu0 %v842
        %1722 = vmatprep.subr.bf16.mxu0 %v847
        %1723 = vmatpush1.bf16.msra.mxu0 %v846
        %1724 = vmatprep.subr.bf16.mxu0 %v851
        %1725 = vmatpush1.bf16.msra.mxu0 %v850
        %1726 = vmatprep.subr.bf16.mxu0 %v855
        %1727 = vmatpush1.bf16.msra.mxu0 %v854
        %1728 = vmatprep.subr.bf16.mxu0 %v859
        %1729 = vmatpush1.bf16.msra.mxu0 %v858
        %1730 = vmatprep.subr.bf16.mxu0 %v863
        %1731 = vmatpush1.bf16.msra.mxu0 %v862
        %1732 = vmatprep.subr.bf16.mxu0 %v867
        %1733 = vmatpush1.bf16.msra.mxu0 %v866
        %1734 = vmatprep.subr.bf16.mxu0 %v871
        %1735 = vmatpush1.bf16.msra.mxu0 %v870
        %1736 = vmatprep.subr.bf16.mxu0 %v875
        %1737 = vmatpush1.bf16.msra.mxu0 %v874
        %1738 = vmatprep.subr.bf16.mxu0 %v879
        %1739 = vmatpush1.bf16.msra.mxu0 %v878
        %1740 = vmatprep.subr.bf16.mxu0 %v883
        %1741 = vmatpush1.bf16.msra.mxu0 %v882
        %1742 = vmatprep.mubr.bf16.mxu0 %v1663
        %1743 = vmatmul.mubr.bf16.gmra.mrb[0].mxu0 %v1662
        %v1744 = vpop.f32.mrb[0].mxu0
        %v1745 = vadd.f32 0.0, %v1744
        %v1746 = vpop.f32.mrb[0].mxu0
        %v1747 = vadd.f32 0.0, %v1746
        %v1748 = vpop.f32.mrb[0].mxu0
        %v1749 = vadd.f32 0.0, %v1748
        %v1750 = vpop.f32.mrb[0].mxu0
        %v1751 = vadd.f32 0.0, %v1750
        %1752 = vdwg.mxu0
        %1753 = vmatprep.subr.bf16.mxu0 %v887
        %1754 = vmatpush1.bf16.msra.mxu0 %v886
        %1755 = vmatprep.subr.bf16.mxu0 %v891
        %1756 = vmatpush1.bf16.msra.mxu0 %v890
        %1757 = vmatprep.subr.bf16.mxu0 %v895
        %1758 = vmatpush1.bf16.msra.mxu0 %v894
        %1759 = vmatprep.subr.bf16.mxu0 %v899
        %1760 = vmatpush1.bf16.msra.mxu0 %v898
        %1761 = vmatprep.subr.bf16.mxu0 %v903
        %1762 = vmatpush1.bf16.msra.mxu0 %v902
        %1763 = vmatprep.subr.bf16.mxu0 %v907
        %1764 = vmatpush1.bf16.msra.mxu0 %v906
        %1765 = vmatprep.subr.bf16.mxu0 %v911
        %1766 = vmatpush1.bf16.msra.mxu0 %v910
        %1767 = vmatprep.subr.bf16.mxu0 %v915
        %1768 = vmatpush1.bf16.msra.mxu0 %v914
        %1769 = vmatprep.subr.bf16.mxu0 %v919
        %1770 = vmatpush1.bf16.msra.mxu0 %v918
        %1771 = vmatprep.subr.bf16.mxu0 %v923
        %1772 = vmatpush1.bf16.msra.mxu0 %v922
        %1773 = vmatprep.subr.bf16.mxu0 %v927
        %1774 = vmatpush1.bf16.msra.mxu0 %v926
        %1775 = vmatprep.subr.bf16.mxu0 %v931
        %1776 = vmatpush1.bf16.msra.mxu0 %v930
        %1777 = vmatprep.subr.bf16.mxu0 %v935
        %1778 = vmatpush1.bf16.msra.mxu0 %v934
        %1779 = vmatprep.subr.bf16.mxu0 %v939
        %1780 = vmatpush1.bf16.msra.mxu0 %v938
        %1781 = vmatprep.subr.bf16.mxu0 %v943
        %1782 = vmatpush1.bf16.msra.mxu0 %v942
        %1783 = vmatprep.subr.bf16.mxu0 %v947
        %1784 = vmatpush1.bf16.msra.mxu0 %v946
        %1785 = vmatprep.mubr.bf16.mxu0 %v1665
        %1786 = vmatmul.mubr.bf16.gmra.mrb[0].mxu0 %v1664
        %v1787 = vpop.f32.mrb[0].mxu0
        %v1788 = vadd.f32 %v1745, %v1787
        %v1789 = vpop.f32.mrb[0].mxu0
        %v1790 = vadd.f32 %v1747, %v1789
        %v1791 = vpop.f32.mrb[0].mxu0
        %v1792 = vadd.f32 %v1749, %v1791
        %v1793 = vpop.f32.mrb[0].mxu0
        %v1794 = vadd.f32 %v1751, %v1793
        %1795 = vdwg.mxu0
        %1796 = vmatprep.subr.bf16.mxu0 %v951
        %1797 = vmatpush1.bf16.msra.mxu0 %v950
        %1798 = vmatprep.subr.bf16.mxu0 %v955
        %1799 = vmatpush1.bf16.msra.mxu0 %v954
        %1800 = vmatprep.subr.bf16.mxu0 %v959
        %1801 = vmatpush1.bf16.msra.mxu0 %v958
        %1802 = vmatprep.subr.bf16.mxu0 %v963
        %1803 = vmatpush1.bf16.msra.mxu0 %v962
        %1804 = vmatprep.subr.bf16.mxu0 %v967
        %1805 = vmatpush1.bf16.msra.mxu0 %v966
        %1806 = vmatprep.subr.bf16.mxu0 %v971
        %1807 = vmatpush1.bf16.msra.mxu0 %v970
        %1808 = vmatprep.subr.bf16.mxu0 %v975
        %1809 = vmatpush1.bf16.msra.mxu0 %v974
        %1810 = vmatprep.subr.bf16.mxu0 %v979
        %1811 = vmatpush1.bf16.msra.mxu0 %v978
        %1812 = vmatprep.subr.bf16.mxu0 %v983
        %1813 = vmatpush1.bf16.msra.mxu0 %v982
        %1814 = vmatprep.subr.bf16.mxu0 %v987
        %1815 = vmatpush1.bf16.msra.mxu0 %v986
        %1816 = vmatprep.subr.bf16.mxu0 %v991
        %1817 = vmatpush1.bf16.msra.mxu0 %v990
        %1818 = vmatprep.subr.bf16.mxu0 %v995
        %1819 = vmatpush1.bf16.msra.mxu0 %v994
        %1820 = vmatprep.subr.bf16.mxu0 %v999
        %1821 = vmatpush1.bf16.msra.mxu0 %v998
        %1822 = vmatprep.subr.bf16.mxu0 %v1003
        %1823 = vmatpush1.bf16.msra.mxu0 %v1002
        %1824 = vmatprep.subr.bf16.mxu0 %v1007
        %1825 = vmatpush1.bf16.msra.mxu0 %v1006
        %1826 = vmatprep.subr.bf16.mxu0 %v1011
        %1827 = vmatpush1.bf16.msra.mxu0 %v1010
        %1828 = vmatprep.mubr.bf16.mxu0 %v1667
        %1829 = vmatmul.mubr.bf16.gmra.mrb[0].mxu0 %v1666
        %v1830 = vpop.f32.mrb[0].mxu0
        %v1831 = vadd.f32 %v1788, %v1830
        %v1832 = vpop.f32.mrb[0].mxu0
        %v1833 = vadd.f32 %v1790, %v1832
        %v1834 = vpop.f32.mrb[0].mxu0
        %v1835 = vadd.f32 %v1792, %v1834
        %v1836 = vpop.f32.mrb[0].mxu0
        %v1837 = vadd.f32 %v1794, %v1836
        %1838 = vdwg.mxu0
        %1839 = vmatprep.subr.bf16.mxu0 %v1015
        %1840 = vmatpush1.bf16.msra.mxu0 %v1014
        %1841 = vmatprep.subr.bf16.mxu0 %v1019
        %1842 = vmatpush1.bf16.msra.mxu0 %v1018
        %1843 = vmatprep.subr.bf16.mxu0 %v1023
        %1844 = vmatpush1.bf16.msra.mxu0 %v1022
        %1845 = vmatprep.subr.bf16.mxu0 %v1027
        %1846 = vmatpush1.bf16.msra.mxu0 %v1026
        %1847 = vmatprep.subr.bf16.mxu0 %v1031
        %1848 = vmatpush1.bf16.msra.mxu0 %v1030
        %1849 = vmatprep.subr.bf16.mxu0 %v1035
        %1850 = vmatpush1.bf16.msra.mxu0 %v1034
        %1851 = vmatprep.subr.bf16.mxu0 %v1039
        %1852 = vmatpush1.bf16.msra.mxu0 %v1038
        %1853 = vmatprep.subr.bf16.mxu0 %v1043
        %1854 = vmatpush1.bf16.msra.mxu0 %v1042
        %1855 = vmatprep.subr.bf16.mxu0 %v1047
        %1856 = vmatpush1.bf16.msra.mxu0 %v1046
        %1857 = vmatprep.subr.bf16.mxu0 %v1051
        %1858 = vmatpush1.bf16.msra.mxu0 %v1050
        %1859 = vmatprep.subr.bf16.mxu0 %v1055
        %1860 = vmatpush1.bf16.msra.mxu0 %v1054
        %1861 = vmatprep.subr.bf16.mxu0 %v1059
        %1862 = vmatpush1.bf16.msra.mxu0 %v1058
        %1863 = vmatprep.subr.bf16.mxu0 %v1063
        %1864 = vmatpush1.bf16.msra.mxu0 %v1062
        %1865 = vmatprep.subr.bf16.mxu0 %v1067
        %1866 = vmatpush1.bf16.msra.mxu0 %v1066
        %1867 = vmatprep.subr.bf16.mxu0 %v1071
        %1868 = vmatpush1.bf16.msra.mxu0 %v1070
        %1869 = vmatprep.subr.bf16.mxu0 %v1075
        %1870 = vmatpush1.bf16.msra.mxu0 %v1074
        %1871 = vmatprep.mubr.bf16.mxu0 %v1669
        %1872 = vmatmul.mubr.bf16.gmra.mrb[0].mxu0 %v1668
        %v1873 = vpop.f32.mrb[0].mxu0
        %v1874 = vadd.f32 %v1831, %v1873
        %v1875 = vpop.f32.mrb[0].mxu0
        %v1876 = vadd.f32 %v1833, %v1875
        %v1877 = vpop.f32.mrb[0].mxu0
        %v1878 = vadd.f32 %v1835, %v1877
        %v1879 = vpop.f32.mrb[0].mxu0
        %v1880 = vadd.f32 %v1837, %v1879
        %1881 = vdwg.mxu0
        %1882 = vmatprep.subr.bf16.mxu0 %v1079
        %1883 = vmatpush1.bf16.msra.mxu0 %v1078
        %1884 = vmatprep.subr.bf16.mxu0 %v1083
        %1885 = vmatpush1.bf16.msra.mxu0 %v1082
        %1886 = vmatprep.subr.bf16.mxu0 %v1087
        %1887 = vmatpush1.bf16.msra.mxu0 %v1086
        %1888 = vmatprep.subr.bf16.mxu0 %v1091
        %1889 = vmatpush1.bf16.msra.mxu0 %v1090
        %1890 = vmatprep.subr.bf16.mxu0 %v1095
        %1891 = vmatpush1.bf16.msra.mxu0 %v1094
        %1892 = vmatprep.subr.bf16.mxu0 %v1099
        %1893 = vmatpush1.bf16.msra.mxu0 %v1098
        %1894 = vmatprep.subr.bf16.mxu0 %v1103
        %1895 = vmatpush1.bf16.msra.mxu0 %v1102
        %1896 = vmatprep.subr.bf16.mxu0 %v1107
        %1897 = vmatpush1.bf16.msra.mxu0 %v1106
        %1898 = vmatprep.subr.bf16.mxu0 %v1111
        %1899 = vmatpush1.bf16.msra.mxu0 %v1110
        %1900 = vmatprep.subr.bf16.mxu0 %v1115
        %1901 = vmatpush1.bf16.msra.mxu0 %v1114
        %1902 = vmatprep.subr.bf16.mxu0 %v1119
        %1903 = vmatpush1.bf16.msra.mxu0 %v1118
        %1904 = vmatprep.subr.bf16.mxu0 %v1123
        %1905 = vmatpush1.bf16.msra.mxu0 %v1122
        %1906 = vmatprep.subr.bf16.mxu0 %v1127
        %1907 = vmatpush1.bf16.msra.mxu0 %v1126
        %1908 = vmatprep.subr.bf16.mxu0 %v1131
        %1909 = vmatpush1.bf16.msra.mxu0 %v1130
        %1910 = vmatprep.subr.bf16.mxu0 %v1135
        %1911 = vmatpush1.bf16.msra.mxu0 %v1134
        %1912 = vmatprep.subr.bf16.mxu0 %v1139
        %1913 = vmatpush1.bf16.msra.mxu0 %v1138
        %1914 = vmatprep.mubr.bf16.mxu0 %v1671
        %1915 = vmatmul.mubr.bf16.gmra.mrb[0].mxu0 %v1670
        %v1916 = vpop.f32.mrb[0].mxu0
        %v1917 = vadd.f32 %v1874, %v1916
        %v1918 = vpop.f32.mrb[0].mxu0
        %v1919 = vadd.f32 %v1876, %v1918
        %v1920 = vpop.f32.mrb[0].mxu0
        %v1921 = vadd.f32 %v1878, %v1920
        %v1922 = vpop.f32.mrb[0].mxu0
        %v1923 = vadd.f32 %v1880, %v1922
        %1924 = vdwg.mxu0
        %1925 = vmatprep.subr.bf16.mxu0 %v1143
        %1926 = vmatpush1.bf16.msra.mxu0 %v1142
        %1927 = vmatprep.subr.bf16.mxu0 %v1147
        %1928 = vmatpush1.bf16.msra.mxu0 %v1146
        %1929 = vmatprep.subr.bf16.mxu0 %v1151
        %1930 = vmatpush1.bf16.msra.mxu0 %v1150
        %1931 = vmatprep.subr.bf16.mxu0 %v1155
        %1932 = vmatpush1.bf16.msra.mxu0 %v1154
        %1933 = vmatprep.subr.bf16.mxu0 %v1159
        %1934 = vmatpush1.bf16.msra.mxu0 %v1158
        %1935 = vmatprep.subr.bf16.mxu0 %v1163
        %1936 = vmatpush1.bf16.msra.mxu0 %v1162
        %1937 = vmatprep.subr.bf16.mxu0 %v1167
        %1938 = vmatpush1.bf16.msra.mxu0 %v1166
        %1939 = vmatprep.subr.bf16.mxu0 %v1171
        %1940 = vmatpush1.bf16.msra.mxu0 %v1170
        %1941 = vmatprep.subr.bf16.mxu0 %v1175
        %1942 = vmatpush1.bf16.msra.mxu0 %v1174
        %1943 = vmatprep.subr.bf16.mxu0 %v1179
        %1944 = vmatpush1.bf16.msra.mxu0 %v1178
        %1945 = vmatprep.subr.bf16.mxu0 %v1183
        %1946 = vmatpush1.bf16.msra.mxu0 %v1182
        %1947 = vmatprep.subr.bf16.mxu0 %v1187
        %1948 = vmatpush1.bf16.msra.mxu0 %v1186
        %1949 = vmatprep.subr.bf16.mxu0 %v1191
        %1950 = vmatpush1.bf16.msra.mxu0 %v1190
        %1951 = vmatprep.subr.bf16.mxu0 %v1195
        %1952 = vmatpush1.bf16.msra.mxu0 %v1194
        %1953 = vmatprep.subr.bf16.mxu0 %v1199
        %1954 = vmatpush1.bf16.msra.mxu0 %v1198
        %1955 = vmatprep.subr.bf16.mxu0 %v1203
        %1956 = vmatpush1.bf16.msra.mxu0 %v1202
        %1957 = vmatprep.mubr.bf16.mxu0 %v1673
        %1958 = vmatmul.mubr.bf16.gmra.mrb[0].mxu0 %v1672
        %v1959 = vpop.f32.mrb[0].mxu0
        %v1960 = vadd.f32 %v1917, %v1959
        %v1961 = vpop.f32.mrb[0].mxu0
        %v1962 = vadd.f32 %v1919, %v1961
        %v1963 = vpop.f32.mrb[0].mxu0
        %v1964 = vadd.f32 %v1921, %v1963
        %v1965 = vpop.f32.mrb[0].mxu0
        %v1966 = vadd.f32 %v1923, %v1965
        %1967 = vdwg.mxu0
        %1968 = vmatprep.subr.bf16.mxu0 %v1207
        %1969 = vmatpush1.bf16.msra.mxu0 %v1206
        %1970 = vmatprep.subr.bf16.mxu0 %v1211
        %1971 = vmatpush1.bf16.msra.mxu0 %v1210
        %1972 = vmatprep.subr.bf16.mxu0 %v1215
        %1973 = vmatpush1.bf16.msra.mxu0 %v1214
        %1974 = vmatprep.subr.bf16.mxu0 %v1219
        %1975 = vmatpush1.bf16.msra.mxu0 %v1218
        %1976 = vmatprep.subr.bf16.mxu0 %v1223
        %1977 = vmatpush1.bf16.msra.mxu0 %v1222
        %1978 = vmatprep.subr.bf16.mxu0 %v1227
        %1979 = vmatpush1.bf16.msra.mxu0 %v1226
        %1980 = vmatprep.subr.bf16.mxu0 %v1231
        %1981 = vmatpush1.bf16.msra.mxu0 %v1230
        %1982 = vmatprep.subr.bf16.mxu0 %v1235
        %1983 = vmatpush1.bf16.msra.mxu0 %v1234
        %1984 = vmatprep.subr.bf16.mxu0 %v1239
        %1985 = vmatpush1.bf16.msra.mxu0 %v1238
        %1986 = vmatprep.subr.bf16.mxu0 %v1243
        %1987 = vmatpush1.bf16.msra.mxu0 %v1242
        %1988 = vmatprep.subr.bf16.mxu0 %v1247
        %1989 = vmatpush1.bf16.msra.mxu0 %v1246
        %1990 = vmatprep.subr.bf16.mxu0 %v1251
        %1991 = vmatpush1.bf16.msra.mxu0 %v1250
        %1992 = vmatprep.subr.bf16.mxu0 %v1255
        %1993 = vmatpush1.bf16.msra.mxu0 %v1254
        %1994 = vmatprep.subr.bf16.mxu0 %v1259
        %1995 = vmatpush1.bf16.msra.mxu0 %v1258
        %1996 = vmatprep.subr.bf16.mxu0 %v1263
        %1997 = vmatpush1.bf16.msra.mxu0 %v1262
        %1998 = vmatprep.subr.bf16.mxu0 %v1267
        %1999 = vmatpush1.bf16.msra.mxu0 %v1266
        %2000 = vmatprep.mubr.bf16.mxu0 %v1675
        %2001 = vmatmul.mubr.bf16.gmra.mrb[0].mxu0 %v1674
        %v2002 = vpop.f32.mrb[0].mxu0
        %v2003 = vadd.f32 %v1960, %v2002
        %v2004 = vpop.f32.mrb[0].mxu0
        %v2005 = vadd.f32 %v1962, %v2004
        %v2006 = vpop.f32.mrb[0].mxu0
        %v2007 = vadd.f32 %v1964, %v2006
        %v2008 = vpop.f32.mrb[0].mxu0
        %v2009 = vadd.f32 %v1966, %v2008
        %2010 = vdwg.mxu0
        %2011 = vmatprep.subr.bf16.mxu0 %v1271
        %2012 = vmatpush1.bf16.msra.mxu0 %v1270
        %2013 = vmatprep.subr.bf16.mxu0 %v1275
        %2014 = vmatpush1.bf16.msra.mxu0 %v1274
        %2015 = vmatprep.subr.bf16.mxu0 %v1279
        %2016 = vmatpush1.bf16.msra.mxu0 %v1278
        %2017 = vmatprep.subr.bf16.mxu0 %v1283
        %2018 = vmatpush1.bf16.msra.mxu0 %v1282
        %2019 = vmatprep.subr.bf16.mxu0 %v1287
        %2020 = vmatpush1.bf16.msra.mxu0 %v1286
        %2021 = vmatprep.subr.bf16.mxu0 %v1291
        %2022 = vmatpush1.bf16.msra.mxu0 %v1290
        %2023 = vmatprep.subr.bf16.mxu0 %v1295
        %2024 = vmatpush1.bf16.msra.mxu0 %v1294
        %2025 = vmatprep.subr.bf16.mxu0 %v1299
        %2026 = vmatpush1.bf16.msra.mxu0 %v1298
        %2027 = vmatprep.subr.bf16.mxu0 %v1303
        %2028 = vmatpush1.bf16.msra.mxu0 %v1302
        %2029 = vmatprep.subr.bf16.mxu0 %v1307
        %2030 = vmatpush1.bf16.msra.mxu0 %v1306
        %2031 = vmatprep.subr.bf16.mxu0 %v1311
        %2032 = vmatpush1.bf16.msra.mxu0 %v1310
        %2033 = vmatprep.subr.bf16.mxu0 %v1315
        %2034 = vmatpush1.bf16.msra.mxu0 %v1314
        %2035 = vmatprep.subr.bf16.mxu0 %v1319
        %2036 = vmatpush1.bf16.msra.mxu0 %v1318
        %2037 = vmatprep.subr.bf16.mxu0 %v1323
        %2038 = vmatpush1.bf16.msra.mxu0 %v1322
        %2039 = vmatprep.subr.bf16.mxu0 %v1327
        %2040 = vmatpush1.bf16.msra.mxu0 %v1326
        %2041 = vmatprep.subr.bf16.mxu0 %v1331
        %2042 = vmatpush1.bf16.msra.mxu0 %v1330
        %2043 = vmatprep.mubr.bf16.mxu0 %v1677
        %2044 = vmatmul.mubr.bf16.gmra.mrb[0].mxu0 %v1676
        %v2045 = vpop.f32.mrb[0].mxu0
        %v2046 = vadd.f32 %v2003, %v2045
        %v2047 = vpop.f32.mrb[0].mxu0
        %v2048 = vadd.f32 %v2005, %v2047
        %v2049 = vpop.f32.mrb[0].mxu0
        %v2050 = vadd.f32 %v2007, %v2049
        %v2051 = vpop.f32.mrb[0].mxu0
        %v2052 = vadd.f32 %v2009, %v2051
        %2053 = vdwg.mxu0
        %2054 = vmatprep.subr.bf16.mxu0 %v1335
        %2055 = vmatpush1.bf16.msra.mxu0 %v1334
        %2056 = vmatprep.subr.bf16.mxu0 %v1339
        %2057 = vmatpush1.bf16.msra.mxu0 %v1338
        %2058 = vmatprep.subr.bf16.mxu0 %v1343
        %2059 = vmatpush1.bf16.msra.mxu0 %v1342
        %2060 = vmatprep.subr.bf16.mxu0 %v1347
        %2061 = vmatpush1.bf16.msra.mxu0 %v1346
        %2062 = vmatprep.subr.bf16.mxu0 %v1351
        %2063 = vmatpush1.bf16.msra.mxu0 %v1350
        %2064 = vmatprep.subr.bf16.mxu0 %v1355
        %2065 = vmatpush1.bf16.msra.mxu0 %v1354
        %2066 = vmatprep.subr.bf16.mxu0 %v1359
        %2067 = vmatpush1.bf16.msra.mxu0 %v1358
        %2068 = vmatprep.subr.bf16.mxu0 %v1363
        %2069 = vmatpush1.bf16.msra.mxu0 %v1362
        %2070 = vmatprep.subr.bf16.mxu0 %v1367
        %2071 = vmatpush1.bf16.msra.mxu0 %v1366
        %2072 = vmatprep.subr.bf16.mxu0 %v1371
        %2073 = vmatpush1.bf16.msra.mxu0 %v1370
        %2074 = vmatprep.subr.bf16.mxu0 %v1375
        %2075 = vmatpush1.bf16.msra.mxu0 %v1374
        %2076 = vmatprep.subr.bf16.mxu0 %v1379
        %2077 = vmatpush1.bf16.msra.mxu0 %v1378
        %2078 = vmatprep.subr.bf16.mxu0 %v1383
        %2079 = vmatpush1.bf16.msra.mxu0 %v1382
        %2080 = vmatprep.subr.bf16.mxu0 %v1387
        %2081 = vmatpush1.bf16.msra.mxu0 %v1386
        %2082 = vmatprep.subr.bf16.mxu0 %v1391
        %2083 = vmatpush1.bf16.msra.mxu0 %v1390
        %2084 = vmatprep.subr.bf16.mxu0 %v1395
        %2085 = vmatpush1.bf16.msra.mxu0 %v1394
        %2086 = vmatprep.mubr.bf16.mxu0 %v1679
        %2087 = vmatmul.mubr.bf16.gmra.mrb[0].mxu0 %v1678
        %v2088 = vpop.f32.mrb[0].mxu0
        %v2089 = vadd.f32 %v2046, %v2088
        %v2090 = vpop.f32.mrb[0].mxu0
        %v2091 = vadd.f32 %v2048, %v2090
        %v2092 = vpop.f32.mrb[0].mxu0
        %v2093 = vadd.f32 %v2050, %v2092
        %v2094 = vpop.f32.mrb[0].mxu0
        %v2095 = vadd.f32 %v2052, %v2094
        %2096 = vdwg.mxu0
        %2097 = vmatprep.subr.bf16.mxu0 %v1399
        %2098 = vmatpush1.bf16.msra.mxu0 %v1398
        %2099 = vmatprep.subr.bf16.mxu0 %v1403
        %2100 = vmatpush1.bf16.msra.mxu0 %v1402
        %2101 = vmatprep.subr.bf16.mxu0 %v1407
        %2102 = vmatpush1.bf16.msra.mxu0 %v1406
        %2103 = vmatprep.subr.bf16.mxu0 %v1411
        %2104 = vmatpush1.bf16.msra.mxu0 %v1410
        %2105 = vmatprep.subr.bf16.mxu0 %v1415
        %2106 = vmatpush1.bf16.msra.mxu0 %v1414
        %2107 = vmatprep.subr.bf16.mxu0 %v1419
        %2108 = vmatpush1.bf16.msra.mxu0 %v1418
        %2109 = vmatprep.subr.bf16.mxu0 %v1423
        %2110 = vmatpush1.bf16.msra.mxu0 %v1422
        %2111 = vmatprep.subr.bf16.mxu0 %v1427
        %2112 = vmatpush1.bf16.msra.mxu0 %v1426
        %2113 = vmatprep.subr.bf16.mxu0 %v1431
        %2114 = vmatpush1.bf16.msra.mxu0 %v1430
        %2115 = vmatprep.subr.bf16.mxu0 %v1435
        %2116 = vmatpush1.bf16.msra.mxu0 %v1434
        %2117 = vmatprep.subr.bf16.mxu0 %v1439
        %2118 = vmatpush1.bf16.msra.mxu0 %v1438
        %2119 = vmatprep.subr.bf16.mxu0 %v1443
        %2120 = vmatpush1.bf16.msra.mxu0 %v1442
        %2121 = vmatprep.subr.bf16.mxu0 %v1447
        %2122 = vmatpush1.bf16.msra.mxu0 %v1446
        %2123 = vmatprep.subr.bf16.mxu0 %v1451
        %2124 = vmatpush1.bf16.msra.mxu0 %v1450
        %2125 = vmatprep.subr.bf16.mxu0 %v1455
        %2126 = vmatpush1.bf16.msra.mxu0 %v1454
        %2127 = vmatprep.subr.bf16.mxu0 %v1459
        %2128 = vmatpush1.bf16.msra.mxu0 %v1458
        %2129 = vmatprep.mubr.bf16.mxu0 %v1681
        %2130 = vmatmul.mubr.bf16.gmra.mrb[0].mxu0 %v1680
        %v2131 = vpop.f32.mrb[0].mxu0
        %v2132 = vadd.f32 %v2089, %v2131
        %v2133 = vpop.f32.mrb[0].mxu0
        %v2134 = vadd.f32 %v2091, %v2133
        %v2135 = vpop.f32.mrb[0].mxu0
        %v2136 = vadd.f32 %v2093, %v2135
        %v2137 = vpop.f32.mrb[0].mxu0
        %v2138 = vadd.f32 %v2095, %v2137
        %2139 = vdwg.mxu0
        %2140 = vmatprep.subr.bf16.mxu0 %v1463
        %2141 = vmatpush1.bf16.msra.mxu0 %v1462
        %2142 = vmatprep.subr.bf16.mxu0 %v1467
        %2143 = vmatpush1.bf16.msra.mxu0 %v1466
        %2144 = vmatprep.subr.bf16.mxu0 %v1471
        %2145 = vmatpush1.bf16.msra.mxu0 %v1470
        %2146 = vmatprep.subr.bf16.mxu0 %v1475
        %2147 = vmatpush1.bf16.msra.mxu0 %v1474
        %2148 = vmatprep.subr.bf16.mxu0 %v1479
        %2149 = vmatpush1.bf16.msra.mxu0 %v1478
        %2150 = vmatprep.subr.bf16.mxu0 %v1483
        %2151 = vmatpush1.bf16.msra.mxu0 %v1482
        %2152 = vmatprep.subr.bf16.mxu0 %v1487
        %2153 = vmatpush1.bf16.msra.mxu0 %v1486
        %2154 = vmatprep.subr.bf16.mxu0 %v1491
        %2155 = vmatpush1.bf16.msra.mxu0 %v1490
        %2156 = vmatprep.subr.bf16.mxu0 %v1495
        %2157 = vmatpush1.bf16.msra.mxu0 %v1494
        %2158 = vmatprep.subr.bf16.mxu0 %v1499
        %2159 = vmatpush1.bf16.msra.mxu0 %v1498
        %2160 = vmatprep.subr.bf16.mxu0 %v1503
        %2161 = vmatpush1.bf16.msra.mxu0 %v1502
        %2162 = vmatprep.subr.bf16.mxu0 %v1507
        %2163 = vmatpush1.bf16.msra.mxu0 %v1506
        %2164 = vmatprep.subr.bf16.mxu0 %v1511
        %2165 = vmatpush1.bf16.msra.mxu0 %v1510
        %2166 = vmatprep.subr.bf16.mxu0 %v1515
        %2167 = vmatpush1.bf16.msra.mxu0 %v1514
        %2168 = vmatprep.subr.bf16.mxu0 %v1519
        %2169 = vmatpush1.bf16.msra.mxu0 %v1518
        %2170 = vmatprep.subr.bf16.mxu0 %v1523
        %2171 = vmatpush1.bf16.msra.mxu0 %v1522
        %2172 = vmatprep.mubr.bf16.mxu0 %v1683
        %2173 = vmatmul.mubr.bf16.gmra.mrb[0].mxu0 %v1682
        %v2174 = vpop.f32.mrb[0].mxu0
        %v2175 = vadd.f32 %v2132, %v2174
        %v2176 = vpop.f32.mrb[0].mxu0
        %v2177 = vadd.f32 %v2134, %v2176
        %v2178 = vpop.f32.mrb[0].mxu0
        %v2179 = vadd.f32 %v2136, %v2178
        %v2180 = vpop.f32.mrb[0].mxu0
        %v2181 = vadd.f32 %v2138, %v2180
        %2182 = vdwg.mxu0
        %2183 = vmatprep.subr.bf16.mxu0 %v1527
        %2184 = vmatpush1.bf16.msra.mxu0 %v1526
        %2185 = vmatprep.subr.bf16.mxu0 %v1531
        %2186 = vmatpush1.bf16.msra.mxu0 %v1530
        %2187 = vmatprep.subr.bf16.mxu0 %v1535
        %2188 = vmatpush1.bf16.msra.mxu0 %v1534
        %2189 = vmatprep.subr.bf16.mxu0 %v1539
        %2190 = vmatpush1.bf16.msra.mxu0 %v1538
        %2191 = vmatprep.subr.bf16.mxu0 %v1543
        %2192 = vmatpush1.bf16.msra.mxu0 %v1542
        %2193 = vmatprep.subr.bf16.mxu0 %v1547
        %2194 = vmatpush1.bf16.msra.mxu0 %v1546
        %2195 = vmatprep.subr.bf16.mxu0 %v1551
        %2196 = vmatpush1.bf16.msra.mxu0 %v1550
        %2197 = vmatprep.subr.bf16.mxu0 %v1555
        %2198 = vmatpush1.bf16.msra.mxu0 %v1554
        %2199 = vmatprep.subr.bf16.mxu0 %v1559
        %2200 = vmatpush1.bf16.msra.mxu0 %v1558
        %2201 = vmatprep.subr.bf16.mxu0 %v1563
        %2202 = vmatpush1.bf16.msra.mxu0 %v1562
        %2203 = vmatprep.subr.bf16.mxu0 %v1567
        %2204 = vmatpush1.bf16.msra.mxu0 %v1566
        %2205 = vmatprep.subr.bf16.mxu0 %v1571
        %2206 = vmatpush1.bf16.msra.mxu0 %v1570
        %2207 = vmatprep.subr.bf16.mxu0 %v1575
        %2208 = vmatpush1.bf16.msra.mxu0 %v1574
        %2209 = vmatprep.subr.bf16.mxu0 %v1579
        %2210 = vmatpush1.bf16.msra.mxu0 %v1578
        %2211 = vmatprep.subr.bf16.mxu0 %v1583
        %2212 = vmatpush1.bf16.msra.mxu0 %v1582
        %2213 = vmatprep.subr.bf16.mxu0 %v1587
        %2214 = vmatpush1.bf16.msra.mxu0 %v1586
        %2215 = vmatprep.mubr.bf16.mxu0 %v1685
        %2216 = vmatmul.mubr.bf16.gmra.mrb[0].mxu0 %v1684
        %v2217 = vpop.f32.mrb[0].mxu0
        %v2218 = vadd.f32 %v2175, %v2217
        %v2219 = vpop.f32.mrb[0].mxu0
        %v2220 = vadd.f32 %v2177, %v2219
        %v2221 = vpop.f32.mrb[0].mxu0
        %v2222 = vadd.f32 %v2179, %v2221
        %v2223 = vpop.f32.mrb[0].mxu0
        %v2224 = vadd.f32 %v2181, %v2223
        %2225 = vdwg.mxu0
        %2226 = vmatprep.subr.bf16.mxu0 %v825
        %2227 = vmatpush1.bf16.msra.mxu0 %v824
        %2228 = vmatprep.subr.bf16.mxu0 %v829
        %2229 = vmatpush1.bf16.msra.mxu0 %v828
        %2230 = vmatprep.subr.bf16.mxu0 %v833
        %2231 = vmatpush1.bf16.msra.mxu0 %v832
        %2232 = vmatprep.subr.bf16.mxu0 %v837
        %2233 = vmatpush1.bf16.msra.mxu0 %v836
        %2234 = vmatprep.subr.bf16.mxu0 %v841
        %2235 = vmatpush1.bf16.msra.mxu0 %v840
        %2236 = vmatprep.subr.bf16.mxu0 %v845
        %2237 = vmatpush1.bf16.msra.mxu0 %v844
        %2238 = vmatprep.subr.bf16.mxu0 %v849
        %2239 = vmatpush1.bf16.msra.mxu0 %v848
        %2240 = vmatprep.subr.bf16.mxu0 %v853
        %2241 = vmatpush1.bf16.msra.mxu0 %v852
        %2242 = vmatprep.subr.bf16.mxu0 %v857
        %2243 = vmatpush1.bf16.msra.mxu0 %v856
        %2244 = vmatprep.subr.bf16.mxu0 %v861
        %2245 = vmatpush1.bf16.msra.mxu0 %v860
        %2246 = vmatprep.subr.bf16.mxu0 %v865
        %2247 = vmatpush1.bf16.msra.mxu0 %v864
        %2248 = vmatprep.subr.bf16.mxu0 %v869
        %2249 = vmatpush1.bf16.msra.mxu0 %v868
        %2250 = vmatprep.subr.bf16.mxu0 %v873
        %2251 = vmatpush1.bf16.msra.mxu0 %v872
        %2252 = vmatprep.subr.bf16.mxu0 %v877
        %2253 = vmatpush1.bf16.msra.mxu0 %v876
        %2254 = vmatprep.subr.bf16.mxu0 %v881
        %2255 = vmatpush1.bf16.msra.mxu0 %v880
        %2256 = vmatprep.subr.bf16.mxu0 %v885
        %2257 = vmatpush1.bf16.msra.mxu0 %v884
        %2258 = vmatprep.mubr.bf16.mxu0 %v1663
        %2259 = vmatmul.mubr.bf16.gmra.mrb[0].mxu0 %v1662
        %v2260 = vpop.f32.mrb[0].mxu0
        %v2261 = vadd.f32 0.0, %v2260
        %v2262 = vpop.f32.mrb[0].mxu0
        %v2263 = vadd.f32 0.0, %v2262
        %v2264 = vpop.f32.mrb[0].mxu0
        %v2265 = vadd.f32 0.0, %v2264
        %v2266 = vpop.f32.mrb[0].mxu0
        %v2267 = vadd.f32 0.0, %v2266
        %2268 = vdwg.mxu0
        %2269 = vmatprep.subr.bf16.mxu0 %v889
        %2270 = vmatpush1.bf16.msra.mxu0 %v888
        %2271 = vmatprep.subr.bf16.mxu0 %v893
        %2272 = vmatpush1.bf16.msra.mxu0 %v892
        %2273 = vmatprep.subr.bf16.mxu0 %v897
        %2274 = vmatpush1.bf16.msra.mxu0 %v896
        %2275 = vmatprep.subr.bf16.mxu0 %v901
        %2276 = vmatpush1.bf16.msra.mxu0 %v900
        %2277 = vmatprep.subr.bf16.mxu0 %v905
        %2278 = vmatpush1.bf16.msra.mxu0 %v904
        %2279 = vmatprep.subr.bf16.mxu0 %v909
        %2280 = vmatpush1.bf16.msra.mxu0 %v908
        %2281 = vmatprep.subr.bf16.mxu0 %v913
        %2282 = vmatpush1.bf16.msra.mxu0 %v912
        %2283 = vmatprep.subr.bf16.mxu0 %v917
        %2284 = vmatpush1.bf16.msra.mxu0 %v916
        %2285 = vmatprep.subr.bf16.mxu0 %v921
        %2286 = vmatpush1.bf16.msra.mxu0 %v920
        %2287 = vmatprep.subr.bf16.mxu0 %v925
        %2288 = vmatpush1.bf16.msra.mxu0 %v924
        %2289 = vmatprep.subr.bf16.mxu0 %v929
        %2290 = vmatpush1.bf16.msra.mxu0 %v928
        %2291 = vmatprep.subr.bf16.mxu0 %v933
        %2292 = vmatpush1.bf16.msra.mxu0 %v932
        %2293 = vmatprep.subr.bf16.mxu0 %v937
        %2294 = vmatpush1.bf16.msra.mxu0 %v936
        %2295 = vmatprep.subr.bf16.mxu0 %v941
        %2296 = vmatpush1.bf16.msra.mxu0 %v940
        %2297 = vmatprep.subr.bf16.mxu0 %v945
        %2298 = vmatpush1.bf16.msra.mxu0 %v944
        %2299 = vmatprep.subr.bf16.mxu0 %v949
        %2300 = vmatpush1.bf16.msra.mxu0 %v948
        %2301 = vmatprep.mubr.bf16.mxu0 %v1665
        %2302 = vmatmul.mubr.bf16.gmra.mrb[0].mxu0 %v1664
        %v2303 = vpop.f32.mrb[0].mxu0
        %v2304 = vadd.f32 %v2261, %v2303
        %v2305 = vpop.f32.mrb[0].mxu0
        %v2306 = vadd.f32 %v2263, %v2305
        %v2307 = vpop.f32.mrb[0].mxu0
        %v2308 = vadd.f32 %v2265, %v2307
        %v2309 = vpop.f32.mrb[0].mxu0
        %v2310 = vadd.f32 %v2267, %v2309
        %2311 = vdwg.mxu0
        %2312 = vmatprep.subr.bf16.mxu0 %v953
        %2313 = vmatpush1.bf16.msra.mxu0 %v952
        %2314 = vmatprep.subr.bf16.mxu0 %v957
        %2315 = vmatpush1.bf16.msra.mxu0 %v956
        %2316 = vmatprep.subr.bf16.mxu0 %v961
        %2317 = vmatpush1.bf16.msra.mxu0 %v960
        %2318 = vmatprep.subr.bf16.mxu0 %v965
        %2319 = vmatpush1.bf16.msra.mxu0 %v964
        %2320 = vmatprep.subr.bf16.mxu0 %v969
        %2321 = vmatpush1.bf16.msra.mxu0 %v968
        %2322 = vmatprep.subr.bf16.mxu0 %v973
        %2323 = vmatpush1.bf16.msra.mxu0 %v972
        %2324 = vmatprep.subr.bf16.mxu0 %v977
        %2325 = vmatpush1.bf16.msra.mxu0 %v976
        %2326 = vmatprep.subr.bf16.mxu0 %v981
        %2327 = vmatpush1.bf16.msra.mxu0 %v980
        %2328 = vmatprep.subr.bf16.mxu0 %v985
        %2329 = vmatpush1.bf16.msra.mxu0 %v984
        %2330 = vmatprep.subr.bf16.mxu0 %v989
        %2331 = vmatpush1.bf16.msra.mxu0 %v988
        %2332 = vmatprep.subr.bf16.mxu0 %v993
        %2333 = vmatpush1.bf16.msra.mxu0 %v992
        %2334 = vmatprep.subr.bf16.mxu0 %v997
        %2335 = vmatpush1.bf16.msra.mxu0 %v996
        %2336 = vmatprep.subr.bf16.mxu0 %v1001
        %2337 = vmatpush1.bf16.msra.mxu0 %v1000
        %2338 = vmatprep.subr.bf16.mxu0 %v1005
        %2339 = vmatpush1.bf16.msra.mxu0 %v1004
        %2340 = vmatprep.subr.bf16.mxu0 %v1009
        %2341 = vmatpush1.bf16.msra.mxu0 %v1008
        %2342 = vmatprep.subr.bf16.mxu0 %v1013
        %2343 = vmatpush1.bf16.msra.mxu0 %v1012
        %2344 = vmatprep.mubr.bf16.mxu0 %v1667
        %2345 = vmatmul.mubr.bf16.gmra.mrb[0].mxu0 %v1666
        %v2346 = vpop.f32.mrb[0].mxu0
        %v2347 = vadd.f32 %v2304, %v2346
        %v2348 = vpop.f32.mrb[0].mxu0
        %v2349 = vadd.f32 %v2306, %v2348
        %v2350 = vpop.f32.mrb[0].mxu0
        %v2351 = vadd.f32 %v2308, %v2350
        %v2352 = vpop.f32.mrb[0].mxu0
        %v2353 = vadd.f32 %v2310, %v2352
        %2354 = vdwg.mxu0
        %2355 = vmatprep.subr.bf16.mxu0 %v1017
        %2356 = vmatpush1.bf16.msra.mxu0 %v1016
        %2357 = vmatprep.subr.bf16.mxu0 %v1021
        %2358 = vmatpush1.bf16.msra.mxu0 %v1020
        %2359 = vmatprep.subr.bf16.mxu0 %v1025
        %2360 = vmatpush1.bf16.msra.mxu0 %v1024
        %2361 = vmatprep.subr.bf16.mxu0 %v1029
        %2362 = vmatpush1.bf16.msra.mxu0 %v1028
        %2363 = vmatprep.subr.bf16.mxu0 %v1033
        %2364 = vmatpush1.bf16.msra.mxu0 %v1032
        %2365 = vmatprep.subr.bf16.mxu0 %v1037
        %2366 = vmatpush1.bf16.msra.mxu0 %v1036
        %2367 = vmatprep.subr.bf16.mxu0 %v1041
        %2368 = vmatpush1.bf16.msra.mxu0 %v1040
        %2369 = vmatprep.subr.bf16.mxu0 %v1045
        %2370 = vmatpush1.bf16.msra.mxu0 %v1044
        %2371 = vmatprep.subr.bf16.mxu0 %v1049
        %2372 = vmatpush1.bf16.msra.mxu0 %v1048
        %2373 = vmatprep.subr.bf16.mxu0 %v1053
        %2374 = vmatpush1.bf16.msra.mxu0 %v1052
        %2375 = vmatprep.subr.bf16.mxu0 %v1057
        %2376 = vmatpush1.bf16.msra.mxu0 %v1056
        %2377 = vmatprep.subr.bf16.mxu0 %v1061
        %2378 = vmatpush1.bf16.msra.mxu0 %v1060
        %2379 = vmatprep.subr.bf16.mxu0 %v1065
        %2380 = vmatpush1.bf16.msra.mxu0 %v1064
        %2381 = vmatprep.subr.bf16.mxu0 %v1069
        %2382 = vmatpush1.bf16.msra.mxu0 %v1068
        %2383 = vmatprep.subr.bf16.mxu0 %v1073
        %2384 = vmatpush1.bf16.msra.mxu0 %v1072
        %2385 = vmatprep.subr.bf16.mxu0 %v1077
        %2386 = vmatpush1.bf16.msra.mxu0 %v1076
        %2387 = vmatprep.mubr.bf16.mxu0 %v1669
        %2388 = vmatmul.mubr.bf16.gmra.mrb[0].mxu0 %v1668
        %v2389 = vpop.f32.mrb[0].mxu0
        %v2390 = vadd.f32 %v2347, %v2389
        %v2391 = vpop.f32.mrb[0].mxu0
        %v2392 = vadd.f32 %v2349, %v2391
        %v2393 = vpop.f32.mrb[0].mxu0
        %v2394 = vadd.f32 %v2351, %v2393
        %v2395 = vpop.f32.mrb[0].mxu0
        %v2396 = vadd.f32 %v2353, %v2395
        %2397 = vdwg.mxu0
        %2398 = vmatprep.subr.bf16.mxu0 %v1081
        %2399 = vmatpush1.bf16.msra.mxu0 %v1080
        %2400 = vmatprep.subr.bf16.mxu0 %v1085
        %2401 = vmatpush1.bf16.msra.mxu0 %v1084
        %2402 = vmatprep.subr.bf16.mxu0 %v1089
        %2403 = vmatpush1.bf16.msra.mxu0 %v1088
        %2404 = vmatprep.subr.bf16.mxu0 %v1093
        %2405 = vmatpush1.bf16.msra.mxu0 %v1092
        %2406 = vmatprep.subr.bf16.mxu0 %v1097
        %2407 = vmatpush1.bf16.msra.mxu0 %v1096
        %2408 = vmatprep.subr.bf16.mxu0 %v1101
        %2409 = vmatpush1.bf16.msra.mxu0 %v1100
        %2410 = vmatprep.subr.bf16.mxu0 %v1105
        %2411 = vmatpush1.bf16.msra.mxu0 %v1104
        %2412 = vmatprep.subr.bf16.mxu0 %v1109
        %2413 = vmatpush1.bf16.msra.mxu0 %v1108
        %2414 = vmatprep.subr.bf16.mxu0 %v1113
        %2415 = vmatpush1.bf16.msra.mxu0 %v1112
        %2416 = vmatprep.subr.bf16.mxu0 %v1117
        %2417 = vmatpush1.bf16.msra.mxu0 %v1116
        %2418 = vmatprep.subr.bf16.mxu0 %v1121
        %2419 = vmatpush1.bf16.msra.mxu0 %v1120
        %2420 = vmatprep.subr.bf16.mxu0 %v1125
        %2421 = vmatpush1.bf16.msra.mxu0 %v1124
        %2422 = vmatprep.subr.bf16.mxu0 %v1129
        %2423 = vmatpush1.bf16.msra.mxu0 %v1128
        %2424 = vmatprep.subr.bf16.mxu0 %v1133
        %2425 = vmatpush1.bf16.msra.mxu0 %v1132
        %2426 = vmatprep.subr.bf16.mxu0 %v1137
        %2427 = vmatpush1.bf16.msra.mxu0 %v1136
        %2428 = vmatprep.subr.bf16.mxu0 %v1141
        %2429 = vmatpush1.bf16.msra.mxu0 %v1140
        %2430 = vmatprep.mubr.bf16.mxu0 %v1671
        %2431 = vmatmul.mubr.bf16.gmra.mrb[0].mxu0 %v1670
        %v2432 = vpop.f32.mrb[0].mxu0
        %v2433 = vadd.f32 %v2390, %v2432
        %v2434 = vpop.f32.mrb[0].mxu0
        %v2435 = vadd.f32 %v2392, %v2434
        %v2436 = vpop.f32.mrb[0].mxu0
        %v2437 = vadd.f32 %v2394, %v2436
        %v2438 = vpop.f32.mrb[0].mxu0
        %v2439 = vadd.f32 %v2396, %v2438
        %2440 = vdwg.mxu0
        %2441 = vmatprep.subr.bf16.mxu0 %v1145
        %2442 = vmatpush1.bf16.msra.mxu0 %v1144
        %2443 = vmatprep.subr.bf16.mxu0 %v1149
        %2444 = vmatpush1.bf16.msra.mxu0 %v1148
        %2445 = vmatprep.subr.bf16.mxu0 %v1153
        %2446 = vmatpush1.bf16.msra.mxu0 %v1152
        %2447 = vmatprep.subr.bf16.mxu0 %v1157
        %2448 = vmatpush1.bf16.msra.mxu0 %v1156
        %2449 = vmatprep.subr.bf16.mxu0 %v1161
        %2450 = vmatpush1.bf16.msra.mxu0 %v1160
        %2451 = vmatprep.subr.bf16.mxu0 %v1165
        %2452 = vmatpush1.bf16.msra.mxu0 %v1164
        %2453 = vmatprep.subr.bf16.mxu0 %v1169
        %2454 = vmatpush1.bf16.msra.mxu0 %v1168
        %2455 = vmatprep.subr.bf16.mxu0 %v1173
        %2456 = vmatpush1.bf16.msra.mxu0 %v1172
        %2457 = vmatprep.subr.bf16.mxu0 %v1177
        %2458 = vmatpush1.bf16.msra.mxu0 %v1176
        %2459 = vmatprep.subr.bf16.mxu0 %v1181
        %2460 = vmatpush1.bf16.msra.mxu0 %v1180
        %2461 = vmatprep.subr.bf16.mxu0 %v1185
        %2462 = vmatpush1.bf16.msra.mxu0 %v1184
        %2463 = vmatprep.subr.bf16.mxu0 %v1189
        %2464 = vmatpush1.bf16.msra.mxu0 %v1188
        %2465 = vmatprep.subr.bf16.mxu0 %v1193
        %2466 = vmatpush1.bf16.msra.mxu0 %v1192
        %2467 = vmatprep.subr.bf16.mxu0 %v1197
        %2468 = vmatpush1.bf16.msra.mxu0 %v1196
        %2469 = vmatprep.subr.bf16.mxu0 %v1201
        %2470 = vmatpush1.bf16.msra.mxu0 %v1200
        %2471 = vmatprep.subr.bf16.mxu0 %v1205
        %2472 = vmatpush1.bf16.msra.mxu0 %v1204
        %2473 = vmatprep.mubr.bf16.mxu0 %v1673
        %2474 = vmatmul.mubr.bf16.gmra.mrb[0].mxu0 %v1672
        %v2475 = vpop.f32.mrb[0].mxu0
        %v2476 = vadd.f32 %v2433, %v2475
        %v2477 = vpop.f32.mrb[0].mxu0
        %v2478 = vadd.f32 %v2435, %v2477
        %v2479 = vpop.f32.mrb[0].mxu0
        %v2480 = vadd.f32 %v2437, %v2479
        %v2481 = vpop.f32.mrb[0].mxu0
        %v2482 = vadd.f32 %v2439, %v2481
        %2483 = vdwg.mxu0
        %2484 = vmatprep.subr.bf16.mxu0 %v1209
        %2485 = vmatpush1.bf16.msra.mxu0 %v1208
        %2486 = vmatprep.subr.bf16.mxu0 %v1213
        %2487 = vmatpush1.bf16.msra.mxu0 %v1212
        %2488 = vmatprep.subr.bf16.mxu0 %v1217
        %2489 = vmatpush1.bf16.msra.mxu0 %v1216
        %2490 = vmatprep.subr.bf16.mxu0 %v1221
        %2491 = vmatpush1.bf16.msra.mxu0 %v1220
        %2492 = vmatprep.subr.bf16.mxu0 %v1225
        %2493 = vmatpush1.bf16.msra.mxu0 %v1224
        %2494 = vmatprep.subr.bf16.mxu0 %v1229
        %2495 = vmatpush1.bf16.msra.mxu0 %v1228
        %2496 = vmatprep.subr.bf16.mxu0 %v1233
        %2497 = vmatpush1.bf16.msra.mxu0 %v1232
        %2498 = vmatprep.subr.bf16.mxu0 %v1237
        %2499 = vmatpush1.bf16.msra.mxu0 %v1236
        %2500 = vmatprep.subr.bf16.mxu0 %v1241
        %2501 = vmatpush1.bf16.msra.mxu0 %v1240
        %2502 = vmatprep.subr.bf16.mxu0 %v1245
        %2503 = vmatpush1.bf16.msra.mxu0 %v1244
        %2504 = vmatprep.subr.bf16.mxu0 %v1249
        %2505 = vmatpush1.bf16.msra.mxu0 %v1248
        %2506 = vmatprep.subr.bf16.mxu0 %v1253
        %2507 = vmatpush1.bf16.msra.mxu0 %v1252
        %2508 = vmatprep.subr.bf16.mxu0 %v1257
        %2509 = vmatpush1.bf16.msra.mxu0 %v1256
        %2510 = vmatprep.subr.bf16.mxu0 %v1261
        %2511 = vmatpush1.bf16.msra.mxu0 %v1260
        %2512 = vmatprep.subr.bf16.mxu0 %v1265
        %2513 = vmatpush1.bf16.msra.mxu0 %v1264
        %2514 = vmatprep.subr.bf16.mxu0 %v1269
        %2515 = vmatpush1.bf16.msra.mxu0 %v1268
        %2516 = vmatprep.mubr.bf16.mxu0 %v1675
        %2517 = vmatmul.mubr.bf16.gmra.mrb[0].mxu0 %v1674
        %v2518 = vpop.f32.mrb[0].mxu0
        %v2519 = vadd.f32 %v2476, %v2518
        %v2520 = vpop.f32.mrb[0].mxu0
        %v2521 = vadd.f32 %v2478, %v2520
        %v2522 = vpop.f32.mrb[0].mxu0
        %v2523 = vadd.f32 %v2480, %v2522
        %v2524 = vpop.f32.mrb[0].mxu0
        %v2525 = vadd.f32 %v2482, %v2524
        %2526 = vdwg.mxu0
        %2527 = vmatprep.subr.bf16.mxu0 %v1273
        %2528 = vmatpush1.bf16.msra.mxu0 %v1272
        %2529 = vmatprep.subr.bf16.mxu0 %v1277
        %2530 = vmatpush1.bf16.msra.mxu0 %v1276
        %2531 = vmatprep.subr.bf16.mxu0 %v1281
        %2532 = vmatpush1.bf16.msra.mxu0 %v1280
        %2533 = vmatprep.subr.bf16.mxu0 %v1285
        %2534 = vmatpush1.bf16.msra.mxu0 %v1284
        %2535 = vmatprep.subr.bf16.mxu0 %v1289
        %2536 = vmatpush1.bf16.msra.mxu0 %v1288
        %2537 = vmatprep.subr.bf16.mxu0 %v1293
        %2538 = vmatpush1.bf16.msra.mxu0 %v1292
        %2539 = vmatprep.subr.bf16.mxu0 %v1297
        %2540 = vmatpush1.bf16.msra.mxu0 %v1296
        %2541 = vmatprep.subr.bf16.mxu0 %v1301
        %2542 = vmatpush1.bf16.msra.mxu0 %v1300
        %2543 = vmatprep.subr.bf16.mxu0 %v1305
        %2544 = vmatpush1.bf16.msra.mxu0 %v1304
        %2545 = vmatprep.subr.bf16.mxu0 %v1309
        %2546 = vmatpush1.bf16.msra.mxu0 %v1308
        %2547 = vmatprep.subr.bf16.mxu0 %v1313
        %2548 = vmatpush1.bf16.msra.mxu0 %v1312
        %2549 = vmatprep.subr.bf16.mxu0 %v1317
        %2550 = vmatpush1.bf16.msra.mxu0 %v1316
        %2551 = vmatprep.subr.bf16.mxu0 %v1321
        %2552 = vmatpush1.bf16.msra.mxu0 %v1320
        %2553 = vmatprep.subr.bf16.mxu0 %v1325
        %2554 = vmatpush1.bf16.msra.mxu0 %v1324
        %2555 = vmatprep.subr.bf16.mxu0 %v1329
        %2556 = vmatpush1.bf16.msra.mxu0 %v1328
        %2557 = vmatprep.subr.bf16.mxu0 %v1333
        %2558 = vmatpush1.bf16.msra.mxu0 %v1332
        %2559 = vmatprep.mubr.bf16.mxu0 %v1677
        %2560 = vmatmul.mubr.bf16.gmra.mrb[0].mxu0 %v1676
        %v2561 = vpop.f32.mrb[0].mxu0
        %v2562 = vadd.f32 %v2519, %v2561
        %v2563 = vpop.f32.mrb[0].mxu0
        %v2564 = vadd.f32 %v2521, %v2563
        %v2565 = vpop.f32.mrb[0].mxu0
        %v2566 = vadd.f32 %v2523, %v2565
        %v2567 = vpop.f32.mrb[0].mxu0
        %v2568 = vadd.f32 %v2525, %v2567
        %2569 = vdwg.mxu0
        %2570 = vmatprep.subr.bf16.mxu0 %v1337
        %2571 = vmatpush1.bf16.msra.mxu0 %v1336
        %2572 = vmatprep.subr.bf16.mxu0 %v1341
        %2573 = vmatpush1.bf16.msra.mxu0 %v1340
        %2574 = vmatprep.subr.bf16.mxu0 %v1345
        %2575 = vmatpush1.bf16.msra.mxu0 %v1344
        %2576 = vmatprep.subr.bf16.mxu0 %v1349
        %2577 = vmatpush1.bf16.msra.mxu0 %v1348
        %2578 = vmatprep.subr.bf16.mxu0 %v1353
        %2579 = vmatpush1.bf16.msra.mxu0 %v1352
        %2580 = vmatprep.subr.bf16.mxu0 %v1357
        %2581 = vmatpush1.bf16.msra.mxu0 %v1356
        %2582 = vmatprep.subr.bf16.mxu0 %v1361
        %2583 = vmatpush1.bf16.msra.mxu0 %v1360
        %2584 = vmatprep.subr.bf16.mxu0 %v1365
        %2585 = vmatpush1.bf16.msra.mxu0 %v1364
        %2586 = vmatprep.subr.bf16.mxu0 %v1369
        %2587 = vmatpush1.bf16.msra.mxu0 %v1368
        %2588 = vmatprep.subr.bf16.mxu0 %v1373
        %2589 = vmatpush1.bf16.msra.mxu0 %v1372
        %2590 = vmatprep.subr.bf16.mxu0 %v1377
        %2591 = vmatpush1.bf16.msra.mxu0 %v1376
        %2592 = vmatprep.subr.bf16.mxu0 %v1381
        %2593 = vmatpush1.bf16.msra.mxu0 %v1380
        %2594 = vmatprep.subr.bf16.mxu0 %v1385
        %2595 = vmatpush1.bf16.msra.mxu0 %v1384
        %2596 = vmatprep.subr.bf16.mxu0 %v1389
        %2597 = vmatpush1.bf16.msra.mxu0 %v1388
        %2598 = vmatprep.subr.bf16.mxu0 %v1393
        %2599 = vmatpush1.bf16.msra.mxu0 %v1392
        %2600 = vmatprep.subr.bf16.mxu0 %v1397
        %2601 = vmatpush1.bf16.msra.mxu0 %v1396
        %2602 = vmatprep.mubr.bf16.mxu0 %v1679
        %2603 = vmatmul.mubr.bf16.gmra.mrb[0].mxu0 %v1678
        %v2604 = vpop.f32.mrb[0].mxu0
        %v2605 = vadd.f32 %v2562, %v2604
        %v2606 = vpop.f32.mrb[0].mxu0
        %v2607 = vadd.f32 %v2564, %v2606
        %v2608 = vpop.f32.mrb[0].mxu0
        %v2609 = vadd.f32 %v2566, %v2608
        %v2610 = vpop.f32.mrb[0].mxu0
        %v2611 = vadd.f32 %v2568, %v2610
        %2612 = vdwg.mxu0
        %2613 = vmatprep.subr.bf16.mxu0 %v1401
        %2614 = vmatpush1.bf16.msra.mxu0 %v1400
        %2615 = vmatprep.subr.bf16.mxu0 %v1405
        %2616 = vmatpush1.bf16.msra.mxu0 %v1404
        %2617 = vmatprep.subr.bf16.mxu0 %v1409
        %2618 = vmatpush1.bf16.msra.mxu0 %v1408
        %2619 = vmatprep.subr.bf16.mxu0 %v1413
        %2620 = vmatpush1.bf16.msra.mxu0 %v1412
        %2621 = vmatprep.subr.bf16.mxu0 %v1417
        %2622 = vmatpush1.bf16.msra.mxu0 %v1416
        %2623 = vmatprep.subr.bf16.mxu0 %v1421
        %2624 = vmatpush1.bf16.msra.mxu0 %v1420
        %2625 = vmatprep.subr.bf16.mxu0 %v1425
        %2626 = vmatpush1.bf16.msra.mxu0 %v1424
        %2627 = vmatprep.subr.bf16.mxu0 %v1429
        %2628 = vmatpush1.bf16.msra.mxu0 %v1428
        %2629 = vmatprep.subr.bf16.mxu0 %v1433
        %2630 = vmatpush1.bf16.msra.mxu0 %v1432
        %2631 = vmatprep.subr.bf16.mxu0 %v1437
        %2632 = vmatpush1.bf16.msra.mxu0 %v1436
        %2633 = vmatprep.subr.bf16.mxu0 %v1441
        %2634 = vmatpush1.bf16.msra.mxu0 %v1440
        %2635 = vmatprep.subr.bf16.mxu0 %v1445
        %2636 = vmatpush1.bf16.msra.mxu0 %v1444
        %2637 = vmatprep.subr.bf16.mxu0 %v1449
        %2638 = vmatpush1.bf16.msra.mxu0 %v1448
        %2639 = vmatprep.subr.bf16.mxu0 %v1453
        %2640 = vmatpush1.bf16.msra.mxu0 %v1452
        %2641 = vmatprep.subr.bf16.mxu0 %v1457
        %2642 = vmatpush1.bf16.msra.mxu0 %v1456
        %2643 = vmatprep.subr.bf16.mxu0 %v1461
        %2644 = vmatpush1.bf16.msra.mxu0 %v1460
        %2645 = vmatprep.mubr.bf16.mxu0 %v1681
        %2646 = vmatmul.mubr.bf16.gmra.mrb[0].mxu0 %v1680
        %v2647 = vpop.f32.mrb[0].mxu0
        %v2648 = vadd.f32 %v2605, %v2647
        %v2649 = vpop.f32.mrb[0].mxu0
        %v2650 = vadd.f32 %v2607, %v2649
        %v2651 = vpop.f32.mrb[0].mxu0
        %v2652 = vadd.f32 %v2609, %v2651
        %v2653 = vpop.f32.mrb[0].mxu0
        %v2654 = vadd.f32 %v2611, %v2653
        %2655 = vdwg.mxu0
        %2656 = vmatprep.subr.bf16.mxu0 %v1465
        %2657 = vmatpush1.bf16.msra.mxu0 %v1464
        %2658 = vmatprep.subr.bf16.mxu0 %v1469
        %2659 = vmatpush1.bf16.msra.mxu0 %v1468
        %2660 = vmatprep.subr.bf16.mxu0 %v1473
        %2661 = vmatpush1.bf16.msra.mxu0 %v1472
        %2662 = vmatprep.subr.bf16.mxu0 %v1477
        %2663 = vmatpush1.bf16.msra.mxu0 %v1476
        %2664 = vmatprep.subr.bf16.mxu0 %v1481
        %2665 = vmatpush1.bf16.msra.mxu0 %v1480
        %2666 = vmatprep.subr.bf16.mxu0 %v1485
        %2667 = vmatpush1.bf16.msra.mxu0 %v1484
        %2668 = vmatprep.subr.bf16.mxu0 %v1489
        %2669 = vmatpush1.bf16.msra.mxu0 %v1488
        %2670 = vmatprep.subr.bf16.mxu0 %v1493
        %2671 = vmatpush1.bf16.msra.mxu0 %v1492
        %2672 = vmatprep.subr.bf16.mxu0 %v1497
        %2673 = vmatpush1.bf16.msra.mxu0 %v1496
        %2674 = vmatprep.subr.bf16.mxu0 %v1501
        %2675 = vmatpush1.bf16.msra.mxu0 %v1500
        %2676 = vmatprep.subr.bf16.mxu0 %v1505
        %2677 = vmatpush1.bf16.msra.mxu0 %v1504
        %2678 = vmatprep.subr.bf16.mxu0 %v1509
        %2679 = vmatpush1.bf16.msra.mxu0 %v1508
        %2680 = vmatprep.subr.bf16.mxu0 %v1513
        %2681 = vmatpush1.bf16.msra.mxu0 %v1512
        %2682 = vmatprep.subr.bf16.mxu0 %v1517
        %2683 = vmatpush1.bf16.msra.mxu0 %v1516
        %2684 = vmatprep.subr.bf16.mxu0 %v1521
        %2685 = vmatpush1.bf16.msra.mxu0 %v1520
        %2686 = vmatprep.subr.bf16.mxu0 %v1525
        %2687 = vmatpush1.bf16.msra.mxu0 %v1524
        %2688 = vmatprep.mubr.bf16.mxu0 %v1683
        %2689 = vmatmul.mubr.bf16.gmra.mrb[0].mxu0 %v1682
        %v2690 = vpop.f32.mrb[0].mxu0
        %v2691 = vadd.f32 %v2648, %v2690
        %v2692 = vpop.f32.mrb[0].mxu0
        %v2693 = vadd.f32 %v2650, %v2692
        %v2694 = vpop.f32.mrb[0].mxu0
        %v2695 = vadd.f32 %v2652, %v2694
        %v2696 = vpop.f32.mrb[0].mxu0
        %v2697 = vadd.f32 %v2654, %v2696
        %2698 = vdwg.mxu0
        %2699 = vmatprep.subr.bf16.mxu0 %v1529
        %2700 = vmatpush1.bf16.msra.mxu0 %v1528
        %2701 = vmatprep.subr.bf16.mxu0 %v1533
        %2702 = vmatpush1.bf16.msra.mxu0 %v1532
        %2703 = vmatprep.subr.bf16.mxu0 %v1537
        %2704 = vmatpush1.bf16.msra.mxu0 %v1536
        %2705 = vmatprep.subr.bf16.mxu0 %v1541
        %2706 = vmatpush1.bf16.msra.mxu0 %v1540
        %2707 = vmatprep.subr.bf16.mxu0 %v1545
        %2708 = vmatpush1.bf16.msra.mxu0 %v1544
        %2709 = vmatprep.subr.bf16.mxu0 %v1549
        %2710 = vmatpush1.bf16.msra.mxu0 %v1548
        %2711 = vmatprep.subr.bf16.mxu0 %v1553
        %2712 = vmatpush1.bf16.msra.mxu0 %v1552
        %2713 = vmatprep.subr.bf16.mxu0 %v1557
        %2714 = vmatpush1.bf16.msra.mxu0 %v1556
        %2715 = vmatprep.subr.bf16.mxu0 %v1561
        %2716 = vmatpush1.bf16.msra.mxu0 %v1560
        %2717 = vmatprep.subr.bf16.mxu0 %v1565
        %2718 = vmatpush1.bf16.msra.mxu0 %v1564
        %2719 = vmatprep.subr.bf16.mxu0 %v1569
        %2720 = vmatpush1.bf16.msra.mxu0 %v1568
        %2721 = vmatprep.subr.bf16.mxu0 %v1573
        %2722 = vmatpush1.bf16.msra.mxu0 %v1572
        %2723 = vmatprep.subr.bf16.mxu0 %v1577
        %2724 = vmatpush1.bf16.msra.mxu0 %v1576
        %2725 = vmatprep.subr.bf16.mxu0 %v1581
        %2726 = vmatpush1.bf16.msra.mxu0 %v1580
        %2727 = vmatprep.subr.bf16.mxu0 %v1585
        %2728 = vmatpush1.bf16.msra.mxu0 %v1584
        %2729 = vmatprep.subr.bf16.mxu0 %v1589
        %2730 = vmatpush1.bf16.msra.mxu0 %v1588
        %2731 = vmatprep.mubr.bf16.mxu0 %v1685
        %2732 = vmatmul.mubr.bf16.gmra.mrb[0].mxu0 %v1684
        %v2733 = vpop.f32.mrb[0].mxu0
        %v2734 = vadd.f32 %v2691, %v2733
        %v2735 = vpop.f32.mrb[0].mxu0
        %v2736 = vadd.f32 %v2693, %v2735
        %v2737 = vpop.f32.mrb[0].mxu0
        %v2738 = vadd.f32 %v2695, %v2737
        %v2739 = vpop.f32.mrb[0].mxu0
        %v2740 = vadd.f32 %v2697, %v2739
        %2741 = vdwg.mxu0
        %v2742 = vadd.f32 %v406, %v2218
        %v2743 = vadd.f32 %v407, %v2220
        %v2744 = vadd.f32 %v408, %v2734
        %v2745 = vadd.f32 %v409, %v2736
        %v2746 = vadd.f32 %v410, %v2222
        %v2747 = vadd.f32 %v411, %v2224
        %v2748 = vadd.f32 %v412, %v2738
        %v2749 = vadd.f32 %v413, %v2740
        %2750 = vst [vmem:[#allocation2] sm:$0xff] %v2742
        %2751 = vst [vmem:[#allocation2 + $0x8] sm:$0xff] %v2743
        %2752 = vst [vmem:[#allocation2 + $0x10] sm:$0xff] %v2744
        %2753 = vst [vmem:[#allocation2 + $0x18] sm:$0xff] %v2745
        %2754 = vst [vmem:[#allocation2 + $0x20] sm:$0xff] %v2746
        %2755 = vst [vmem:[#allocation2 + $0x28] sm:$0xff] %v2747
        %2756 = vst [vmem:[#allocation2 + $0x30] sm:$0xff] %v2748
        %2757 = vst [vmem:[#allocation2 + $0x38] sm:$0xff] %v2749
        %p2758 = scmp.eq.s32.totalorder %s26, 3
        // Predicated region
        $region76: #{linmod_forward.2} parent=54 // pred_check
          %p2759 = pneg %p2758
        $region77: #{linmod_forward.2} parent=54 // pred_check_branch
          %2761 = sbr.rel (%p2759) target = $region79
        $region78: #{linmod_forward.2} parent=54 // pred_region
          %v2762 = vld [vmem:[#allocation2] sm:$0xff]
          %v2763 = vld [vmem:[#allocation2 + $0x8] sm:$0xff]
          %v2764 = vld [vmem:[#allocation2 + $0x10] sm:$0xff]
          %v2765 = vld [vmem:[#allocation2 + $0x18] sm:$0xff]
          %v2766 = vld [vmem:[#allocation2 + $0x20] sm:$0xff]
          %v2767 = vld [vmem:[#allocation2 + $0x28] sm:$0xff]
          %v2768 = vld [vmem:[#allocation2 + $0x30] sm:$0xff]
          %v2769 = vld [vmem:[#allocation2 + $0x38] sm:$0xff]
          %v2770 = vld [vmem:[%s341] sm:$0xf]
          %v2772 = vlaneseq
          %v2773 = vshrl.u32 %v2772, 7
          %v2774 = vsub.s32 0, %v2773
          %v2775 = vrot.slane %v2770, %v2774
          %v2776 = vlaneseq
          %v2777 = vshrl.u32 %v2776, 7
          %v2778 = vsub.s32 1, %v2777
          %v2779 = vrot.slane %v2770, %v2778
          %v2780 = vlaneseq
          %v2781 = vshrl.u32 %v2780, 7
          %v2782 = vsub.s32 2, %v2781
          %v2783 = vrot.slane %v2770, %v2782
          %v2784 = vlaneseq
          %v2785 = vshrl.u32 %v2784, 7
          %v2786 = vsub.s32 3, %v2785
          %v2787 = vrot.slane %v2770, %v2786
          %v2792 = vmul.f32 %v2762, %v2775
          %v2793 = vmul.f32 %v2763, %v2779
          %v2794 = vmul.f32 %v2764, %v2783
          %v2795 = vmul.f32 %v2765, %v2787
          %v2796 = vmul.f32 %v2766, %v2775
          %v2797 = vmul.f32 %v2767, %v2779
          %v2798 = vmul.f32 %v2768, %v2783
          %v2799 = vmul.f32 %v2769, %v2787
          %v2800 = vld [vmem:[%s350] sm:$0xf]
          %v2802 = vlaneseq
          %v2803 = vshrl.u32 %v2802, 7
          %v2804 = vsub.s32 0, %v2803
          %v2805 = vrot.slane %v2800, %v2804
          %v2806 = vlaneseq
          %v2807 = vshrl.u32 %v2806, 7
          %v2808 = vsub.s32 1, %v2807
          %v2809 = vrot.slane %v2800, %v2808
          %v2810 = vlaneseq
          %v2811 = vshrl.u32 %v2810, 7
          %v2812 = vsub.s32 2, %v2811
          %v2813 = vrot.slane %v2800, %v2812
          %v2814 = vlaneseq
          %v2815 = vshrl.u32 %v2814, 7
          %v2816 = vsub.s32 3, %v2815
          %v2817 = vrot.slane %v2800, %v2816
          %v2822 = vadd.f32 %v2792, %v2805
          %v2823 = vadd.f32 %v2793, %v2809
          %v2824 = vadd.f32 %v2794, %v2813
          %v2825 = vadd.f32 %v2795, %v2817
          %v2826 = vadd.f32 %v2796, %v2805
          %v2827 = vadd.f32 %v2797, %v2809
          %v2828 = vadd.f32 %v2798, %v2813
          %v2829 = vadd.f32 %v2799, %v2817
          %v2830 = vmax.f32 %v2822, 0.0
          %v2831 = vmax.f32 %v2823, 0.0
          %v2832 = vmax.f32 %v2824, 0.0
          %v2833 = vmax.f32 %v2825, 0.0
          %v2834 = vmax.f32 %v2826, 0.0
          %v2835 = vmax.f32 %v2827, 0.0
          %v2836 = vmax.f32 %v2828, 0.0
          %v2837 = vmax.f32 %v2829, 0.0
          %2838 = vst [vmem:[%s387] sm:$0xff] %v2830
          %2839 = vst [vmem:[%s387 + $0x8] sm:$0xff] %v2831
          %2840 = vst [vmem:[%s387 + $0x10] sm:$0xff] %v2832
          %2841 = vst [vmem:[%s387 + $0x18] sm:$0xff] %v2833
          %2842 = vst [vmem:[%s387 + $0x20] sm:$0xff] %v2834
          %2843 = vst [vmem:[%s387 + $0x28] sm:$0xff] %v2835
          %2844 = vst [vmem:[%s387 + $0x30] sm:$0xff] %v2836
          %2845 = vst [vmem:[%s387 + $0x38] sm:$0xff] %v2837
        $region79: #{linmod_forward.2} parent=54 // pred_fallthru
          _
        %s2846 = sand.u32 %s147, 1
        %s2847 = sand.u32 %s147, 1
        %s2848 = smul.addr %s2847, 64
        %s2849 = scalar_lea.vmem [#allocation9], %s2848
        // Predicated region
        $region80: #{linmod_forward.2} parent=54 // pred_check
          %p2850 = pneg %p157
        $region81: #{linmod_forward.2} parent=54 // pred_check_branch
          %2852 = sbr.rel (%p2850) target = $region83
        $region82: #{linmod_forward.2} parent=54 // pred_region
          %s2853 = smul.u32 4, %s25
          %s2854 = smul.addr %s2853, 8
          %s2855 = scalar_lea.vmem %s4, %s2854
          // Predicated region
          $region84: #{linmod_forward.2} parent=82 // pred_check
            _
          $region85: #{linmod_forward.2} parent=82 // pred_check_branch
            %2857 = sbr.rel (0) target = $region87
          $region86: #{linmod_forward.2} parent=82 // pred_region
            // Predicated region
            $region88: #{linmod_forward.2} parent=86 // pred_check
              _
            $region89: #{linmod_forward.2} parent=86 // pred_check_branch
              %2859 = sbr.rel (0) target = $region91
            $region90: #{linmod_forward.2} parent=86 // pred_region
              loop: start=0, step=1, limit=1
              $region92: #{linmod_forward.2} parent=90 // loop_pre_header
                _
              $region93: #{linmod_forward.2} parent=90 // loop_header
                %s2861 = sphi 0, %s2865
                %p2862 = scmp.ge.s32.totalorder %s2861, 1
                %s2866 = sphi %s2849, %s2849
                %s2867 = sphi %s2855, %s2855
              $region94: #{linmod_forward.2} parent=90 // loop_header_branch
                %2864 = sbr.rel (%p2862) target = $region98
              $region95: #{linmod_forward.2} parent=90 // loop_body
                %v2868 = vld [vmem:[%s2866] sm:$0xff]
                %2869 = vst [vmem:[%s2867] sm:$0xff] %v2868
                %v2870 = vld [vmem:[%s2866 + $0x8] sm:$0xff]
                %2871 = vst [vmem:[%s2867 + $0x8] sm:$0xff] %v2870
                %v2872 = vld [vmem:[%s2866 + $0x10] sm:$0xff]
                %2873 = vst [vmem:[%s2867 + $0x10] sm:$0xff] %v2872
                %v2874 = vld [vmem:[%s2866 + $0x18] sm:$0xff]
                %2875 = vst [vmem:[%s2867 + $0x18] sm:$0xff] %v2874
                %v2876 = vld [vmem:[%s2866 + $0x20] sm:$0xff]
                %2877 = vst [vmem:[%s2867 + $0x40] sm:$0xff] %v2876
                %v2878 = vld [vmem:[%s2866 + $0x28] sm:$0xff]
                %2879 = vst [vmem:[%s2867 + $0x48] sm:$0xff] %v2878
                %v2880 = vld [vmem:[%s2866 + $0x30] sm:$0xff]
                %2881 = vst [vmem:[%s2867 + $0x50] sm:$0xff] %v2880
                %v2882 = vld [vmem:[%s2866 + $0x38] sm:$0xff]
                %2883 = vst [vmem:[%s2867 + $0x58] sm:$0xff] %v2882
              $region96: #{linmod_forward.2} parent=90 // loop_footer
                %s2865 = sadd.s32 1, %s2861
              $region97: #{linmod_forward.2} parent=90 // loop_footer_branch
                %2860 = sbr.rel target = $region93
              $region98: #{linmod_forward.2} parent=90 // loop_exit
                _
            $region91: #{linmod_forward.2} parent=86 // pred_fallthru
              _
            // Predicated region
            $region99: #{linmod_forward.2} parent=86 // pred_check
              _
            $region100: #{linmod_forward.2} parent=86 // pred_check_branch
              %2885 = sbr.rel target = $region102
            $region101: #{linmod_forward.2} parent=86 // pred_region
              _
            $region102: #{linmod_forward.2} parent=86 // pred_fallthru
              _
          $region87: #{linmod_forward.2} parent=82 // pred_fallthru
            _
          %2886 = vnop
        $region83: #{linmod_forward.2} parent=54 // pred_fallthru
          _
      $region55: #{linmod_forward.2} parent=5 // pred_fallthru
        _
      %p2887 = scmp.le.s32.totalorder 2, %s16
      // Predicated region
      $region103: #{linmod_forward.2} parent=5 // pred_check
        %p2888 = pneg %p2887
      $region104: #{linmod_forward.2} parent=5 // pred_check_branch
        %2890 = sbr.rel (%p2888) target = $region106
      $region105: #{linmod_forward.2} parent=5 // pred_region
        %s2891 = ssub.s32 %s16, 2
        // Predicated region
        $region107: #{linmod_forward.2} parent=105 // pred_check
          %p2892 = pneg %p163
        $region108: #{linmod_forward.2} parent=105 // pred_check_branch
          %2894 = sbr.rel (%p2892) target = $region110
        $region109: #{linmod_forward.2} parent=105 // pred_region
          %s2895 = sand.u32 %s148, 1
          %s2896 = sand.u32 %s148, 1
          %s2897 = smul.addr %s2896, 64
          %s2898 = scalar_lea.vmem [#allocation9], %s2897
        $region110: #{linmod_forward.2} parent=105 // pred_fallthru
          _
      $region106: #{linmod_forward.2} parent=5 // pred_fallthru
        _
    $region6: #{linmod_forward.2} parent=1 // loop_footer
      %s20 = sadd.s32 1, %s16
    $region7: #{linmod_forward.2} parent=1 // loop_footer_branch
      %15 = sbr.rel target = $region3
    $region8: #{linmod_forward.2} parent=1 // loop_exit
      _
    %2899 = vsyncpa [#allocation5], 1
    %s2900 = scalar_lea.sflag [#allocation5], 1
    %2901 = vsyncpa %s2900, 1
    %2902 = vsyncpa [#allocation7], 1
    %s2903 = scalar_lea.sflag [#allocation7], 1
    %2904 = vsyncpa %s2903, 1

</llo_original>
